<compile_context>
chip_gen: v6e
topology: v6e:2x2x1
jax: 0.10.0
libtpu: 0.0.40
codegen_flags: <defaults>
</compile_context>

<pallas_src>
import math

import jax
import jax.numpy as jnp
from jax import lax
from jax.experimental import pallas as pl
from jax.experimental.pallas import tpu as pltpu


def _layernorm(x, eps=1e-12):
    # BertLayerNorm: biased variance over last dim.
    u = jnp.mean(x, axis=-1, keepdims=True)
    s = jnp.mean((x - u) ** 2, axis=-1, keepdims=True)
    return (x - u) * lax.rsqrt(s + eps)


def make_gpp_kernel(num_heads, head_size, tb, seq, hidden, approximate_gelu=False):
    scale = 1.0 / math.sqrt(head_size)
    rows = tb * seq

    def gelu_fn(x):
        if approximate_gelu:
            # tanh form routes through the EUP (useful on v5e, no bf16 VPU).
            return jax.nn.gelu(x, approximate=True)
        # exact erf-based gelu, matching the PyTorch reference
        return x * 0.5 * (1.0 + lax.erf(x * (1.0 / math.sqrt(2.0))))

    def gpp_kernel(x_ref, w_ref, vec_ref, o_ref, ctx_scr):
        # x_ref:   (tb, S, H) f32   current batch tile
        # w_ref:   (6, H, H) bf16   [Wq, Wk, Wv, W_fc_in, W_fc_int, W_fc_out]
        #                           pre-transposed so y = x @ W + b
        # vec_ref: (10, H) f32      [bq, bk, bv, b_fc_in, g_in, beta_in,
        #                            b_fc_int, b_fc_out, g_out, beta_out]
        # ctx_scr: (tb, S, H) f32   VMEM scratch for per-head attention contexts
        x = x_ref[...].reshape(rows, hidden)          # (rows, H) f32
        xb = x.astype(jnp.bfloat16)

        bq, bk, bv, bfi = vec_ref[0], vec_ref[1], vec_ref[2], vec_ref[3]
        g_in, beta_in = vec_ref[4], vec_ref[5]
        bint, bout = vec_ref[6], vec_ref[7]
        g_out, beta_out = vec_ref[8], vec_ref[9]

        # ---- QKV projections: full-width bf16 MXU matmuls, f32 accumulation ----
        q = jnp.dot(xb, w_ref[0], preferred_element_type=jnp.float32) + bq
        k = jnp.dot(xb, w_ref[1], preferred_element_type=jnp.float32) + bk
        v = jnp.dot(xb, w_ref[2], preferred_element_type=jnp.float32) + bv

        # Fold 1/sqrt(head_size) into q once, then go bf16 for the MXU.
        q3 = (q * scale).astype(jnp.bfloat16).reshape(tb, seq, hidden)
        k3 = k.astype(jnp.bfloat16).reshape(tb, seq, hidden)
        v3 = v.astype(jnp.bfloat16).reshape(tb, seq, hidden)

        # ---- per-head attention, batched over the tb batch elements ----
        for h in range(num_heads):
            c0 = h * head_size
            qh = q3[:, :, c0:c0 + head_size]          # (tb, S, dh) bf16
            kh = k3[:, :, c0:c0 + head_size]
            vh = v3[:, :, c0:c0 + head_size]
            s = jnp.einsum("bqd,bkd->bqk", qh, kh,
                           preferred_element_type=jnp.float32)   # (tb, S, S)
            s = s - jnp.max(s, axis=-1, keepdims=True)
            p = jnp.exp(s)
            denom = jnp.sum(p, axis=-1, keepdims=True)
            p = p * pl.reciprocal(denom, approx=True)   # EUP, not VALU divide
            ctx_h = jnp.einsum("bqk,bkd->bqd", p.astype(jnp.bfloat16), vh,
                               preferred_element_type=jnp.float32)
            ctx_scr[:, :, c0:c0 + head_size] = ctx_h    # straight into scratch

        ctx = ctx_scr[...].reshape(rows, hidden).astype(jnp.bfloat16)

        # ---- fc_in + residual + LayerNorm ----
        attn = jnp.dot(ctx, w_ref[3], preferred_element_type=jnp.float32) + bfi
        ln_in = g_in * _layernorm(attn + x) + beta_in

        # ---- fc_int + gelu + fc_out + residual + LayerNorm ----
        inter = jnp.dot(ln_in.astype(jnp.bfloat16), w_ref[4],
                        preferred_element_type=jnp.float32) + bint
        inter = gelu_fn(inter)
        out2 = jnp.dot(inter.astype(jnp.bfloat16), w_ref[5],
                       preferred_element_type=jnp.float32) + bout
        y = g_out * _layernorm(out2 + ln_in) + beta_out

        o_ref[...] = y.reshape(tb, seq, hidden).astype(o_ref.dtype)

    return gpp_kernel


def _build_gpp_call(B, S, H, x_dtype, num_heads, tb, single_buffer_weights,
                    approximate_gelu=False):
    head_size = H // num_heads
    kernel = make_gpp_kernel(num_heads, head_size, tb, S, H, approximate_gelu)
    rows = tb * S

    # Constant index_map -> a single buffer is enough for the weight block.
    w_spec_kwargs = {}
    if single_buffer_weights:
        w_spec_kwargs = dict(pipeline_mode=pl.Buffered(1))
    w_spec = pl.BlockSpec((6, H, H), lambda b: (0, 0, 0), **w_spec_kwargs)

    # VMEM budget: bf16 weights + param vectors + double-buffered in/out tiles
    # + activations (q/k/v f32 + bf16 copies, ctx, attn/ln_in/inter/out2,
    # per-head score blocks), +30% headroom.
    w_bytes = 6 * H * H * 2 * (1 if single_buffer_weights else 2)
    vec_bytes = 2 * 10 * H * 4
    io_bytes = 2 * 2 * rows * H * 4
    act_bytes = 14 * rows * H * 4 + 3 * tb * S * S * 4
    est = int(1.3 * (w_bytes + vec_bytes + io_bytes + act_bytes))
    vmem_limit = max(16 << 20, min(est, 64 << 20))

    return pl.pallas_call(
        kernel,
        out_shape=jax.ShapeDtypeStruct((B, S, H), x_dtype),
        grid_spec=pltpu.PrefetchScalarGridSpec(
            num_scalar_prefetch=0,
            grid=(B // tb,),
            in_specs=[
                pl.BlockSpec((tb, S, H), lambda b: (b, 0, 0)),
                w_spec,
                pl.BlockSpec((10, H), lambda b: (0, 0)),
            ],
            out_specs=pl.BlockSpec((tb, S, H), lambda b: (b, 0, 0)),
            scratch_shapes=[pltpu.VMEM((tb, S, H), jnp.float32)],
        ),
        compiler_params=pltpu.CompilerParams(
            dimension_semantics=("parallel",),   # megacore-shard the batch axis
            vmem_limit_bytes=vmem_limit,
        ),
    )


def gpp_layer(x, w_stack, vec_stack, *, num_heads, tb=1, approximate_gelu=False):
    """x: (B, S, H) float32; w_stack: (6, H, H); vec_stack: (10, H)."""
    B, S, H = x.shape
    assert H % num_heads == 0, "hidden must be divisible by num_heads"
    assert B % tb == 0, "batch must be divisible by the batch tile"

    w_bf16 = w_stack.astype(jnp.bfloat16)       # bf16 operands, f32 accumulation
    vec_f32 = vec_stack.astype(jnp.float32)

    try:
        fn = _build_gpp_call(B, S, H, x.dtype, num_heads, tb,
                             single_buffer_weights=True,
                             approximate_gelu=approximate_gelu)
        return fn(x, w_bf16, vec_f32)
    except Exception:
        # pl.Buffered(1) not supported by this jax version -> default buffering.
        fn = _build_gpp_call(B, S, H, x.dtype, num_heads, tb,
                             single_buffer_weights=False,
                             approximate_gelu=approximate_gelu)
        return fn(x, w_bf16, vec_f32)


# -------------------- pure-JAX reference (for verification) --------------------
def gpp_layer_ref(x, w_stack, vec_stack, *, num_heads):
    B, S, H = x.shape
    dh = H // num_heads
    Wq, Wk, Wv, Wfi, Wint, Wout = [w_stack[i] for i in range(6)]
    (bq, bk, bv, bfi, g_in, beta_in, bint, bout, g_out, beta_out) = [
        vec_stack[i] for i in range(10)]

    def split_heads(t):  # (B,S,H) -> (B,nh,S,dh)
        return t.reshape(B, S, num_heads, dh).transpose(0, 2, 1, 3)

    q = split_heads(x @ Wq + bq)
    k = split_heads(x @ Wk + bk)
    v = split_heads(x @ Wv + bv)
    scores = jnp.einsum("bhqd,bhkd->bhqk", q, k) / math.sqrt(dh)
    probs = jax.nn.softmax(scores, axis=-1)
    ctx = jnp.einsum("bhqk,bhkd->bhqd", probs, v)
    ctx = ctx.transpose(0, 2, 1, 3).reshape(B, S, H)

    attn = ctx @ Wfi + bfi
    ln_in = g_in * _layernorm(attn + x) + beta_in
    inter = ln_in @ Wint + bint
    inter = inter * 0.5 * (1.0 + lax.erf(inter / math.sqrt(2.0)))
    out2 = inter @ Wout + bout
    return g_out * _layernorm(out2 + ln_in) + beta_out


if __name__ == "__main__":
    # Small config: batch=2, seq=8, hidden=32, heads=4 (head_size=8).
    B, S, H = 2, 8, 32
    num_heads = 4

    key = jax.random.PRNGKey(0)
    keys = jax.random.split(key, 16)

    x = jax.random.normal(keys[0], (B, S, H), dtype=jnp.float32)

    # Deterministic parameter init (uniform, roughly like nn.Linear default).
    bound = 1.0 / math.sqrt(H)

    def uni(k, shape):
        return jax.random.uniform(k, shape, jnp.float32, -bound, bound)

    # nn.Linear stores W as (out, in); we pre-transpose to (in, out) so the
    # kernel computes y = x @ W + b (same math as x @ W_linear.T + b).
    Wq = uni(keys[1], (H, H)).T
    Wk = uni(keys[2], (H, H)).T
    Wv = uni(keys[3], (H, H)).T
    Wfi = uni(keys[4], (H, H)).T
    Wint = uni(keys[5], (H, H)).T
    Wout = uni(keys[6], (H, H)).T
    bq = uni(keys[7], (H,))
    bk = uni(keys[8], (H,))
    bv = uni(keys[9], (H,))
    bfi = uni(keys[10], (H,))
    bint = uni(keys[11], (H,))
    bout = uni(keys[12], (H,))
    g_in = jnp.ones((H,), jnp.float32)      # BertLayerNorm weight
    beta_in = jnp.zeros((H,), jnp.float32)  # BertLayerNorm bias
    g_out = jnp.ones((H,), jnp.float32)
    beta_out = jnp.zeros((H,), jnp.float32)

    w_stack = jnp.stack([Wq, Wk, Wv, Wfi, Wint, Wout], axis=0)          # (6,H,H)
    vec_stack = jnp.stack(
        [bq, bk, bv, bfi, g_in, beta_in, bint, bout, g_out, beta_out],
        axis=0)                                                          # (10,H)

    out = gpp_layer(x, w_stack, vec_stack, num_heads=num_heads, tb=1)
    out = jax.block_until_ready(out)

    # Kernel runs bf16 MXU ops with f32 accumulation; compare against an f32
    # reference using the same bf16-rounded weights, with a loosened tolerance.
    w_used = w_stack.astype(jnp.bfloat16).astype(jnp.float32)
    ref = gpp_layer_ref(x, w_used, vec_stack, num_heads=num_heads)
    assert out.shape == (B, S, H)
    assert jnp.max(jnp.abs(out - ref)) < 5e-2, "mismatch vs pure-JAX reference"

    print("KERNEL_OK")
</pallas_src>

<mosaic_0001>
module attributes {stable_mosaic.version = 11 : i64} {
  func.func @gpp_kernel(%arg0: i32, %arg1: memref<1x8x32xf32, #tpu.memory_space<vmem>>, %arg2: memref<6x32x32xbf16, #tpu.memory_space<vmem>>, %arg3: memref<10x32xf32, #tpu.memory_space<vmem>>, %arg4: memref<1x8x32xf32, #tpu.memory_space<vmem>>, %arg5: memref<1x8x32xf32, #tpu.memory_space<vmem>>) attributes {dimension_semantics = [#tpu.dimension_semantics<parallel>], iteration_bounds = array<i64: 2>, scalar_prefetch = 0 : i64, scratch_operands = 1 : i64, tpu.core_type = #tpu.core_type<tc>, window_params = [{transform_indices = @transform_0, window_bounds = array<i64: 1, 8, 32>}, {pipeline_mode = #tpu.pipeline_mode<synchronous>, transform_indices = @transform_1, window_bounds = array<i64: 6, 32, 32>}, {pipeline_mode = #tpu.pipeline_mode<synchronous>, transform_indices = @transform_2, window_bounds = array<i64: 10, 32>}, {transform_indices = @transform_3, window_bounds = array<i64: 1, 8, 32>}]} {
    %c0 = arith.constant 0 : index
    %c0_0 = arith.constant 0 : index
    %c0_1 = arith.constant 0 : index
    %0 = vector.load %arg1[%c0, %c0_0, %c0_1] : memref<1x8x32xf32, #tpu.memory_space<vmem>>, vector<1x8x32xf32>
    %1 = vector.shape_cast %0 : vector<1x8x32xf32> to vector<8x32xf32>
    %2 = arith.truncf %1 : vector<8x32xf32> to vector<8x32xbf16>
    %c0_2 = arith.constant 0 : index
    %c0_3 = arith.constant 0 : index
    %3 = vector.load %arg3[%c0_2, %c0_3] : memref<10x32xf32, #tpu.memory_space<vmem>>, vector<1x32xf32>
    %4 = vector.shape_cast %3 : vector<1x32xf32> to vector<32xf32>
    %c1 = arith.constant 1 : index
    %c0_4 = arith.constant 0 : index
    %5 = vector.load %arg3[%c1, %c0_4] : memref<10x32xf32, #tpu.memory_space<vmem>>, vector<1x32xf32>
    %6 = vector.shape_cast %5 : vector<1x32xf32> to vector<32xf32>
    %c2 = arith.constant 2 : index
    %c0_5 = arith.constant 0 : index
    %7 = vector.load %arg3[%c2, %c0_5] : memref<10x32xf32, #tpu.memory_space<vmem>>, vector<1x32xf32>
    %8 = vector.shape_cast %7 : vector<1x32xf32> to vector<32xf32>
    %c3 = arith.constant 3 : index
    %c0_6 = arith.constant 0 : index
    %9 = vector.load %arg3[%c3, %c0_6] : memref<10x32xf32, #tpu.memory_space<vmem>>, vector<1x32xf32>
    %10 = vector.shape_cast %9 : vector<1x32xf32> to vector<32xf32>
    %c4 = arith.constant 4 : index
    %c0_7 = arith.constant 0 : index
    %11 = vector.load %arg3[%c4, %c0_7] : memref<10x32xf32, #tpu.memory_space<vmem>>, vector<1x32xf32>
    %12 = vector.shape_cast %11 : vector<1x32xf32> to vector<32xf32>
    %c5 = arith.constant 5 : index
    %c0_8 = arith.constant 0 : index
    %13 = vector.load %arg3[%c5, %c0_8] : memref<10x32xf32, #tpu.memory_space<vmem>>, vector<1x32xf32>
    %14 = vector.shape_cast %13 : vector<1x32xf32> to vector<32xf32>
    %c6 = arith.constant 6 : index
    %c0_9 = arith.constant 0 : index
    %15 = vector.load %arg3[%c6, %c0_9] : memref<10x32xf32, #tpu.memory_space<vmem>>, vector<1x32xf32>
    %16 = vector.shape_cast %15 : vector<1x32xf32> to vector<32xf32>
    %c7 = arith.constant 7 : index
    %c0_10 = arith.constant 0 : index
    %17 = vector.load %arg3[%c7, %c0_10] : memref<10x32xf32, #tpu.memory_space<vmem>>, vector<1x32xf32>
    %18 = vector.shape_cast %17 : vector<1x32xf32> to vector<32xf32>
    %c8 = arith.constant 8 : index
    %c0_11 = arith.constant 0 : index
    %19 = vector.load %arg3[%c8, %c0_11] : memref<10x32xf32, #tpu.memory_space<vmem>>, vector<1x32xf32>
    %20 = vector.shape_cast %19 : vector<1x32xf32> to vector<32xf32>
    %c9 = arith.constant 9 : index
    %c0_12 = arith.constant 0 : index
    %21 = vector.load %arg3[%c9, %c0_12] : memref<10x32xf32, #tpu.memory_space<vmem>>, vector<1x32xf32>
    %22 = vector.shape_cast %21 : vector<1x32xf32> to vector<32xf32>
    %c0_13 = arith.constant 0 : index
    %c0_14 = arith.constant 0 : index
    %c0_15 = arith.constant 0 : index
    %23 = vector.load %arg2[%c0_13, %c0_14, %c0_15] : memref<6x32x32xbf16, #tpu.memory_space<vmem>>, vector<1x32x32xbf16>
    %24 = vector.shape_cast %23 : vector<1x32x32xbf16> to vector<32x32xbf16>
    %cst = arith.constant dense<0.000000e+00> : vector<8x32xf32>
    %25 = tpu.matmul %2, %24, %cst {dimension_numbers = #tpu.dot_dimension_numbers<[1], [0], [0], [1], [0, 0, 1, 1], [], []>} : vector<8x32xbf16>, vector<32x32xbf16>, vector<8x32xf32> -> vector<8x32xf32>
    %26 = vector.shape_cast %4 : vector<32xf32> to vector<1x32xf32>
    %27 = vector.broadcast %26 : vector<1x32xf32> to vector<8x32xf32>
    %28 = arith.addf %25, %27 : vector<8x32xf32>
    %c1_16 = arith.constant 1 : index
    %c0_17 = arith.constant 0 : index
    %c0_18 = arith.constant 0 : index
    %29 = vector.load %arg2[%c1_16, %c0_17, %c0_18] : memref<6x32x32xbf16, #tpu.memory_space<vmem>>, vector<1x32x32xbf16>
    %30 = vector.shape_cast %29 : vector<1x32x32xbf16> to vector<32x32xbf16>
    %cst_19 = arith.constant dense<0.000000e+00> : vector<8x32xf32>
    %31 = tpu.matmul %2, %30, %cst_19 {dimension_numbers = #tpu.dot_dimension_numbers<[1], [0], [0], [1], [0, 0, 1, 1], [], []>} : vector<8x32xbf16>, vector<32x32xbf16>, vector<8x32xf32> -> vector<8x32xf32>
    %32 = vector.shape_cast %6 : vector<32xf32> to vector<1x32xf32>
    %33 = vector.broadcast %32 : vector<1x32xf32> to vector<8x32xf32>
    %34 = arith.addf %31, %33 : vector<8x32xf32>
    %c2_20 = arith.constant 2 : index
    %c0_21 = arith.constant 0 : index
    %c0_22 = arith.constant 0 : index
    %35 = vector.load %arg2[%c2_20, %c0_21, %c0_22] : memref<6x32x32xbf16, #tpu.memory_space<vmem>>, vector<1x32x32xbf16>
    %36 = vector.shape_cast %35 : vector<1x32x32xbf16> to vector<32x32xbf16>
    %cst_23 = arith.constant dense<0.000000e+00> : vector<8x32xf32>
    %37 = tpu.matmul %2, %36, %cst_23 {dimension_numbers = #tpu.dot_dimension_numbers<[1], [0], [0], [1], [0, 0, 1, 1], [], []>} : vector<8x32xbf16>, vector<32x32xbf16>, vector<8x32xf32> -> vector<8x32xf32>
    %38 = vector.shape_cast %8 : vector<32xf32> to vector<1x32xf32>
    %39 = vector.broadcast %38 : vector<1x32xf32> to vector<8x32xf32>
    %40 = arith.addf %37, %39 : vector<8x32xf32>
    %cst_24 = arith.constant 0.353553385 : f32
    %41 = vector.broadcast %cst_24 : f32 to vector<8x32xf32>
    %42 = arith.mulf %28, %41 : vector<8x32xf32>
    %43 = arith.truncf %42 : vector<8x32xf32> to vector<8x32xbf16>
    %44 = vector.shape_cast %43 : vector<8x32xbf16> to vector<1x8x32xbf16>
    %45 = arith.truncf %34 : vector<8x32xf32> to vector<8x32xbf16>
    %46 = vector.shape_cast %45 : vector<8x32xbf16> to vector<1x8x32xbf16>
    %47 = arith.truncf %40 : vector<8x32xf32> to vector<8x32xbf16>
    %48 = vector.shape_cast %47 : vector<8x32xbf16> to vector<1x8x32xbf16>
    %49 = vector.extract_strided_slice %44 {offsets = [0, 0, 0], sizes = [1, 8, 8], strides = [1, 1, 1]} : vector<1x8x32xbf16> to vector<1x8x8xbf16>
    %50 = vector.extract_strided_slice %46 {offsets = [0, 0, 0], sizes = [1, 8, 8], strides = [1, 1, 1]} : vector<1x8x32xbf16> to vector<1x8x8xbf16>
    %51 = vector.extract_strided_slice %48 {offsets = [0, 0, 0], sizes = [1, 8, 8], strides = [1, 1, 1]} : vector<1x8x32xbf16> to vector<1x8x8xbf16>
    "tpu.trace_start"() <{level = 10 : i32, message = "bqd,bkd->bqk"}> : () -> ()
    %cst_25 = arith.constant dense<0.000000e+00> : vector<1x8x8xf32>
    %52 = tpu.matmul %49, %50, %cst_25 {dimension_numbers = #tpu.dot_dimension_numbers<[2], [2], [1], [1], [0, 0, 0, 1, 1, 1], [0], [0]>} : vector<1x8x8xbf16>, vector<1x8x8xbf16>, vector<1x8x8xf32> -> vector<1x8x8xf32>
    "tpu.trace_stop"() : () -> ()
    %cst_26 = arith.constant dense<0xFF800000> : vector<1x8xf32>
    %53 = vector.multi_reduction <maximumf>, %52, %cst_26 [2] : vector<1x8x8xf32> to vector<1x8xf32>
    %54 = vector.shape_cast %53 : vector<1x8xf32> to vector<1x8x1xf32>
    %55 = vector.broadcast %54 : vector<1x8x1xf32> to vector<1x8x8xf32>
    %56 = arith.subf %52, %55 : vector<1x8x8xf32>
    %57 = math.exp %56 : vector<1x8x8xf32>
    %cst_27 = arith.constant dense<0.000000e+00> : vector<1x8xf32>
    %58 = vector.multi_reduction <add>, %57, %cst_27 [2] : vector<1x8x8xf32> to vector<1x8xf32>
    %59 = vector.shape_cast %58 : vector<1x8xf32> to vector<1x8x1xf32>
    %60 = tpu.reciprocal %59 {approx = true} : vector<1x8x1xf32> -> vector<1x8x1xf32>
    %61 = vector.broadcast %60 : vector<1x8x1xf32> to vector<1x8x8xf32>
    %62 = arith.mulf %57, %61 : vector<1x8x8xf32>
    %63 = arith.truncf %62 : vector<1x8x8xf32> to vector<1x8x8xbf16>
    "tpu.trace_start"() <{level = 10 : i32, message = "bqk,bkd->bqd"}> : () -> ()
    %cst_28 = arith.constant dense<0.000000e+00> : vector<1x8x8xf32>
    %64 = tpu.matmul %63, %51, %cst_28 {dimension_numbers = #tpu.dot_dimension_numbers<[2], [1], [1], [2], [0, 0, 0, 1, 1, 2], [0], [0]>} : vector<1x8x8xbf16>, vector<1x8x8xbf16>, vector<1x8x8xf32> -> vector<1x8x8xf32>
    "tpu.trace_stop"() : () -> ()
    %c0_29 = arith.constant 0 : index
    %c0_30 = arith.constant 0 : index
    %c0_31 = arith.constant 0 : index
    %65 = vector.load %arg5[%c0_29, %c0_30, %c0_31] : memref<1x8x32xf32, #tpu.memory_space<vmem>>, vector<1x8x8xf32>
    tpu.vector_store %arg5[%c0_29, %c0_30, %c0_31], %64 {strides = array<i32>} : memref<1x8x32xf32, #tpu.memory_space<vmem>>, vector<1x8x8xf32>,
    %66 = vector.extract_strided_slice %44 {offsets = [0, 0, 8], sizes = [1, 8, 8], strides = [1, 1, 1]} : vector<1x8x32xbf16> to vector<1x8x8xbf16>
    %67 = vector.extract_strided_slice %46 {offsets = [0, 0, 8], sizes = [1, 8, 8], strides = [1, 1, 1]} : vector<1x8x32xbf16> to vector<1x8x8xbf16>
    %68 = vector.extract_strided_slice %48 {offsets = [0, 0, 8], sizes = [1, 8, 8], strides = [1, 1, 1]} : vector<1x8x32xbf16> to vector<1x8x8xbf16>
    "tpu.trace_start"() <{level = 10 : i32, message = "bqd,bkd->bqk"}> : () -> ()
    %cst_32 = arith.constant dense<0.000000e+00> : vector<1x8x8xf32>
    %69 = tpu.matmul %66, %67, %cst_32 {dimension_numbers = #tpu.dot_dimension_numbers<[2], [2], [1], [1], [0, 0, 0, 1, 1, 1], [0], [0]>} : vector<1x8x8xbf16>, vector<1x8x8xbf16>, vector<1x8x8xf32> -> vector<1x8x8xf32>
    "tpu.trace_stop"() : () -> ()
    %cst_33 = arith.constant dense<0xFF800000> : vector<1x8xf32>
    %70 = vector.multi_reduction <maximumf>, %69, %cst_33 [2] : vector<1x8x8xf32> to vector<1x8xf32>
    %71 = vector.shape_cast %70 : vector<1x8xf32> to vector<1x8x1xf32>
    %72 = vector.broadcast %71 : vector<1x8x1xf32> to vector<1x8x8xf32>
    %73 = arith.subf %69, %72 : vector<1x8x8xf32>
    %74 = math.exp %73 : vector<1x8x8xf32>
    %cst_34 = arith.constant dense<0.000000e+00> : vector<1x8xf32>
    %75 = vector.multi_reduction <add>, %74, %cst_34 [2] : vector<1x8x8xf32> to vector<1x8xf32>
    %76 = vector.shape_cast %75 : vector<1x8xf32> to vector<1x8x1xf32>
    %77 = tpu.reciprocal %76 {approx = true} : vector<1x8x1xf32> -> vector<1x8x1xf32>
    %78 = vector.broadcast %77 : vector<1x8x1xf32> to vector<1x8x8xf32>
    %79 = arith.mulf %74, %78 : vector<1x8x8xf32>
    %80 = arith.truncf %79 : vector<1x8x8xf32> to vector<1x8x8xbf16>
    "tpu.trace_start"() <{level = 10 : i32, message = "bqk,bkd->bqd"}> : () -> ()
    %cst_35 = arith.constant dense<0.000000e+00> : vector<1x8x8xf32>
    %81 = tpu.matmul %80, %68, %cst_35 {dimension_numbers = #tpu.dot_dimension_numbers<[2], [1], [1], [2], [0, 0, 0, 1, 1, 2], [0], [0]>} : vector<1x8x8xbf16>, vector<1x8x8xbf16>, vector<1x8x8xf32> -> vector<1x8x8xf32>
    "tpu.trace_stop"() : () -> ()
    %c0_36 = arith.constant 0 : index
    %c0_37 = arith.constant 0 : index
    %c8_38 = arith.constant 8 : index
    %82 = vector.load %arg5[%c0_36, %c0_37, %c8_38] : memref<1x8x32xf32, #tpu.memory_space<vmem>>, vector<1x8x8xf32>
    tpu.vector_store %arg5[%c0_36, %c0_37, %c8_38], %81 {strides = array<i32>} : memref<1x8x32xf32, #tpu.memory_space<vmem>>, vector<1x8x8xf32>,
    %83 = vector.extract_strided_slice %44 {offsets = [0, 0, 16], sizes = [1, 8, 8], strides = [1, 1, 1]} : vector<1x8x32xbf16> to vector<1x8x8xbf16>
    %84 = vector.extract_strided_slice %46 {offsets = [0, 0, 16], sizes = [1, 8, 8], strides = [1, 1, 1]} : vector<1x8x32xbf16> to vector<1x8x8xbf16>
    %85 = vector.extract_strided_slice %48 {offsets = [0, 0, 16], sizes = [1, 8, 8], strides = [1, 1, 1]} : vector<1x8x32xbf16> to vector<1x8x8xbf16>
    "tpu.trace_start"() <{level = 10 : i32, message = "bqd,bkd->bqk"}> : () -> ()
    %cst_39 = arith.constant dense<0.000000e+00> : vector<1x8x8xf32>
    %86 = tpu.matmul %83, %84, %cst_39 {dimension_numbers = #tpu.dot_dimension_numbers<[2], [2], [1], [1], [0, 0, 0, 1, 1, 1], [0], [0]>} : vector<1x8x8xbf16>, vector<1x8x8xbf16>, vector<1x8x8xf32> -> vector<1x8x8xf32>
    "tpu.trace_stop"() : () -> ()
    %cst_40 = arith.constant dense<0xFF800000> : vector<1x8xf32>
    %87 = vector.multi_reduction <maximumf>, %86, %cst_40 [2] : vector<1x8x8xf32> to vector<1x8xf32>
    %88 = vector.shape_cast %87 : vector<1x8xf32> to vector<1x8x1xf32>
    %89 = vector.broadcast %88 : vector<1x8x1xf32> to vector<1x8x8xf32>
    %90 = arith.subf %86, %89 : vector<1x8x8xf32>
    %91 = math.exp %90 : vector<1x8x8xf32>
    %cst_41 = arith.constant dense<0.000000e+00> : vector<1x8xf32>
    %92 = vector.multi_reduction <add>, %91, %cst_41 [2] : vector<1x8x8xf32> to vector<1x8xf32>
    %93 = vector.shape_cast %92 : vector<1x8xf32> to vector<1x8x1xf32>
    %94 = tpu.reciprocal %93 {approx = true} : vector<1x8x1xf32> -> vector<1x8x1xf32>
    %95 = vector.broadcast %94 : vector<1x8x1xf32> to vector<1x8x8xf32>
    %96 = arith.mulf %91, %95 : vector<1x8x8xf32>
    %97 = arith.truncf %96 : vector<1x8x8xf32> to vector<1x8x8xbf16>
    "tpu.trace_start"() <{level = 10 : i32, message = "bqk,bkd->bqd"}> : () -> ()
    %cst_42 = arith.constant dense<0.000000e+00> : vector<1x8x8xf32>
    %98 = tpu.matmul %97, %85, %cst_42 {dimension_numbers = #tpu.dot_dimension_numbers<[2], [1], [1], [2], [0, 0, 0, 1, 1, 2], [0], [0]>} : vector<1x8x8xbf16>, vector<1x8x8xbf16>, vector<1x8x8xf32> -> vector<1x8x8xf32>
    "tpu.trace_stop"() : () -> ()
    %c0_43 = arith.constant 0 : index
    %c0_44 = arith.constant 0 : index
    %c16 = arith.constant 16 : index
    %99 = vector.load %arg5[%c0_43, %c0_44, %c16] : memref<1x8x32xf32, #tpu.memory_space<vmem>>, vector<1x8x8xf32>
    tpu.vector_store %arg5[%c0_43, %c0_44, %c16], %98 {strides = array<i32>} : memref<1x8x32xf32, #tpu.memory_space<vmem>>, vector<1x8x8xf32>,
    %100 = vector.extract_strided_slice %44 {offsets = [0, 0, 24], sizes = [1, 8, 8], strides = [1, 1, 1]} : vector<1x8x32xbf16> to vector<1x8x8xbf16>
    %101 = vector.extract_strided_slice %46 {offsets = [0, 0, 24], sizes = [1, 8, 8], strides = [1, 1, 1]} : vector<1x8x32xbf16> to vector<1x8x8xbf16>
    %102 = vector.extract_strided_slice %48 {offsets = [0, 0, 24], sizes = [1, 8, 8], strides = [1, 1, 1]} : vector<1x8x32xbf16> to vector<1x8x8xbf16>
    "tpu.trace_start"() <{level = 10 : i32, message = "bqd,bkd->bqk"}> : () -> ()
    %cst_45 = arith.constant dense<0.000000e+00> : vector<1x8x8xf32>
    %103 = tpu.matmul %100, %101, %cst_45 {dimension_numbers = #tpu.dot_dimension_numbers<[2], [2], [1], [1], [0, 0, 0, 1, 1, 1], [0], [0]>} : vector<1x8x8xbf16>, vector<1x8x8xbf16>, vector<1x8x8xf32> -> vector<1x8x8xf32>
    "tpu.trace_stop"() : () -> ()
    %cst_46 = arith.constant dense<0xFF800000> : vector<1x8xf32>
    %104 = vector.multi_reduction <maximumf>, %103, %cst_46 [2] : vector<1x8x8xf32> to vector<1x8xf32>
    %105 = vector.shape_cast %104 : vector<1x8xf32> to vector<1x8x1xf32>
    %106 = vector.broadcast %105 : vector<1x8x1xf32> to vector<1x8x8xf32>
    %107 = arith.subf %103, %106 : vector<1x8x8xf32>
    %108 = math.exp %107 : vector<1x8x8xf32>
    %cst_47 = arith.constant dense<0.000000e+00> : vector<1x8xf32>
    %109 = vector.multi_reduction <add>, %108, %cst_47 [2] : vector<1x8x8xf32> to vector<1x8xf32>
    %110 = vector.shape_cast %109 : vector<1x8xf32> to vector<1x8x1xf32>
    %111 = tpu.reciprocal %110 {approx = true} : vector<1x8x1xf32> -> vector<1x8x1xf32>
    %112 = vector.broadcast %111 : vector<1x8x1xf32> to vector<1x8x8xf32>
    %113 = arith.mulf %108, %112 : vector<1x8x8xf32>
    %114 = arith.truncf %113 : vector<1x8x8xf32> to vector<1x8x8xbf16>
    "tpu.trace_start"() <{level = 10 : i32, message = "bqk,bkd->bqd"}> : () -> ()
    %cst_48 = arith.constant dense<0.000000e+00> : vector<1x8x8xf32>
    %115 = tpu.matmul %114, %102, %cst_48 {dimension_numbers = #tpu.dot_dimension_numbers<[2], [1], [1], [2], [0, 0, 0, 1, 1, 2], [0], [0]>} : vector<1x8x8xbf16>, vector<1x8x8xbf16>, vector<1x8x8xf32> -> vector<1x8x8xf32>
    "tpu.trace_stop"() : () -> ()
    %c0_49 = arith.constant 0 : index
    %c0_50 = arith.constant 0 : index
    %c24 = arith.constant 24 : index
    %116 = vector.load %arg5[%c0_49, %c0_50, %c24] : memref<1x8x32xf32, #tpu.memory_space<vmem>>, vector<1x8x8xf32>
    tpu.vector_store %arg5[%c0_49, %c0_50, %c24], %115 {strides = array<i32>} : memref<1x8x32xf32, #tpu.memory_space<vmem>>, vector<1x8x8xf32>,
    %c0_51 = arith.constant 0 : index
    %c0_52 = arith.constant 0 : index
    %c0_53 = arith.constant 0 : index
    %117 = vector.load %arg5[%c0_51, %c0_52, %c0_53] : memref<1x8x32xf32, #tpu.memory_space<vmem>>, vector<1x8x32xf32>
    %118 = vector.shape_cast %117 : vector<1x8x32xf32> to vector<8x32xf32>
    %119 = arith.truncf %118 : vector<8x32xf32> to vector<8x32xbf16>
    %c3_54 = arith.constant 3 : index
    %c0_55 = arith.constant 0 : index
    %c0_56 = arith.constant 0 : index
    %120 = vector.load %arg2[%c3_54, %c0_55, %c0_56] : memref<6x32x32xbf16, #tpu.memory_space<vmem>>, vector<1x32x32xbf16>
    %121 = vector.shape_cast %120 : vector<1x32x32xbf16> to vector<32x32xbf16>
    %cst_57 = arith.constant dense<0.000000e+00> : vector<8x32xf32>
    %122 = tpu.matmul %119, %121, %cst_57 {dimension_numbers = #tpu.dot_dimension_numbers<[1], [0], [0], [1], [0, 0, 1, 1], [], []>} : vector<8x32xbf16>, vector<32x32xbf16>, vector<8x32xf32> -> vector<8x32xf32>
    %123 = vector.shape_cast %10 : vector<32xf32> to vector<1x32xf32>
    %124 = vector.broadcast %123 : vector<1x32xf32> to vector<8x32xf32>
    %125 = arith.addf %122, %124 : vector<8x32xf32>
    %126 = arith.addf %125, %1 : vector<8x32xf32>
    %cst_58 = arith.constant dense<0.000000e+00> : vector<8xf32>
    %127 = vector.multi_reduction <add>, %126, %cst_58 [1] : vector<8x32xf32> to vector<8xf32>
    %128 = vector.shape_cast %127 : vector<8xf32> to vector<8x1xf32>
    %cst_59 = arith.constant 3.200000e+01 : f32
    %129 = vector.broadcast %cst_59 : f32 to vector<8x1xf32>
    %130 = arith.divf %128, %129 : vector<8x1xf32>
    %131 = vector.broadcast %130 : vector<8x1xf32> to vector<8x32xf32>
    %132 = arith.subf %126, %131 : vector<8x32xf32>
    %133 = arith.mulf %132, %132 : vector<8x32xf32>
    %cst_60 = arith.constant dense<0.000000e+00> : vector<8xf32>
    %134 = vector.multi_reduction <add>, %133, %cst_60 [1] : vector<8x32xf32> to vector<8xf32>
    %135 = vector.shape_cast %134 : vector<8xf32> to vector<8x1xf32>
    %cst_61 = arith.constant 3.200000e+01 : f32
    %136 = vector.broadcast %cst_61 : f32 to vector<8x1xf32>
    %137 = arith.divf %135, %136 : vector<8x1xf32>
    %138 = vector.broadcast %130 : vector<8x1xf32> to vector<8x32xf32>
    %139 = arith.subf %126, %138 : vector<8x32xf32>
    %cst_62 = arith.constant 9.99999996E-13 : f32
    %140 = vector.broadcast %cst_62 : f32 to vector<8x1xf32>
    %141 = arith.addf %137, %140 : vector<8x1xf32>
    %142 = math.rsqrt %141 : vector<8x1xf32>
    %143 = vector.broadcast %142 : vector<8x1xf32> to vector<8x32xf32>
    %144 = arith.mulf %139, %143 : vector<8x32xf32>
    %145 = vector.shape_cast %12 : vector<32xf32> to vector<1x32xf32>
    %146 = vector.broadcast %145 : vector<1x32xf32> to vector<8x32xf32>
    %147 = arith.mulf %146, %144 : vector<8x32xf32>
    %148 = vector.shape_cast %14 : vector<32xf32> to vector<1x32xf32>
    %149 = vector.broadcast %148 : vector<1x32xf32> to vector<8x32xf32>
    %150 = arith.addf %147, %149 : vector<8x32xf32>
    %151 = arith.truncf %150 : vector<8x32xf32> to vector<8x32xbf16>
    %c4_63 = arith.constant 4 : index
    %c0_64 = arith.constant 0 : index
    %c0_65 = arith.constant 0 : index
    %152 = vector.load %arg2[%c4_63, %c0_64, %c0_65] : memref<6x32x32xbf16, #tpu.memory_space<vmem>>, vector<1x32x32xbf16>
    %153 = vector.shape_cast %152 : vector<1x32x32xbf16> to vector<32x32xbf16>
    %cst_66 = arith.constant dense<0.000000e+00> : vector<8x32xf32>
    %154 = tpu.matmul %151, %153, %cst_66 {dimension_numbers = #tpu.dot_dimension_numbers<[1], [0], [0], [1], [0, 0, 1, 1], [], []>} : vector<8x32xbf16>, vector<32x32xbf16>, vector<8x32xf32> -> vector<8x32xf32>
    %155 = vector.shape_cast %16 : vector<32xf32> to vector<1x32xf32>
    %156 = vector.broadcast %155 : vector<1x32xf32> to vector<8x32xf32>
    %157 = arith.addf %154, %156 : vector<8x32xf32>
    %cst_67 = arith.constant 5.000000e-01 : f32
    %158 = vector.broadcast %cst_67 : f32 to vector<8x32xf32>
    %159 = arith.mulf %157, %158 : vector<8x32xf32>
    %cst_68 = arith.constant 0.707106769 : f32
    %160 = vector.broadcast %cst_68 : f32 to vector<8x32xf32>
    %161 = arith.mulf %157, %160 : vector<8x32xf32>
    %162 = math.erf %161 : vector<8x32xf32>
    %cst_69 = arith.constant 1.000000e+00 : f32
    %163 = vector.broadcast %cst_69 : f32 to vector<8x32xf32>
    %164 = arith.addf %163, %162 : vector<8x32xf32>
    %165 = arith.mulf %159, %164 : vector<8x32xf32>
    %166 = arith.truncf %165 : vector<8x32xf32> to vector<8x32xbf16>
    %c5_70 = arith.constant 5 : index
    %c0_71 = arith.constant 0 : index
    %c0_72 = arith.constant 0 : index
    %167 = vector.load %arg2[%c5_70, %c0_71, %c0_72] : memref<6x32x32xbf16, #tpu.memory_space<vmem>>, vector<1x32x32xbf16>
    %168 = vector.shape_cast %167 : vector<1x32x32xbf16> to vector<32x32xbf16>
    %cst_73 = arith.constant dense<0.000000e+00> : vector<8x32xf32>
    %169 = tpu.matmul %166, %168, %cst_73 {dimension_numbers = #tpu.dot_dimension_numbers<[1], [0], [0], [1], [0, 0, 1, 1], [], []>} : vector<8x32xbf16>, vector<32x32xbf16>, vector<8x32xf32> -> vector<8x32xf32>
    %170 = vector.shape_cast %18 : vector<32xf32> to vector<1x32xf32>
    %171 = vector.broadcast %170 : vector<1x32xf32> to vector<8x32xf32>
    %172 = arith.addf %169, %171 : vector<8x32xf32>
    %173 = arith.addf %172, %150 : vector<8x32xf32>
    %cst_74 = arith.constant dense<0.000000e+00> : vector<8xf32>
    %174 = vector.multi_reduction <add>, %173, %cst_74 [1] : vector<8x32xf32> to vector<8xf32>
    %175 = vector.shape_cast %174 : vector<8xf32> to vector<8x1xf32>
    %cst_75 = arith.constant 3.200000e+01 : f32
    %176 = vector.broadcast %cst_75 : f32 to vector<8x1xf32>
    %177 = arith.divf %175, %176 : vector<8x1xf32>
    %178 = vector.broadcast %177 : vector<8x1xf32> to vector<8x32xf32>
    %179 = arith.subf %173, %178 : vector<8x32xf32>
    %180 = arith.mulf %179, %179 : vector<8x32xf32>
    %cst_76 = arith.constant dense<0.000000e+00> : vector<8xf32>
    %181 = vector.multi_reduction <add>, %180, %cst_76 [1] : vector<8x32xf32> to vector<8xf32>
    %182 = vector.shape_cast %181 : vector<8xf32> to vector<8x1xf32>
    %cst_77 = arith.constant 3.200000e+01 : f32
    %183 = vector.broadcast %cst_77 : f32 to vector<8x1xf32>
    %184 = arith.divf %182, %183 : vector<8x1xf32>
    %185 = vector.broadcast %177 : vector<8x1xf32> to vector<8x32xf32>
    %186 = arith.subf %173, %185 : vector<8x32xf32>
    %cst_78 = arith.constant 9.99999996E-13 : f32
    %187 = vector.broadcast %cst_78 : f32 to vector<8x1xf32>
    %188 = arith.addf %184, %187 : vector<8x1xf32>
    %189 = math.rsqrt %188 : vector<8x1xf32>
    %190 = vector.broadcast %189 : vector<8x1xf32> to vector<8x32xf32>
    %191 = arith.mulf %186, %190 : vector<8x32xf32>
    %192 = vector.shape_cast %20 : vector<32xf32> to vector<1x32xf32>
    %193 = vector.broadcast %192 : vector<1x32xf32> to vector<8x32xf32>
    %194 = arith.mulf %193, %191 : vector<8x32xf32>
    %195 = vector.shape_cast %22 : vector<32xf32> to vector<1x32xf32>
    %196 = vector.broadcast %195 : vector<1x32xf32> to vector<8x32xf32>
    %197 = arith.addf %194, %196 : vector<8x32xf32>
    %198 = vector.shape_cast %197 : vector<8x32xf32> to vector<1x8x32xf32>
    %c0_79 = arith.constant 0 : index
    %c0_80 = arith.constant 0 : index
    %c0_81 = arith.constant 0 : index
    %199 = vector.load %arg4[%c0_79, %c0_80, %c0_81] : memref<1x8x32xf32, #tpu.memory_space<vmem>>, vector<1x8x32xf32>
    tpu.vector_store %arg4[%c0_79, %c0_80, %c0_81], %198 {strides = array<i32>} : memref<1x8x32xf32, #tpu.memory_space<vmem>>, vector<1x8x32xf32>,
    return
  }
  func.func @transform_0(%arg0: i32) -> (i32, i32, i32) {
    %c0_i32 = arith.constant 0 : i32
    %c0_i32_0 = arith.constant 0 : i32
    %c0_i32_1 = arith.constant 0 : i32
    return %arg0, %c0_i32, %c0_i32_0 : i32, i32, i32
  }
  func.func @transform_1(%arg0: i32) -> (i32, i32, i32) {
    %c0_i32 = arith.constant 0 : i32
    %c0_i32_0 = arith.constant 0 : i32
    %c0_i32_1 = arith.constant 0 : i32
    %c0_i32_2 = arith.constant 0 : i32
    return %c0_i32, %c0_i32_0, %c0_i32_1 : i32, i32, i32
  }
  func.func @transform_2(%arg0: i32) -> (i32, i32) {
    %c0_i32 = arith.constant 0 : i32
    %c0_i32_0 = arith.constant 0 : i32
    %c0_i32_1 = arith.constant 0 : i32
    return %c0_i32, %c0_i32_0 : i32, i32
  }
  func.func @transform_3(%arg0: i32) -> (i32, i32, i32) {
    %c0_i32 = arith.constant 0 : i32
    %c0_i32_0 = arith.constant 0 : i32
    %c0_i32_1 = arith.constant 0 : i32
    return %arg0, %c0_i32, %c0_i32_0 : i32, i32, i32
  }
}

module attributes {stable_mosaic.version = 11 : i64} {
  func.func @gpp_kernel(%arg0: i32, %arg1: memref<1x8x32xf32, #tpu.memory_space<vmem>>, %arg2: memref<6x32x32xbf16, #tpu.memory_space<vmem>>, %arg3: memref<10x32xf32, #tpu.memory_space<vmem>>, %arg4: memref<1x8x32xf32, #tpu.memory_space<vmem>>, %arg5: memref<1x8x32xf32, #tpu.memory_space<vmem>>) attributes {dimension_semantics = [#tpu.dimension_semantics<parallel>], iteration_bounds = array<i64: 2>, scalar_prefetch = 0 : i64, scratch_operands = 1 : i64, tpu.core_type = #tpu.core_type<tc>, window_params = [{transform_indices = @transform_0, window_bounds = array<i64: 1, 8, 32>}, {pipeline_mode = #tpu.pipeline_mode<synchronous>, transform_indices = @transform_1, window_bounds = array<i64: 6, 32, 32>}, {pipeline_mode = #tpu.pipeline_mode<synchronous>, transform_indices = @transform_2, window_bounds = array<i64: 10, 32>}, {transform_indices = @transform_3, window_bounds = array<i64: 1, 8, 32>}]} {
    %c0 = arith.constant 0 : index
    %c0_0 = arith.constant 0 : index
    %c0_1 = arith.constant 0 : index
    %0 = vector.load %arg1[%c0, %c0_0, %c0_1] : memref<1x8x32xf32, #tpu.memory_space<vmem>>, vector<1x8x32xf32>
    %1 = vector.shape_cast %0 : vector<1x8x32xf32> to vector<8x32xf32>
    %2 = arith.truncf %1 : vector<8x32xf32> to vector<8x32xbf16>
    %c0_2 = arith.constant 0 : index
    %c0_3 = arith.constant 0 : index
    %3 = vector.load %arg3[%c0_2, %c0_3] : memref<10x32xf32, #tpu.memory_space<vmem>>, vector<1x32xf32>
    %4 = vector.shape_cast %3 : vector<1x32xf32> to vector<32xf32>
    %c1 = arith.constant 1 : index
    %c0_4 = arith.constant 0 : index
    %5 = vector.load %arg3[%c1, %c0_4] : memref<10x32xf32, #tpu.memory_space<vmem>>, vector<1x32xf32>
    %6 = vector.shape_cast %5 : vector<1x32xf32> to vector<32xf32>
    %c2 = arith.constant 2 : index
    %c0_5 = arith.constant 0 : index
    %7 = vector.load %arg3[%c2, %c0_5] : memref<10x32xf32, #tpu.memory_space<vmem>>, vector<1x32xf32>
    %8 = vector.shape_cast %7 : vector<1x32xf32> to vector<32xf32>
    %c3 = arith.constant 3 : index
    %c0_6 = arith.constant 0 : index
    %9 = vector.load %arg3[%c3, %c0_6] : memref<10x32xf32, #tpu.memory_space<vmem>>, vector<1x32xf32>
    %10 = vector.shape_cast %9 : vector<1x32xf32> to vector<32xf32>
    %c4 = arith.constant 4 : index
    %c0_7 = arith.constant 0 : index
    %11 = vector.load %arg3[%c4, %c0_7] : memref<10x32xf32, #tpu.memory_space<vmem>>, vector<1x32xf32>
    %12 = vector.shape_cast %11 : vector<1x32xf32> to vector<32xf32>
    %c5 = arith.constant 5 : index
    %c0_8 = arith.constant 0 : index
    %13 = vector.load %arg3[%c5, %c0_8] : memref<10x32xf32, #tpu.memory_space<vmem>>, vector<1x32xf32>
    %14 = vector.shape_cast %13 : vector<1x32xf32> to vector<32xf32>
    %c6 = arith.constant 6 : index
    %c0_9 = arith.constant 0 : index
    %15 = vector.load %arg3[%c6, %c0_9] : memref<10x32xf32, #tpu.memory_space<vmem>>, vector<1x32xf32>
    %16 = vector.shape_cast %15 : vector<1x32xf32> to vector<32xf32>
    %c7 = arith.constant 7 : index
    %c0_10 = arith.constant 0 : index
    %17 = vector.load %arg3[%c7, %c0_10] : memref<10x32xf32, #tpu.memory_space<vmem>>, vector<1x32xf32>
    %18 = vector.shape_cast %17 : vector<1x32xf32> to vector<32xf32>
    %c8 = arith.constant 8 : index
    %c0_11 = arith.constant 0 : index
    %19 = vector.load %arg3[%c8, %c0_11] : memref<10x32xf32, #tpu.memory_space<vmem>>, vector<1x32xf32>
    %20 = vector.shape_cast %19 : vector<1x32xf32> to vector<32xf32>
    %c9 = arith.constant 9 : index
    %c0_12 = arith.constant 0 : index
    %21 = vector.load %arg3[%c9, %c0_12] : memref<10x32xf32, #tpu.memory_space<vmem>>, vector<1x32xf32>
    %22 = vector.shape_cast %21 : vector<1x32xf32> to vector<32xf32>
    %c0_13 = arith.constant 0 : index
    %c0_14 = arith.constant 0 : index
    %c0_15 = arith.constant 0 : index
    %23 = vector.load %arg2[%c0_13, %c0_14, %c0_15] : memref<6x32x32xbf16, #tpu.memory_space<vmem>>, vector<1x32x32xbf16>
    %24 = vector.shape_cast %23 : vector<1x32x32xbf16> to vector<32x32xbf16>
    %cst = arith.constant dense<0.000000e+00> : vector<8x32xf32>
    %25 = tpu.matmul %2, %24, %cst {dimension_numbers = #tpu.dot_dimension_numbers<[1], [0], [0], [1], [0, 0, 1, 1], [], []>} : vector<8x32xbf16>, vector<32x32xbf16>, vector<8x32xf32> -> vector<8x32xf32>
    %26 = vector.shape_cast %4 : vector<32xf32> to vector<1x32xf32>
    %27 = vector.broadcast %26 : vector<1x32xf32> to vector<8x32xf32>
    %28 = arith.addf %25, %27 : vector<8x32xf32>
    %c1_16 = arith.constant 1 : index
    %c0_17 = arith.constant 0 : index
    %c0_18 = arith.constant 0 : index
    %29 = vector.load %arg2[%c1_16, %c0_17, %c0_18] : memref<6x32x32xbf16, #tpu.memory_space<vmem>>, vector<1x32x32xbf16>
    %30 = vector.shape_cast %29 : vector<1x32x32xbf16> to vector<32x32xbf16>
    %cst_19 = arith.constant dense<0.000000e+00> : vector<8x32xf32>
    %31 = tpu.matmul %2, %30, %cst_19 {dimension_numbers = #tpu.dot_dimension_numbers<[1], [0], [0], [1], [0, 0, 1, 1], [], []>} : vector<8x32xbf16>, vector<32x32xbf16>, vector<8x32xf32> -> vector<8x32xf32>
    %32 = vector.shape_cast %6 : vector<32xf32> to vector<1x32xf32>
    %33 = vector.broadcast %32 : vector<1x32xf32> to vector<8x32xf32>
    %34 = arith.addf %31, %33 : vector<8x32xf32>
    %c2_20 = arith.constant 2 : index
    %c0_21 = arith.constant 0 : index
    %c0_22 = arith.constant 0 : index
    %35 = vector.load %arg2[%c2_20, %c0_21, %c0_22] : memref<6x32x32xbf16, #tpu.memory_space<vmem>>, vector<1x32x32xbf16>
    %36 = vector.shape_cast %35 : vector<1x32x32xbf16> to vector<32x32xbf16>
    %cst_23 = arith.constant dense<0.000000e+00> : vector<8x32xf32>
    %37 = tpu.matmul %2, %36, %cst_23 {dimension_numbers = #tpu.dot_dimension_numbers<[1], [0], [0], [1], [0, 0, 1, 1], [], []>} : vector<8x32xbf16>, vector<32x32xbf16>, vector<8x32xf32> -> vector<8x32xf32>
    %38 = vector.shape_cast %8 : vector<32xf32> to vector<1x32xf32>
    %39 = vector.broadcast %38 : vector<1x32xf32> to vector<8x32xf32>
    %40 = arith.addf %37, %39 : vector<8x32xf32>
    %cst_24 = arith.constant 0.353553385 : f32
    %41 = vector.broadcast %cst_24 : f32 to vector<8x32xf32>
    %42 = arith.mulf %28, %41 : vector<8x32xf32>
    %43 = arith.truncf %42 : vector<8x32xf32> to vector<8x32xbf16>
    %44 = vector.shape_cast %43 : vector<8x32xbf16> to vector<1x8x32xbf16>
    %45 = arith.truncf %34 : vector<8x32xf32> to vector<8x32xbf16>
    %46 = vector.shape_cast %45 : vector<8x32xbf16> to vector<1x8x32xbf16>
    %47 = arith.truncf %40 : vector<8x32xf32> to vector<8x32xbf16>
    %48 = vector.shape_cast %47 : vector<8x32xbf16> to vector<1x8x32xbf16>
    %49 = vector.extract_strided_slice %44 {offsets = [0, 0, 0], sizes = [1, 8, 8], strides = [1, 1, 1]} : vector<1x8x32xbf16> to vector<1x8x8xbf16>
    %50 = vector.extract_strided_slice %46 {offsets = [0, 0, 0], sizes = [1, 8, 8], strides = [1, 1, 1]} : vector<1x8x32xbf16> to vector<1x8x8xbf16>
    %51 = vector.extract_strided_slice %48 {offsets = [0, 0, 0], sizes = [1, 8, 8], strides = [1, 1, 1]} : vector<1x8x32xbf16> to vector<1x8x8xbf16>
    "tpu.trace_start"() <{level = 10 : i32, message = "bqd,bkd->bqk"}> : () -> ()
    %cst_25 = arith.constant dense<0.000000e+00> : vector<1x8x8xf32>
    %52 = tpu.matmul %49, %50, %cst_25 {dimension_numbers = #tpu.dot_dimension_numbers<[2], [2], [1], [1], [0, 0, 0, 1, 1, 1], [0], [0]>} : vector<1x8x8xbf16>, vector<1x8x8xbf16>, vector<1x8x8xf32> -> vector<1x8x8xf32>
    "tpu.trace_stop"() : () -> ()
    %cst_26 = arith.constant dense<0xFF800000> : vector<1x8xf32>
    %53 = vector.multi_reduction <maximumf>, %52, %cst_26 [2] : vector<1x8x8xf32> to vector<1x8xf32>
    %54 = vector.shape_cast %53 : vector<1x8xf32> to vector<1x8x1xf32>
    %55 = vector.broadcast %54 : vector<1x8x1xf32> to vector<1x8x8xf32>
    %56 = arith.subf %52, %55 : vector<1x8x8xf32>
    %57 = math.exp %56 : vector<1x8x8xf32>
    %cst_27 = arith.constant dense<0.000000e+00> : vector<1x8xf32>
    %58 = vector.multi_reduction <add>, %57, %cst_27 [2] : vector<1x8x8xf32> to vector<1x8xf32>
    %59 = vector.shape_cast %58 : vector<1x8xf32> to vector<1x8x1xf32>
    %60 = tpu.reciprocal %59 {approx = true} : vector<1x8x1xf32> -> vector<1x8x1xf32>
    %61 = vector.broadcast %60 : vector<1x8x1xf32> to vector<1x8x8xf32>
    %62 = arith.mulf %57, %61 : vector<1x8x8xf32>
    %63 = arith.truncf %62 : vector<1x8x8xf32> to vector<1x8x8xbf16>
    "tpu.trace_start"() <{level = 10 : i32, message = "bqk,bkd->bqd"}> : () -> ()
    %cst_28 = arith.constant dense<0.000000e+00> : vector<1x8x8xf32>
    %64 = tpu.matmul %63, %51, %cst_28 {dimension_numbers = #tpu.dot_dimension_numbers<[2], [1], [1], [2], [0, 0, 0, 1, 1, 2], [0], [0]>} : vector<1x8x8xbf16>, vector<1x8x8xbf16>, vector<1x8x8xf32> -> vector<1x8x8xf32>
    "tpu.trace_stop"() : () -> ()
    %c0_29 = arith.constant 0 : index
    %c0_30 = arith.constant 0 : index
    %c0_31 = arith.constant 0 : index
    %65 = vector.load %arg5[%c0_29, %c0_30, %c0_31] : memref<1x8x32xf32, #tpu.memory_space<vmem>>, vector<1x8x8xf32>
    tpu.vector_store %arg5[%c0_29, %c0_30, %c0_31], %64 {strides = array<i32>} : memref<1x8x32xf32, #tpu.memory_space<vmem>>, vector<1x8x8xf32>,
    %66 = vector.extract_strided_slice %44 {offsets = [0, 0, 8], sizes = [1, 8, 8], strides = [1, 1, 1]} : vector<1x8x32xbf16> to vector<1x8x8xbf16>
    %67 = vector.extract_strided_slice %46 {offsets = [0, 0, 8], sizes = [1, 8, 8], strides = [1, 1, 1]} : vector<1x8x32xbf16> to vector<1x8x8xbf16>
    %68 = vector.extract_strided_slice %48 {offsets = [0, 0, 8], sizes = [1, 8, 8], strides = [1, 1, 1]} : vector<1x8x32xbf16> to vector<1x8x8xbf16>
    "tpu.trace_start"() <{level = 10 : i32, message = "bqd,bkd->bqk"}> : () -> ()
    %cst_32 = arith.constant dense<0.000000e+00> : vector<1x8x8xf32>
    %69 = tpu.matmul %66, %67, %cst_32 {dimension_numbers = #tpu.dot_dimension_numbers<[2], [2], [1], [1], [0, 0, 0, 1, 1, 1], [0], [0]>} : vector<1x8x8xbf16>, vector<1x8x8xbf16>, vector<1x8x8xf32> -> vector<1x8x8xf32>
    "tpu.trace_stop"() : () -> ()
    %cst_33 = arith.constant dense<0xFF800000> : vector<1x8xf32>
    %70 = vector.multi_reduction <maximumf>, %69, %cst_33 [2] : vector<1x8x8xf32> to vector<1x8xf32>
    %71 = vector.shape_cast %70 : vector<1x8xf32> to vector<1x8x1xf32>
    %72 = vector.broadcast %71 : vector<1x8x1xf32> to vector<1x8x8xf32>
    %73 = arith.subf %69, %72 : vector<1x8x8xf32>
    %74 = math.exp %73 : vector<1x8x8xf32>
    %cst_34 = arith.constant dense<0.000000e+00> : vector<1x8xf32>
    %75 = vector.multi_reduction <add>, %74, %cst_34 [2] : vector<1x8x8xf32> to vector<1x8xf32>
    %76 = vector.shape_cast %75 : vector<1x8xf32> to vector<1x8x1xf32>
    %77 = tpu.reciprocal %76 {approx = true} : vector<1x8x1xf32> -> vector<1x8x1xf32>
    %78 = vector.broadcast %77 : vector<1x8x1xf32> to vector<1x8x8xf32>
    %79 = arith.mulf %74, %78 : vector<1x8x8xf32>
    %80 = arith.truncf %79 : vector<1x8x8xf32> to vector<1x8x8xbf16>
    "tpu.trace_start"() <{level = 10 : i32, message = "bqk,bkd->bqd"}> : () -> ()
    %cst_35 = arith.constant dense<0.000000e+00> : vector<1x8x8xf32>
    %81 = tpu.matmul %80, %68, %cst_35 {dimension_numbers = #tpu.dot_dimension_numbers<[2], [1], [1], [2], [0, 0, 0, 1, 1, 2], [0], [0]>} : vector<1x8x8xbf16>, vector<1x8x8xbf16>, vector<1x8x8xf32> -> vector<1x8x8xf32>
    "tpu.trace_stop"() : () -> ()
    %c0_36 = arith.constant 0 : index
    %c0_37 = arith.constant 0 : index
    %c8_38 = arith.constant 8 : index
    %82 = vector.load %arg5[%c0_36, %c0_37, %c8_38] : memref<1x8x32xf32, #tpu.memory_space<vmem>>, vector<1x8x8xf32>
    tpu.vector_store %arg5[%c0_36, %c0_37, %c8_38], %81 {strides = array<i32>} : memref<1x8x32xf32, #tpu.memory_space<vmem>>, vector<1x8x8xf32>,
    %83 = vector.extract_strided_slice %44 {offsets = [0, 0, 16], sizes = [1, 8, 8], strides = [1, 1, 1]} : vector<1x8x32xbf16> to vector<1x8x8xbf16>
    %84 = vector.extract_strided_slice %46 {offsets = [0, 0, 16], sizes = [1, 8, 8], strides = [1, 1, 1]} : vector<1x8x32xbf16> to vector<1x8x8xbf16>
    %85 = vector.extract_strided_slice %48 {offsets = [0, 0, 16], sizes = [1, 8, 8], strides = [1, 1, 1]} : vector<1x8x32xbf16> to vector<1x8x8xbf16>
    "tpu.trace_start"() <{level = 10 : i32, message = "bqd,bkd->bqk"}> : () -> ()
    %cst_39 = arith.constant dense<0.000000e+00> : vector<1x8x8xf32>
    %86 = tpu.matmul %83, %84, %cst_39 {dimension_numbers = #tpu.dot_dimension_numbers<[2], [2], [1], [1], [0, 0, 0, 1, 1, 1], [0], [0]>} : vector<1x8x8xbf16>, vector<1x8x8xbf16>, vector<1x8x8xf32> -> vector<1x8x8xf32>
    "tpu.trace_stop"() : () -> ()
    %cst_40 = arith.constant dense<0xFF800000> : vector<1x8xf32>
    %87 = vector.multi_reduction <maximumf>, %86, %cst_40 [2] : vector<1x8x8xf32> to vector<1x8xf32>
    %88 = vector.shape_cast %87 : vector<1x8xf32> to vector<1x8x1xf32>
    %89 = vector.broadcast %88 : vector<1x8x1xf32> to vector<1x8x8xf32>
    %90 = arith.subf %86, %89 : vector<1x8x8xf32>
    %91 = math.exp %90 : vector<1x8x8xf32>
    %cst_41 = arith.constant dense<0.000000e+00> : vector<1x8xf32>
    %92 = vector.multi_reduction <add>, %91, %cst_41 [2] : vector<1x8x8xf32> to vector<1x8xf32>
    %93 = vector.shape_cast %92 : vector<1x8xf32> to vector<1x8x1xf32>
    %94 = tpu.reciprocal %93 {approx = true} : vector<1x8x1xf32> -> vector<1x8x1xf32>
    %95 = vector.broadcast %94 : vector<1x8x1xf32> to vector<1x8x8xf32>
    %96 = arith.mulf %91, %95 : vector<1x8x8xf32>
    %97 = arith.truncf %96 : vector<1x8x8xf32> to vector<1x8x8xbf16>
    "tpu.trace_start"() <{level = 10 : i32, message = "bqk,bkd->bqd"}> : () -> ()
    %cst_42 = arith.constant dense<0.000000e+00> : vector<1x8x8xf32>
    %98 = tpu.matmul %97, %85, %cst_42 {dimension_numbers = #tpu.dot_dimension_numbers<[2], [1], [1], [2], [0, 0, 0, 1, 1, 2], [0], [0]>} : vector<1x8x8xbf16>, vector<1x8x8xbf16>, vector<1x8x8xf32> -> vector<1x8x8xf32>
    "tpu.trace_stop"() : () -> ()
    %c0_43 = arith.constant 0 : index
    %c0_44 = arith.constant 0 : index
    %c16 = arith.constant 16 : index
    %99 = vector.load %arg5[%c0_43, %c0_44, %c16] : memref<1x8x32xf32, #tpu.memory_space<vmem>>, vector<1x8x8xf32>
    tpu.vector_store %arg5[%c0_43, %c0_44, %c16], %98 {strides = array<i32>} : memref<1x8x32xf32, #tpu.memory_space<vmem>>, vector<1x8x8xf32>,
    %100 = vector.extract_strided_slice %44 {offsets = [0, 0, 24], sizes = [1, 8, 8], strides = [1, 1, 1]} : vector<1x8x32xbf16> to vector<1x8x8xbf16>
    %101 = vector.extract_strided_slice %46 {offsets = [0, 0, 24], sizes = [1, 8, 8], strides = [1, 1, 1]} : vector<1x8x32xbf16> to vector<1x8x8xbf16>
    %102 = vector.extract_strided_slice %48 {offsets = [0, 0, 24], sizes = [1, 8, 8], strides = [1, 1, 1]} : vector<1x8x32xbf16> to vector<1x8x8xbf16>
    "tpu.trace_start"() <{level = 10 : i32, message = "bqd,bkd->bqk"}> : () -> ()
    %cst_45 = arith.constant dense<0.000000e+00> : vector<1x8x8xf32>
    %103 = tpu.matmul %100, %101, %cst_45 {dimension_numbers = #tpu.dot_dimension_numbers<[2], [2], [1], [1], [0, 0, 0, 1, 1, 1], [0], [0]>} : vector<1x8x8xbf16>, vector<1x8x8xbf16>, vector<1x8x8xf32> -> vector<1x8x8xf32>
    "tpu.trace_stop"() : () -> ()
    %cst_46 = arith.constant dense<0xFF800000> : vector<1x8xf32>
    %104 = vector.multi_reduction <maximumf>, %103, %cst_46 [2] : vector<1x8x8xf32> to vector<1x8xf32>
    %105 = vector.shape_cast %104 : vector<1x8xf32> to vector<1x8x1xf32>
    %106 = vector.broadcast %105 : vector<1x8x1xf32> to vector<1x8x8xf32>
    %107 = arith.subf %103, %106 : vector<1x8x8xf32>
    %108 = math.exp %107 : vector<1x8x8xf32>
    %cst_47 = arith.constant dense<0.000000e+00> : vector<1x8xf32>
    %109 = vector.multi_reduction <add>, %108, %cst_47 [2] : vector<1x8x8xf32> to vector<1x8xf32>
    %110 = vector.shape_cast %109 : vector<1x8xf32> to vector<1x8x1xf32>
    %111 = tpu.reciprocal %110 {approx = true} : vector<1x8x1xf32> -> vector<1x8x1xf32>
    %112 = vector.broadcast %111 : vector<1x8x1xf32> to vector<1x8x8xf32>
    %113 = arith.mulf %108, %112 : vector<1x8x8xf32>
    %114 = arith.truncf %113 : vector<1x8x8xf32> to vector<1x8x8xbf16>
    "tpu.trace_start"() <{level = 10 : i32, message = "bqk,bkd->bqd"}> : () -> ()
    %cst_48 = arith.constant dense<0.000000e+00> : vector<1x8x8xf32>
    %115 = tpu.matmul %114, %102, %cst_48 {dimension_numbers = #tpu.dot_dimension_numbers<[2], [1], [1], [2], [0, 0, 0, 1, 1, 2], [0], [0]>} : vector<1x8x8xbf16>, vector<1x8x8xbf16>, vector<1x8x8xf32> -> vector<1x8x8xf32>
    "tpu.trace_stop"() : () -> ()
    %c0_49 = arith.constant 0 : index
    %c0_50 = arith.constant 0 : index
    %c24 = arith.constant 24 : index
    %116 = vector.load %arg5[%c0_49, %c0_50, %c24] : memref<1x8x32xf32, #tpu.memory_space<vmem>>, vector<1x8x8xf32>
    tpu.vector_store %arg5[%c0_49, %c0_50, %c24], %115 {strides = array<i32>} : memref<1x8x32xf32, #tpu.memory_space<vmem>>, vector<1x8x8xf32>,
    %c0_51 = arith.constant 0 : index
    %c0_52 = arith.constant 0 : index
    %c0_53 = arith.constant 0 : index
    %117 = vector.load %arg5[%c0_51, %c0_52, %c0_53] : memref<1x8x32xf32, #tpu.memory_space<vmem>>, vector<1x8x32xf32>
    %118 = vector.shape_cast %117 : vector<1x8x32xf32> to vector<8x32xf32>
    %119 = arith.truncf %118 : vector<8x32xf32> to vector<8x32xbf16>
    %c3_54 = arith.constant 3 : index
    %c0_55 = arith.constant 0 : index
    %c0_56 = arith.constant 0 : index
    %120 = vector.load %arg2[%c3_54, %c0_55, %c0_56] : memref<6x32x32xbf16, #tpu.memory_space<vmem>>, vector<1x32x32xbf16>
    %121 = vector.shape_cast %120 : vector<1x32x32xbf16> to vector<32x32xbf16>
    %cst_57 = arith.constant dense<0.000000e+00> : vector<8x32xf32>
    %122 = tpu.matmul %119, %121, %cst_57 {dimension_numbers = #tpu.dot_dimension_numbers<[1], [0], [0], [1], [0, 0, 1, 1], [], []>} : vector<8x32xbf16>, vector<32x32xbf16>, vector<8x32xf32> -> vector<8x32xf32>
    %123 = vector.shape_cast %10 : vector<32xf32> to vector<1x32xf32>
    %124 = vector.broadcast %123 : vector<1x32xf32> to vector<8x32xf32>
    %125 = arith.addf %122, %124 : vector<8x32xf32>
    %126 = arith.addf %125, %1 : vector<8x32xf32>
    %cst_58 = arith.constant dense<0.000000e+00> : vector<8xf32>
    %127 = vector.multi_reduction <add>, %126, %cst_58 [1] : vector<8x32xf32> to vector<8xf32>
    %128 = vector.shape_cast %127 : vector<8xf32> to vector<8x1xf32>
    %cst_59 = arith.constant 3.200000e+01 : f32
    %129 = vector.broadcast %cst_59 : f32 to vector<8x1xf32>
    %130 = arith.divf %128, %129 : vector<8x1xf32>
    %131 = vector.broadcast %130 : vector<8x1xf32> to vector<8x32xf32>
    %132 = arith.subf %126, %131 : vector<8x32xf32>
    %133 = arith.mulf %132, %132 : vector<8x32xf32>
    %cst_60 = arith.constant dense<0.000000e+00> : vector<8xf32>
    %134 = vector.multi_reduction <add>, %133, %cst_60 [1] : vector<8x32xf32> to vector<8xf32>
    %135 = vector.shape_cast %134 : vector<8xf32> to vector<8x1xf32>
    %cst_61 = arith.constant 3.200000e+01 : f32
    %136 = vector.broadcast %cst_61 : f32 to vector<8x1xf32>
    %137 = arith.divf %135, %136 : vector<8x1xf32>
    %138 = vector.broadcast %130 : vector<8x1xf32> to vector<8x32xf32>
    %139 = arith.subf %126, %138 : vector<8x32xf32>
    %cst_62 = arith.constant 9.99999996E-13 : f32
    %140 = vector.broadcast %cst_62 : f32 to vector<8x1xf32>
    %141 = arith.addf %137, %140 : vector<8x1xf32>
    %142 = math.rsqrt %141 : vector<8x1xf32>
    %143 = vector.broadcast %142 : vector<8x1xf32> to vector<8x32xf32>
    %144 = arith.mulf %139, %143 : vector<8x32xf32>
    %145 = vector.shape_cast %12 : vector<32xf32> to vector<1x32xf32>
    %146 = vector.broadcast %145 : vector<1x32xf32> to vector<8x32xf32>
    %147 = arith.mulf %146, %144 : vector<8x32xf32>
    %148 = vector.shape_cast %14 : vector<32xf32> to vector<1x32xf32>
    %149 = vector.broadcast %148 : vector<1x32xf32> to vector<8x32xf32>
    %150 = arith.addf %147, %149 : vector<8x32xf32>
    %151 = arith.truncf %150 : vector<8x32xf32> to vector<8x32xbf16>
    %c4_63 = arith.constant 4 : index
    %c0_64 = arith.constant 0 : index
    %c0_65 = arith.constant 0 : index
    %152 = vector.load %arg2[%c4_63, %c0_64, %c0_65] : memref<6x32x32xbf16, #tpu.memory_space<vmem>>, vector<1x32x32xbf16>
    %153 = vector.shape_cast %152 : vector<1x32x32xbf16> to vector<32x32xbf16>
    %cst_66 = arith.constant dense<0.000000e+00> : vector<8x32xf32>
    %154 = tpu.matmul %151, %153, %cst_66 {dimension_numbers = #tpu.dot_dimension_numbers<[1], [0], [0], [1], [0, 0, 1, 1], [], []>} : vector<8x32xbf16>, vector<32x32xbf16>, vector<8x32xf32> -> vector<8x32xf32>
    %155 = vector.shape_cast %16 : vector<32xf32> to vector<1x32xf32>
    %156 = vector.broadcast %155 : vector<1x32xf32> to vector<8x32xf32>
    %157 = arith.addf %154, %156 : vector<8x32xf32>
    %cst_67 = arith.constant 5.000000e-01 : f32
    %158 = vector.broadcast %cst_67 : f32 to vector<8x32xf32>
    %159 = arith.mulf %157, %158 : vector<8x32xf32>
    %cst_68 = arith.constant 0.707106769 : f32
    %160 = vector.broadcast %cst_68 : f32 to vector<8x32xf32>
    %161 = arith.mulf %157, %160 : vector<8x32xf32>
    %162 = math.erf %161 : vector<8x32xf32>
    %cst_69 = arith.constant 1.000000e+00 : f32
    %163 = vector.broadcast %cst_69 : f32 to vector<8x32xf32>
    %164 = arith.addf %163, %162 : vector<8x32xf32>
    %165 = arith.mulf %159, %164 : vector<8x32xf32>
    %166 = arith.truncf %165 : vector<8x32xf32> to vector<8x32xbf16>
    %c5_70 = arith.constant 5 : index
    %c0_71 = arith.constant 0 : index
    %c0_72 = arith.constant 0 : index
    %167 = vector.load %arg2[%c5_70, %c0_71, %c0_72] : memref<6x32x32xbf16, #tpu.memory_space<vmem>>, vector<1x32x32xbf16>
    %168 = vector.shape_cast %167 : vector<1x32x32xbf16> to vector<32x32xbf16>
    %cst_73 = arith.constant dense<0.000000e+00> : vector<8x32xf32>
    %169 = tpu.matmul %166, %168, %cst_73 {dimension_numbers = #tpu.dot_dimension_numbers<[1], [0], [0], [1], [0, 0, 1, 1], [], []>} : vector<8x32xbf16>, vector<32x32xbf16>, vector<8x32xf32> -> vector<8x32xf32>
    %170 = vector.shape_cast %18 : vector<32xf32> to vector<1x32xf32>
    %171 = vector.broadcast %170 : vector<1x32xf32> to vector<8x32xf32>
    %172 = arith.addf %169, %171 : vector<8x32xf32>
    %173 = arith.addf %172, %150 : vector<8x32xf32>
    %cst_74 = arith.constant dense<0.000000e+00> : vector<8xf32>
    %174 = vector.multi_reduction <add>, %173, %cst_74 [1] : vector<8x32xf32> to vector<8xf32>
    %175 = vector.shape_cast %174 : vector<8xf32> to vector<8x1xf32>
    %cst_75 = arith.constant 3.200000e+01 : f32
    %176 = vector.broadcast %cst_75 : f32 to vector<8x1xf32>
    %177 = arith.divf %175, %176 : vector<8x1xf32>
    %178 = vector.broadcast %177 : vector<8x1xf32> to vector<8x32xf32>
    %179 = arith.subf %173, %178 : vector<8x32xf32>
    %180 = arith.mulf %179, %179 : vector<8x32xf32>
    %cst_76 = arith.constant dense<0.000000e+00> : vector<8xf32>
    %181 = vector.multi_reduction <add>, %180, %cst_76 [1] : vector<8x32xf32> to vector<8xf32>
    %182 = vector.shape_cast %181 : vector<8xf32> to vector<8x1xf32>
    %cst_77 = arith.constant 3.200000e+01 : f32
    %183 = vector.broadcast %cst_77 : f32 to vector<8x1xf32>
    %184 = arith.divf %182, %183 : vector<8x1xf32>
    %185 = vector.broadcast %177 : vector<8x1xf32> to vector<8x32xf32>
    %186 = arith.subf %173, %185 : vector<8x32xf32>
    %cst_78 = arith.constant 9.99999996E-13 : f32
    %187 = vector.broadcast %cst_78 : f32 to vector<8x1xf32>
    %188 = arith.addf %184, %187 : vector<8x1xf32>
    %189 = math.rsqrt %188 : vector<8x1xf32>
    %190 = vector.broadcast %189 : vector<8x1xf32> to vector<8x32xf32>
    %191 = arith.mulf %186, %190 : vector<8x32xf32>
    %192 = vector.shape_cast %20 : vector<32xf32> to vector<1x32xf32>
    %193 = vector.broadcast %192 : vector<1x32xf32> to vector<8x32xf32>
    %194 = arith.mulf %193, %191 : vector<8x32xf32>
    %195 = vector.shape_cast %22 : vector<32xf32> to vector<1x32xf32>
    %196 = vector.broadcast %195 : vector<1x32xf32> to vector<8x32xf32>
    %197 = arith.addf %194, %196 : vector<8x32xf32>
    %198 = vector.shape_cast %197 : vector<8x32xf32> to vector<1x8x32xf32>
    %c0_79 = arith.constant 0 : index
    %c0_80 = arith.constant 0 : index
    %c0_81 = arith.constant 0 : index
    %199 = vector.load %arg4[%c0_79, %c0_80, %c0_81] : memref<1x8x32xf32, #tpu.memory_space<vmem>>, vector<1x8x32xf32>
    tpu.vector_store %arg4[%c0_79, %c0_80, %c0_81], %198 {strides = array<i32>} : memref<1x8x32xf32, #tpu.memory_space<vmem>>, vector<1x8x32xf32>,
    return
  }
  func.func @transform_0(%arg0: i32) -> (i32, i32, i32) {
    %c0_i32 = arith.constant 0 : i32
    %c0_i32_0 = arith.constant 0 : i32
    %c0_i32_1 = arith.constant 0 : i32
    return %arg0, %c0_i32, %c0_i32_0 : i32, i32, i32
  }
  func.func @transform_1(%arg0: i32) -> (i32, i32, i32) {
    %c0_i32 = arith.constant 0 : i32
    %c0_i32_0 = arith.constant 0 : i32
    %c0_i32_1 = arith.constant 0 : i32
    %c0_i32_2 = arith.constant 0 : i32
    return %c0_i32, %c0_i32_0, %c0_i32_1 : i32, i32, i32
  }
  func.func @transform_2(%arg0: i32) -> (i32, i32) {
    %c0_i32 = arith.constant 0 : i32
    %c0_i32_0 = arith.constant 0 : i32
    %c0_i32_1 = arith.constant 0 : i32
    return %c0_i32, %c0_i32_0 : i32, i32
  }
  func.func @transform_3(%arg0: i32) -> (i32, i32, i32) {
    %c0_i32 = arith.constant 0 : i32
    %c0_i32_0 = arith.constant 0 : i32
    %c0_i32_1 = arith.constant 0 : i32
    return %arg0, %c0_i32, %c0_i32_0 : i32, i32, i32
  }
}

</mosaic_0001>

<llo_original>
// kernel: tpu_custom_call.1
$region0: #{tpu_custom_call.1}
  #allocation0 [shape = 'u32[]', space=smem, size = 0x4, offset = 0x4, fixed_abs, tag = 'smem constant byte address 0x4 - core index']
  #allocation1 [shape = 'u32[144,128]{1,0:T(1,128)}', space=vmem, size = 0x12000, scoped, tag = 'internal scratch']
  #allocation2 [shape = 'f32[1,8,32]{2,1,0:T(8,128)}', space=vmem, size = 0x1000, scoped, tag = 'scratch operand']
  %s0 = inlined_call_operand.hbm [shape: f32[2,8,32], index: 0, kind: input, shape index: {}]
  %s1 = inlined_call_operand.hbm [shape: bf16[6,32,32], index: 1, kind: input, shape index: {}]
  %s2 = inlined_call_operand.hbm [shape: f32[10,32], index: 2, kind: input, shape index: {}]
  %s3 = inlined_call_operand.hbm [shape: f32[2,8,32], index: 3, kind: output, shape index: {}]
  %s4 = sld [smem:[#allocation0]]
  $region57: #{tpu_custom_call.1} parent=0
    _
  %s6 = ssub.s32 1, %s4
  %s7 = scalar_select 0, %s6, %s4
  $region1: #{tpu_custom_call.1} parent=0
    #allocation3 [shape = 'u8[8192]{0}', space=vmem, size = 0x2000, scoped, tag = 'input window, operand 0']
    #allocation4 [shape = 's32[2]{0}', space=sflag, size = 0x8, scoped, tag = 'scoped memory for tpu_custom_call.1']
    #allocation5 [shape = 's32[2]{0}', space=sflag, size = 0x8, scoped, tag = 'scoped memory for tpu_custom_call.1']
    #allocation6 [shape = 'u8[49152]{0}', space=vmem, size = 0xc000, scoped, tag = 'input window, operand 1, single buffered']
    #allocation7 [shape = 's32[1]{0}', space=sflag, size = 0x4, scoped, tag = 'scoped memory for tpu_custom_call.1']
    #allocation8 [shape = 'u8[8192]{0}', space=vmem, size = 0x2000, scoped, tag = 'input window, operand 2, single buffered']
    #allocation9 [shape = 'u8[8192]{0}', space=vmem, size = 0x2000, scoped, tag = 'output window, operand 0']
    %8 = vsyncpa [#allocation4], 0
    %s9 = scalar_lea.sflag [#allocation4], 1
    %10 = vsyncpa %s9, 0
    %11 = vsyncpa [#allocation7], 0
    %12 = vsyncpa [#allocation5], 0
    %s13 = scalar_lea.sflag [#allocation5], 1
    %14 = vsyncpa %s13, 0
    loop: start=0, step=1, limit=4
    $region2: #{tpu_custom_call.1} parent=1 // loop_pre_header
      _
    $region3: #{tpu_custom_call.1} parent=1 // loop_header
      %s16 = sphi 0, %s20
      %p17 = scmp.ge.s32.totalorder %s16, 4
      %s26 = sphi 0, %s28
      %s29 = sphi 0, %s26
      %s30 = sphi 0, %s29
      %s46 = sphi 0, %s30
      %s50 = sphi 0, %s50
      %s52 = sphi 0, %s50
      %s53 = sphi 0, %s52
      %s67 = sphi 0, %s53
      %s71 = sphi 0, %s71
      %s73 = sphi 0, %s71
      %s74 = sphi 0, %s73
      %s88 = sphi 0, %s74
      %s94 = sphi 0, %s96
      %s97 = sphi 0, %s94
      %s98 = sphi 0, %s97
      %s114 = sphi 0, %s98
    $region4: #{tpu_custom_call.1} parent=1 // loop_header_branch
      %19 = sbr.rel (%p17) target = $region8
    $region5: #{tpu_custom_call.1} parent=1 // loop_body
      %s21 = ssub.s32 %s16, 1
      %s22 = ssub.s32 %s16, 2
      %s23 = sadd.s32 %s16, 1
      %s24 = ssub.s32 %s16, %s23
      %p25 = scmp.eq.s32.totalorder %s24, 0
      %s27 = sadd.s32 %s26, 1
      %s28 = scalar_select %p25, %s26, %s27
      %p31 = pneg %p25
      %p32 = scmp.eq.s32.totalorder %s16, 1
      %p33 = por %p31, %p32
      %p34 = scmp.ne.s32.totalorder %s26, %s29
      %p35 = scmp.eq.s32.totalorder %s16, 0
      %p36 = por %p34, %p35
      %p37 = scmp.ne.s32.totalorder %s26, %s29
      %p38 = scmp.eq.s32.totalorder %s21, 1
      %p39 = por %p37, %p38
      %p40 = scmp.ne.s32.totalorder %s29, %s30
      %p41 = scmp.eq.s32.totalorder %s21, 0
      %p42 = por %p40, %p41
      %p43 = scmp.ne.s32.totalorder %s29, %s30
      %p44 = scmp.eq.s32.totalorder %s22, 1
      %p45 = por %p43, %p44
      %p47 = scmp.ne.s32.totalorder %s30, %s46
      %p48 = scmp.eq.s32.totalorder %s22, 0
      %p49 = por %p47, %p48
      %s51 = sadd.s32 %s50, 1
      %p54 = scmp.eq.s32.totalorder %s16, 1
      %p55 = scmp.ne.s32.totalorder %s50, %s52
      %p56 = scmp.eq.s32.totalorder %s16, 0
      %p57 = por %p55, %p56
      %p58 = scmp.ne.s32.totalorder %s50, %s52
      %p59 = scmp.eq.s32.totalorder %s21, 1
      %p60 = por %p58, %p59
      %p61 = scmp.ne.s32.totalorder %s52, %s53
      %p62 = scmp.eq.s32.totalorder %s21, 0
      %p63 = por %p61, %p62
      %p64 = scmp.ne.s32.totalorder %s52, %s53
      %p65 = scmp.eq.s32.totalorder %s22, 1
      %p66 = por %p64, %p65
      %p68 = scmp.ne.s32.totalorder %s53, %s67
      %p69 = scmp.eq.s32.totalorder %s22, 0
      %p70 = por %p68, %p69
      %s72 = sadd.s32 %s71, 1
      %p75 = scmp.eq.s32.totalorder %s16, 1
      %p76 = scmp.ne.s32.totalorder %s71, %s73
      %p77 = scmp.eq.s32.totalorder %s16, 0
      %p78 = por %p76, %p77
      %p79 = scmp.ne.s32.totalorder %s71, %s73
      %p80 = scmp.eq.s32.totalorder %s21, 1
      %p81 = por %p79, %p80
      %p82 = scmp.ne.s32.totalorder %s73, %s74
      %p83 = scmp.eq.s32.totalorder %s21, 0
      %p84 = por %p82, %p83
      %p85 = scmp.ne.s32.totalorder %s73, %s74
      %p86 = scmp.eq.s32.totalorder %s22, 1
      %p87 = por %p85, %p86
      %p89 = scmp.ne.s32.totalorder %s74, %s88
      %p90 = scmp.eq.s32.totalorder %s22, 0
      %p91 = por %p89, %p90
      %s92 = ssub.s32 %s16, %s23
      %p93 = scmp.eq.s32.totalorder %s92, 0
      %s95 = sadd.s32 %s94, 1
      %s96 = scalar_select %p93, %s94, %s95
      %p99 = pneg %p93
      %p100 = scmp.eq.s32.totalorder %s16, 1
      %p101 = por %p99, %p100
      %p102 = scmp.ne.s32.totalorder %s94, %s97
      %p103 = scmp.eq.s32.totalorder %s16, 0
      %p104 = por %p102, %p103
      %p105 = scmp.ne.s32.totalorder %s94, %s97
      %p106 = scmp.eq.s32.totalorder %s21, 1
      %p107 = por %p105, %p106
      %p108 = scmp.ne.s32.totalorder %s97, %s98
      %p109 = scmp.eq.s32.totalorder %s21, 0
      %p110 = por %p108, %p109
      %p111 = scmp.ne.s32.totalorder %s97, %s98
      %p112 = scmp.eq.s32.totalorder %s22, 1
      %p113 = por %p111, %p112
      %p115 = scmp.ne.s32.totalorder %s98, %s114
      %p116 = scmp.eq.s32.totalorder %s22, 0
      %p117 = por %p115, %p116
      %p118 = scmp.le.s32.totalorder 1, %s16
      %p119 = scmp.lt.s32.totalorder %s16, 3
      %p120 = pnand %p118, %p119
      %p121 = pneg %p120
      // Predicated region
      $region9: #{tpu_custom_call.1} parent=5 // pred_check
        _
      $region10: #{tpu_custom_call.1} parent=5 // pred_check_branch
        %123 = sbr.rel (%p120) target = $region12
      $region11: #{tpu_custom_call.1} parent=5 // pred_region
        %s124 = ssub.s32 %s16, 1
        // Predicated region
        $region13: #{tpu_custom_call.1} parent=11 // pred_check
          %p125 = pneg %p63
        $region14: #{tpu_custom_call.1} parent=11 // pred_check_branch
          %127 = sbr.rel (%p125) target = $region16
        $region15: #{tpu_custom_call.1} parent=11 // pred_region
          %s129 = ssub.s32 1536, 1536
          %130 = vsyncadd [#allocation7], %s129
          %s131 = sshll.u32 [#allocation6], 4
          %s132 = int_to_ptr.vmem [resolvable:$true] %s131
          %137 = dma.hbm_to_vmem [thread:$0]  %s1, 1536, %s132, [#allocation7], 64, 64, 4
        $region16: #{tpu_custom_call.1} parent=11 // pred_fallthru
          _
        // Predicated region
        $region17: #{tpu_custom_call.1} parent=11 // pred_check
          %p138 = pneg %p84
        $region18: #{tpu_custom_call.1} parent=11 // pred_check_branch
          %140 = sbr.rel (%p138) target = $region20
        $region19: #{tpu_custom_call.1} parent=11 // pred_region
          %s142 = ssub.s32 256, 256
          %143 = vsyncadd [#allocation7], %s142
          %s144 = sshll.u32 [#allocation8], 4
          %s145 = int_to_ptr.vmem [resolvable:$true] %s144
          %150 = dma.hbm_to_vmem [thread:$0]  %s2, 256, %s145, [#allocation7], 128, 128, 8
        $region20: #{tpu_custom_call.1} parent=11 // pred_fallthru
          _
      $region12: #{tpu_custom_call.1} parent=5 // pred_fallthru
        _
      %p151 = scmp.lt.s32.totalorder %s16, 2
      // Predicated region
      $region21: #{tpu_custom_call.1} parent=5 // pred_check
        %p152 = pneg %p151
      $region22: #{tpu_custom_call.1} parent=5 // pred_check_branch
        %154 = sbr.rel (%p152) target = $region24
      $region23: #{tpu_custom_call.1} parent=5 // pred_region
        // Predicated region
        $region25: #{tpu_custom_call.1} parent=23 // pred_check
          %p155 = pneg %p36
        $region26: #{tpu_custom_call.1} parent=23 // pred_check_branch
          %157 = sbr.rel (%p155) target = $region28
        $region27: #{tpu_custom_call.1} parent=23 // pred_region
          %s158 = sand.u32 %s26, 1
          %s159 = scalar_lea.sflag [#allocation4], %s158
          %s160 = sand.u32 %s26, 1
          %s161 = smul.addr %s160, 8
          %s162 = scalar_lea.vmem [#allocation3], %s161
          %s164 = ssub.s32 128, 128
          %165 = vsyncadd %s159, %s164
          %s166 = smul.addr %s16, 128
          %s167 = scalar_lea.hbm %s0, %s166
          %s169 = sshll.u32 %s162, 4
          %s170 = int_to_ptr.vmem [resolvable:$true] %s169
          %172 = dma.hbm_to_vmem [thread:$0]  %s167, 128, %s170, %s159
        $region28: #{tpu_custom_call.1} parent=23 // pred_fallthru
          _
      $region24: #{tpu_custom_call.1} parent=5 // pred_fallthru
        _
      %p173 = scmp.le.s32.totalorder 1, %s16
      %p174 = scmp.lt.s32.totalorder %s16, 3
      %p175 = pnand %p173, %p174
      %p176 = pneg %p175
      // Predicated region
      $region29: #{tpu_custom_call.1} parent=5 // pred_check
        _
      $region30: #{tpu_custom_call.1} parent=5 // pred_check_branch
        %178 = sbr.rel (%p175) target = $region32
      $region31: #{tpu_custom_call.1} parent=5 // pred_region
        %s179 = ssub.s32 %s16, 1
        %s180 = sand.u32 %s29, 1
        %s181 = scalar_lea.sflag [#allocation4], %s180
        %s182 = sand.u32 %s29, 1
        %s183 = smul.addr %s182, 8
        %s184 = scalar_lea.vmem [#allocation3], %s183
        // Predicated region
        $region33: #{tpu_custom_call.1} parent=31 // pred_check
          %p185 = pneg %p42
        $region34: #{tpu_custom_call.1} parent=31 // pred_check_branch
          %187 = sbr.rel (%p185) target = $region36
        $region35: #{tpu_custom_call.1} parent=31 // pred_region
          %188 = dma.done %s181, 128
        $region36: #{tpu_custom_call.1} parent=31 // pred_fallthru
          _
        // Predicated region
        $region37: #{tpu_custom_call.1} parent=31 // pred_check
          %p189 = pneg %p63
        $region38: #{tpu_custom_call.1} parent=31 // pred_check_branch
          %191 = sbr.rel (%p189) target = $region40
        $region39: #{tpu_custom_call.1} parent=31 // pred_region
          %192 = dma.done [#allocation7], 1536
        $region40: #{tpu_custom_call.1} parent=31 // pred_fallthru
          _
        // Predicated region
        $region41: #{tpu_custom_call.1} parent=31 // pred_check
          %p193 = pneg %p84
        $region42: #{tpu_custom_call.1} parent=31 // pred_check_branch
          %195 = sbr.rel (%p193) target = $region44
        $region43: #{tpu_custom_call.1} parent=31 // pred_region
          %196 = dma.done [#allocation7], 256
        $region44: #{tpu_custom_call.1} parent=31 // pred_fallthru
          _
        %s197 = sand.u32 %s29, 1
        %s198 = scalar_lea.sflag [#allocation4], %s197
        %s199 = sand.u32 %s29, 1
        %s200 = smul.addr %s199, 8
        %s201 = scalar_lea.vmem [#allocation3], %s200
        %p202 = pneg %p42
        %p203 = pneg %p39
        %p204 = pneg %p63
        %p205 = pneg %p60
        %p206 = pneg %p84
        %p207 = pneg %p81
        %p208 = pneg %p110
        %p209 = pneg %p107
        %s210 = sand.u32 %s97, 1
        %s211 = scalar_lea.sflag [#allocation5], %s210
        %s212 = sand.u32 %s97, 1
        %s213 = smul.addr %s212, 8
        %s214 = scalar_lea.vmem [#allocation9], %s213
        %v216 = vld [vmem:[%s184] sm:$0xff]
        %v217 = vpack.c.bf16 %v216, %v216
        %v218 = vld [vmem:[#allocation8] sm:$0x1]
        %v219 = vld [vmem:[#allocation8 + $0x1] sm:$0x1]
        %v220 = vld [vmem:[#allocation8 + $0x2] sm:$0x1]
        %v221 = vld [vmem:[#allocation8 + $0x3] sm:$0x1]
        %v222 = vld [vmem:[#allocation8 + $0x4] sm:$0x1]
        %v223 = vld [vmem:[#allocation8 + $0x5] sm:$0x1]
        %v224 = vld [vmem:[#allocation8 + $0x6] sm:$0x1]
        %v225 = vld [vmem:[#allocation8 + $0x7] sm:$0x1]
        %v226 = vld [vmem:[#allocation8 + $0x8] sm:$0x1]
        %v227 = vld [vmem:[#allocation8 + $0x9] sm:$0x1]
        %v228 = vld [vmem:[#allocation6] sm:$0xf]
        %v229 = vld [vmem:[#allocation6 + $0x4] sm:$0xf]
        %v230 = vld [vmem:[#allocation6 + $0x8] sm:$0xf]
        %v231 = vld [vmem:[#allocation6 + $0xc] sm:$0xf]
        %v232 = vlaneseq
        %v233 = vshrl.u32 %v232, 7
        %v234 = vsub.s32 0, %v233
        %v235 = vrot.slane %v218, %v234
        %v240 = vunpack.c.l.b16 %v228
        %v241 = vunpack.c.l.b16 %v229
        %v242 = vunpack.c.l.b16 %v230
        %v243 = vunpack.c.l.b16 %v231
        %v244 = vpack.c.b16 %v241, %v240
        %v245 = vpack.c.b16 %v243, %v242
        %vm248 = vcmask 261120
        %v250 = vsel %vm248, %v217, 0
        %252 = vmatprep.subr.bf16.mxu0 0
        %253 = vmatpush1.bf16.msra.mxu0 0
        %254 = vmatprep.subr.bf16.mxu0 0
        %255 = vmatpush1.bf16.msra.mxu0 0
        %256 = vmatprep.subr.bf16.mxu0 0
        %257 = vmatpush1.bf16.msra.mxu0 0
        %258 = vmatprep.subr.bf16.mxu0 0
        %259 = vmatpush1.bf16.msra.mxu0 0
        %260 = vmatprep.subr.bf16.mxu0 0
        %261 = vmatpush1.bf16.msra.mxu0 0
        %262 = vmatprep.subr.bf16.mxu0 0
        %263 = vmatpush1.bf16.msra.mxu0 0
        %264 = vmatprep.subr.bf16.mxu0 0
        %265 = vmatpush1.bf16.msra.mxu0 %v245
        %266 = vmatprep.subr.bf16.mxu0 0
        %267 = vmatpush1.bf16.msra.mxu0 %v244
        %268 = vmatprep.subr.bf16.mxu0 0
        %269 = vmatpush2.bf16.msra.mxu0 0
        %270 = vmatprep.subr.bf16.mxu0 0
        %271 = vmatpush2.bf16.msra.mxu0 0
        %272 = vmatprep.subr.bf16.mxu0 0
        %273 = vmatpush2.bf16.msra.mxu0 0
        %274 = vmatprep.subr.bf16.mxu0 0
        %275 = vmatpush2.bf16.msra.mxu0 0
        %276 = vmatprep.subr.bf16.mxu0 0
        %277 = vmatpush2.bf16.msra.mxu0 0
        %278 = vmatprep.subr.bf16.mxu0 0
        %279 = vmatpush2.bf16.msra.mxu0 0
        %280 = vmatprep.subr.bf16.mxu0 0
        %281 = vmatpush2.bf16.msra.mxu0 0
        %282 = vmatprep.subr.bf16.mxu0 0
        %283 = vmatpush2.bf16.msra.mxu0 0
        %284 = vmatprep.mubr.bf16.mxu0 0
        %285 = vmatmul.mubr.bf16.gmra.mxu0 %v250
        %v286 = vpop.f32.mrf.mxu0
        %v287 = vadd.f32 %v235, %v286
        %v288 = vpop.f32.mrf.mxu0
        %v289 = vpop.f32.mrf.mxu0
        %v290 = vpop.f32.mrf.mxu0
        %291 = vdwg.mxu0
        %s292 = scalar_lea.vmem [#allocation6], 16
        %v293 = vld [vmem:[%s292] sm:$0xf]
        %v294 = vld [vmem:[%s292 + $0x4] sm:$0xf]
        %v295 = vld [vmem:[%s292 + $0x8] sm:$0xf]
        %v296 = vld [vmem:[%s292 + $0xc] sm:$0xf]
        %v297 = vlaneseq
        %v298 = vshrl.u32 %v297, 7
        %v299 = vsub.s32 0, %v298
        %v300 = vrot.slane %v219, %v299
        %v305 = vunpack.c.l.b16 %v293
        %v306 = vunpack.c.l.b16 %v294
        %v307 = vunpack.c.l.b16 %v295
        %v308 = vunpack.c.l.b16 %v296
        %v309 = vpack.c.b16 %v306, %v305
        %v310 = vpack.c.b16 %v308, %v307
        %313 = vmatprep.subr.bf16.mxu0 0
        %314 = vmatpush1.bf16.msra.mxu0 0
        %315 = vmatprep.subr.bf16.mxu0 0
        %316 = vmatpush1.bf16.msra.mxu0 0
        %317 = vmatprep.subr.bf16.mxu0 0
        %318 = vmatpush1.bf16.msra.mxu0 0
        %319 = vmatprep.subr.bf16.mxu0 0
        %320 = vmatpush1.bf16.msra.mxu0 0
        %321 = vmatprep.subr.bf16.mxu0 0
        %322 = vmatpush1.bf16.msra.mxu0 0
        %323 = vmatprep.subr.bf16.mxu0 0
        %324 = vmatpush1.bf16.msra.mxu0 0
        %325 = vmatprep.subr.bf16.mxu0 0
        %326 = vmatpush1.bf16.msra.mxu0 %v310
        %327 = vmatprep.subr.bf16.mxu0 0
        %328 = vmatpush1.bf16.msra.mxu0 %v309
        %329 = vmatprep.subr.bf16.mxu0 0
        %330 = vmatpush2.bf16.msra.mxu0 0
        %331 = vmatprep.subr.bf16.mxu0 0
        %332 = vmatpush2.bf16.msra.mxu0 0
        %333 = vmatprep.subr.bf16.mxu0 0
        %334 = vmatpush2.bf16.msra.mxu0 0
        %335 = vmatprep.subr.bf16.mxu0 0
        %336 = vmatpush2.bf16.msra.mxu0 0
        %337 = vmatprep.subr.bf16.mxu0 0
        %338 = vmatpush2.bf16.msra.mxu0 0
        %339 = vmatprep.subr.bf16.mxu0 0
        %340 = vmatpush2.bf16.msra.mxu0 0
        %341 = vmatprep.subr.bf16.mxu0 0
        %342 = vmatpush2.bf16.msra.mxu0 0
        %343 = vmatprep.subr.bf16.mxu0 0
        %344 = vmatpush2.bf16.msra.mxu0 0
        %345 = vmatprep.mubr.bf16.mxu0 0
        %346 = vmatmul.mubr.bf16.gmra.mxu0 %v250
        %v347 = vpop.f32.mrf.mxu0
        %v348 = vadd.f32 %v300, %v347
        %v349 = vpop.f32.mrf.mxu0
        %v350 = vpop.f32.mrf.mxu0
        %v351 = vpop.f32.mrf.mxu0
        %352 = vdwg.mxu0
        %s353 = scalar_lea.vmem [#allocation6], 32
        %v354 = vld [vmem:[%s353] sm:$0xf]
        %v355 = vld [vmem:[%s353 + $0x4] sm:$0xf]
        %v356 = vld [vmem:[%s353 + $0x8] sm:$0xf]
        %v357 = vld [vmem:[%s353 + $0xc] sm:$0xf]
        %v358 = vlaneseq
        %v359 = vshrl.u32 %v358, 7
        %v360 = vsub.s32 0, %v359
        %v361 = vrot.slane %v220, %v360
        %v366 = vunpack.c.l.b16 %v354
        %v367 = vunpack.c.l.b16 %v355
        %v368 = vunpack.c.l.b16 %v356
        %v369 = vunpack.c.l.b16 %v357
        %v370 = vpack.c.b16 %v367, %v366
        %v371 = vpack.c.b16 %v369, %v368
        %374 = vmatprep.subr.bf16.mxu0 0
        %375 = vmatpush1.bf16.msra.mxu0 0
        %376 = vmatprep.subr.bf16.mxu0 0
        %377 = vmatpush1.bf16.msra.mxu0 0
        %378 = vmatprep.subr.bf16.mxu0 0
        %379 = vmatpush1.bf16.msra.mxu0 0
        %380 = vmatprep.subr.bf16.mxu0 0
        %381 = vmatpush1.bf16.msra.mxu0 0
        %382 = vmatprep.subr.bf16.mxu0 0
        %383 = vmatpush1.bf16.msra.mxu0 0
        %384 = vmatprep.subr.bf16.mxu0 0
        %385 = vmatpush1.bf16.msra.mxu0 0
        %386 = vmatprep.subr.bf16.mxu0 0
        %387 = vmatpush1.bf16.msra.mxu0 %v371
        %388 = vmatprep.subr.bf16.mxu0 0
        %389 = vmatpush1.bf16.msra.mxu0 %v370
        %390 = vmatprep.subr.bf16.mxu0 0
        %391 = vmatpush2.bf16.msra.mxu0 0
        %392 = vmatprep.subr.bf16.mxu0 0
        %393 = vmatpush2.bf16.msra.mxu0 0
        %394 = vmatprep.subr.bf16.mxu0 0
        %395 = vmatpush2.bf16.msra.mxu0 0
        %396 = vmatprep.subr.bf16.mxu0 0
        %397 = vmatpush2.bf16.msra.mxu0 0
        %398 = vmatprep.subr.bf16.mxu0 0
        %399 = vmatpush2.bf16.msra.mxu0 0
        %400 = vmatprep.subr.bf16.mxu0 0
        %401 = vmatpush2.bf16.msra.mxu0 0
        %402 = vmatprep.subr.bf16.mxu0 0
        %403 = vmatpush2.bf16.msra.mxu0 0
        %404 = vmatprep.subr.bf16.mxu0 0
        %405 = vmatpush2.bf16.msra.mxu0 0
        %406 = vmatprep.mubr.bf16.mxu0 0
        %407 = vmatmul.mubr.bf16.gmra.mxu0 %v250
        %v408 = vpop.f32.mrf.mxu0
        %v409 = vadd.f32 %v361, %v408
        %v410 = vpop.f32.mrf.mxu0
        %v411 = vpop.f32.mrf.mxu0
        %v412 = vpop.f32.mrf.mxu0
        %413 = vdwg.mxu0
        %v414 = vmul.f32 %v287, 0.35355338
        %v415 = vpack.c.bf16 %v414, %v414
        %v416 = vpack.c.bf16 %v348, %v348
        %v417 = vpack.c.bf16 %v409, %v409
        %vm418 = vcmask 64512
        %v420 = vsel %vm418, %v415, 0
        %v423 = vsel %vm418, %v416, 0
        %425 = vmatprep.subr.bf16.mxu0 0
        %426 = vmatpush1.bf16.xpose.msra.mxu0 0
        %427 = vmatprep.subr.bf16.mxu0 0
        %428 = vmatpush1.bf16.xpose.msra.mxu0 0
        %429 = vmatprep.subr.bf16.mxu0 0
        %430 = vmatpush1.bf16.xpose.msra.mxu0 0
        %431 = vmatprep.subr.bf16.mxu0 0
        %432 = vmatpush1.bf16.xpose.msra.mxu0 0
        %433 = vmatprep.subr.bf16.mxu0 0
        %434 = vmatpush1.bf16.xpose.msra.mxu0 0
        %435 = vmatprep.subr.bf16.mxu0 0
        %436 = vmatpush1.bf16.xpose.msra.mxu0 0
        %437 = vmatprep.subr.bf16.mxu0 0
        %438 = vmatpush1.bf16.xpose.msra.mxu0 0
        %439 = vmatprep.subr.bf16.mxu0 0
        %440 = vmatpush1.bf16.xpose.msra.mxu0 %v423
        %441 = vmatprep.subr.bf16.mxu0 0
        %442 = vmatpush2.bf16.xpose.msra.mxu0 0
        %443 = vmatprep.subr.bf16.mxu0 0
        %444 = vmatpush2.bf16.xpose.msra.mxu0 0
        %445 = vmatprep.subr.bf16.mxu0 0
        %446 = vmatpush2.bf16.xpose.msra.mxu0 0
        %447 = vmatprep.subr.bf16.mxu0 0
        %448 = vmatpush2.bf16.xpose.msra.mxu0 0
        %449 = vmatprep.subr.bf16.mxu0 0
        %450 = vmatpush2.bf16.xpose.msra.mxu0 0
        %451 = vmatprep.subr.bf16.mxu0 0
        %452 = vmatpush2.bf16.xpose.msra.mxu0 0
        %453 = vmatprep.subr.bf16.mxu0 0
        %454 = vmatpush2.bf16.xpose.msra.mxu0 0
        %455 = vmatprep.subr.bf16.mxu0 0
        %456 = vmatpush2.bf16.xpose.msra.mxu0 0
        %457 = vmatprep.mubr.bf16.mxu0 0
        %458 = vmatmul.mubr.bf16.gmra.mxu0 %v420
        %v459 = vpop.f32.mrf.mxu0
        %v460 = vadd.f32 0.0, %v459
        %v461 = vpop.f32.mrf.mxu0
        %v462 = vpop.f32.mrf.mxu0
        %v463 = vpop.f32.mrf.mxu0
        %464 = vdwg.mxu0
        %v465 = vsel %vm418, %v460, -inf
        %466 = vmax.xlane.f32.xlu0 %v465
        %v467 = vpop.xlane.xlu0 %466
        %v468 = vsub.f32 %v460, %v467
        %v469 = vmul.f32 %v468, 1.442695
        %v470 = vpow.pop %v469
        %v471 = vsel %vm418, %v470, 0.0
        %472 = vadd.xlane.f32.xlu0 %v471
        %v473 = vpop.xlane.xlu0 %472
        %v474 = vrcp.pop %v473
        %v475 = vmul.f32 %v470, %v474
        %v476 = vpack.c.bf16 %v475, %v475
        %v478 = vsel %vm418, %v476, 0
        %vm480 = vcmask 1043456
        %v482 = vsel %vm480, %v417, 0
        %484 = vmatprep.subr.bf16.mxu0 0
        %485 = vmatpush1.bf16.msra.mxu0 0
        %486 = vmatprep.subr.bf16.mxu0 0
        %487 = vmatpush1.bf16.msra.mxu0 0
        %488 = vmatprep.subr.bf16.mxu0 0
        %489 = vmatpush1.bf16.msra.mxu0 0
        %490 = vmatprep.subr.bf16.mxu0 0
        %491 = vmatpush1.bf16.msra.mxu0 0
        %492 = vmatprep.subr.bf16.mxu0 0
        %493 = vmatpush1.bf16.msra.mxu0 0
        %494 = vmatprep.subr.bf16.mxu0 0
        %495 = vmatpush1.bf16.msra.mxu0 0
        %496 = vmatprep.subr.bf16.mxu0 0
        %497 = vmatpush1.bf16.msra.mxu0 0
        %498 = vmatprep.subr.bf16.mxu0 0
        %499 = vmatpush1.bf16.msra.mxu0 %v482
        %500 = vmatprep.subr.bf16.mxu0 0
        %501 = vmatpush2.bf16.msra.mxu0 0
        %502 = vmatprep.subr.bf16.mxu0 0
        %503 = vmatpush2.bf16.msra.mxu0 0
        %504 = vmatprep.subr.bf16.mxu0 0
        %505 = vmatpush2.bf16.msra.mxu0 0
        %506 = vmatprep.subr.bf16.mxu0 0
        %507 = vmatpush2.bf16.msra.mxu0 0
        %508 = vmatprep.subr.bf16.mxu0 0
        %509 = vmatpush2.bf16.msra.mxu0 0
        %510 = vmatprep.subr.bf16.mxu0 0
        %511 = vmatpush2.bf16.msra.mxu0 0
        %512 = vmatprep.subr.bf16.mxu0 0
        %513 = vmatpush2.bf16.msra.mxu0 0
        %514 = vmatprep.subr.bf16.mxu0 0
        %515 = vmatpush2.bf16.msra.mxu0 0
        %516 = vmatprep.mubr.bf16.mxu0 0
        %517 = vmatmul.mubr.bf16.gmra.mxu0 %v478
        %v518 = vpop.f32.mrf.mxu0
        %v519 = vadd.f32 0.0, %v518
        %v520 = vpop.f32.mrf.mxu0
        %v521 = vpop.f32.mrf.mxu0
        %v522 = vpop.f32.mrf.mxu0
        %523 = vdwg.mxu0
        %524 = vst.msk [vmem:[#allocation2] sm:$0xff] %vm418, %v519
        %526 = vrot.lane.b32.xlu0 %v415, 120
        %v527 = vpop.permute.xlu0 %526
        %529 = vrot.lane.b32.xlu0 %v416, 120
        %v530 = vpop.permute.xlu0 %529
        %v532 = vsel %vm418, %v527, 0
        %v535 = vsel %vm418, %v530, 0
        %537 = vmatprep.subr.bf16.mxu0 0
        %538 = vmatpush1.bf16.xpose.msra.mxu0 0
        %539 = vmatprep.subr.bf16.mxu0 0
        %540 = vmatpush1.bf16.xpose.msra.mxu0 0
        %541 = vmatprep.subr.bf16.mxu0 0
        %542 = vmatpush1.bf16.xpose.msra.mxu0 0
        %543 = vmatprep.subr.bf16.mxu0 0
        %544 = vmatpush1.bf16.xpose.msra.mxu0 0
        %545 = vmatprep.subr.bf16.mxu0 0
        %546 = vmatpush1.bf16.xpose.msra.mxu0 0
        %547 = vmatprep.subr.bf16.mxu0 0
        %548 = vmatpush1.bf16.xpose.msra.mxu0 0
        %549 = vmatprep.subr.bf16.mxu0 0
        %550 = vmatpush1.bf16.xpose.msra.mxu0 0
        %551 = vmatprep.subr.bf16.mxu0 0
        %552 = vmatpush1.bf16.xpose.msra.mxu0 %v535
        %553 = vmatprep.subr.bf16.mxu0 0
        %554 = vmatpush2.bf16.xpose.msra.mxu0 0
        %555 = vmatprep.subr.bf16.mxu0 0
        %556 = vmatpush2.bf16.xpose.msra.mxu0 0
        %557 = vmatprep.subr.bf16.mxu0 0
        %558 = vmatpush2.bf16.xpose.msra.mxu0 0
        %559 = vmatprep.subr.bf16.mxu0 0
        %560 = vmatpush2.bf16.xpose.msra.mxu0 0
        %561 = vmatprep.subr.bf16.mxu0 0
        %562 = vmatpush2.bf16.xpose.msra.mxu0 0
        %563 = vmatprep.subr.bf16.mxu0 0
        %564 = vmatpush2.bf16.xpose.msra.mxu0 0
        %565 = vmatprep.subr.bf16.mxu0 0
        %566 = vmatpush2.bf16.xpose.msra.mxu0 0
        %567 = vmatprep.subr.bf16.mxu0 0
        %568 = vmatpush2.bf16.xpose.msra.mxu0 0
        %569 = vmatprep.mubr.bf16.mxu0 0
        %570 = vmatmul.mubr.bf16.gmra.mxu0 %v532
        %v571 = vpop.f32.mrf.mxu0
        %v572 = vadd.f32 0.0, %v571
        %v573 = vpop.f32.mrf.mxu0
        %v574 = vpop.f32.mrf.mxu0
        %v575 = vpop.f32.mrf.mxu0
        %576 = vdwg.mxu0
        %v577 = vsel %vm418, %v572, -inf
        %578 = vmax.xlane.f32.xlu0 %v577
        %v579 = vpop.xlane.xlu0 %578
        %v580 = vsub.f32 %v572, %v579
        %v581 = vmul.f32 %v580, 1.442695
        %v582 = vpow.pop %v581
        %v583 = vsel %vm418, %v582, 0.0
        %584 = vadd.xlane.f32.xlu0 %v583
        %v585 = vpop.xlane.xlu0 %584
        %v586 = vrcp.pop %v585
        %v587 = vmul.f32 %v582, %v586
        %v588 = vpack.c.bf16 %v587, %v587
        %590 = vrot.lane.b32.xlu0 %v417, 120
        %v591 = vpop.permute.xlu0 %590
        %v593 = vsel %vm418, %v588, 0
        %v596 = vsel %vm480, %v591, 0
        %598 = vmatprep.subr.bf16.mxu0 0
        %599 = vmatpush1.bf16.msra.mxu0 0
        %600 = vmatprep.subr.bf16.mxu0 0
        %601 = vmatpush1.bf16.msra.mxu0 0
        %602 = vmatprep.subr.bf16.mxu0 0
        %603 = vmatpush1.bf16.msra.mxu0 0
        %604 = vmatprep.subr.bf16.mxu0 0
        %605 = vmatpush1.bf16.msra.mxu0 0
        %606 = vmatprep.subr.bf16.mxu0 0
        %607 = vmatpush1.bf16.msra.mxu0 0
        %608 = vmatprep.subr.bf16.mxu0 0
        %609 = vmatpush1.bf16.msra.mxu0 0
        %610 = vmatprep.subr.bf16.mxu0 0
        %611 = vmatpush1.bf16.msra.mxu0 0
        %612 = vmatprep.subr.bf16.mxu0 0
        %613 = vmatpush1.bf16.msra.mxu0 %v596
        %614 = vmatprep.subr.bf16.mxu0 0
        %615 = vmatpush2.bf16.msra.mxu0 0
        %616 = vmatprep.subr.bf16.mxu0 0
        %617 = vmatpush2.bf16.msra.mxu0 0
        %618 = vmatprep.subr.bf16.mxu0 0
        %619 = vmatpush2.bf16.msra.mxu0 0
        %620 = vmatprep.subr.bf16.mxu0 0
        %621 = vmatpush2.bf16.msra.mxu0 0
        %622 = vmatprep.subr.bf16.mxu0 0
        %623 = vmatpush2.bf16.msra.mxu0 0
        %624 = vmatprep.subr.bf16.mxu0 0
        %625 = vmatpush2.bf16.msra.mxu0 0
        %626 = vmatprep.subr.bf16.mxu0 0
        %627 = vmatpush2.bf16.msra.mxu0 0
        %628 = vmatprep.subr.bf16.mxu0 0
        %629 = vmatpush2.bf16.msra.mxu0 0
        %630 = vmatprep.mubr.bf16.mxu0 0
        %631 = vmatmul.mubr.bf16.gmra.mxu0 %v593
        %v632 = vpop.f32.mrf.mxu0
        %v633 = vadd.f32 0.0, %v632
        %v634 = vpop.f32.mrf.mxu0
        %v635 = vpop.f32.mrf.mxu0
        %v636 = vpop.f32.mrf.mxu0
        %637 = vdwg.mxu0
        %639 = vrot.lane.b32.xlu0 %v633, 8
        %v640 = vpop.permute.xlu0 %639
        %vm642 = vcmask 130112
        %643 = vst.msk [vmem:[#allocation2] sm:$0xff] %vm642, %v640
        %644 = vrot.lane.b32.xlu0 %v415, 112
        %v645 = vpop.permute.xlu0 %644
        %646 = vrot.lane.b32.xlu0 %v416, 112
        %v647 = vpop.permute.xlu0 %646
        %v649 = vsel %vm418, %v645, 0
        %v652 = vsel %vm418, %v647, 0
        %654 = vmatprep.subr.bf16.mxu0 0
        %655 = vmatpush1.bf16.xpose.msra.mxu0 0
        %656 = vmatprep.subr.bf16.mxu0 0
        %657 = vmatpush1.bf16.xpose.msra.mxu0 0
        %658 = vmatprep.subr.bf16.mxu0 0
        %659 = vmatpush1.bf16.xpose.msra.mxu0 0
        %660 = vmatprep.subr.bf16.mxu0 0
        %661 = vmatpush1.bf16.xpose.msra.mxu0 0
        %662 = vmatprep.subr.bf16.mxu0 0
        %663 = vmatpush1.bf16.xpose.msra.mxu0 0
        %664 = vmatprep.subr.bf16.mxu0 0
        %665 = vmatpush1.bf16.xpose.msra.mxu0 0
        %666 = vmatprep.subr.bf16.mxu0 0
        %667 = vmatpush1.bf16.xpose.msra.mxu0 0
        %668 = vmatprep.subr.bf16.mxu0 0
        %669 = vmatpush1.bf16.xpose.msra.mxu0 %v652
        %670 = vmatprep.subr.bf16.mxu0 0
        %671 = vmatpush2.bf16.xpose.msra.mxu0 0
        %672 = vmatprep.subr.bf16.mxu0 0
        %673 = vmatpush2.bf16.xpose.msra.mxu0 0
        %674 = vmatprep.subr.bf16.mxu0 0
        %675 = vmatpush2.bf16.xpose.msra.mxu0 0
        %676 = vmatprep.subr.bf16.mxu0 0
        %677 = vmatpush2.bf16.xpose.msra.mxu0 0
        %678 = vmatprep.subr.bf16.mxu0 0
        %679 = vmatpush2.bf16.xpose.msra.mxu0 0
        %680 = vmatprep.subr.bf16.mxu0 0
        %681 = vmatpush2.bf16.xpose.msra.mxu0 0
        %682 = vmatprep.subr.bf16.mxu0 0
        %683 = vmatpush2.bf16.xpose.msra.mxu0 0
        %684 = vmatprep.subr.bf16.mxu0 0
        %685 = vmatpush2.bf16.xpose.msra.mxu0 0
        %686 = vmatprep.mubr.bf16.mxu0 0
        %687 = vmatmul.mubr.bf16.gmra.mxu0 %v649
        %v688 = vpop.f32.mrf.mxu0
        %v689 = vadd.f32 0.0, %v688
        %v690 = vpop.f32.mrf.mxu0
        %v691 = vpop.f32.mrf.mxu0
        %v692 = vpop.f32.mrf.mxu0
        %693 = vdwg.mxu0
        %v694 = vsel %vm418, %v689, -inf
        %695 = vmax.xlane.f32.xlu0 %v694
        %v696 = vpop.xlane.xlu0 %695
        %v697 = vsub.f32 %v689, %v696
        %v698 = vmul.f32 %v697, 1.442695
        %v699 = vpow.pop %v698
        %v700 = vsel %vm418, %v699, 0.0
        %701 = vadd.xlane.f32.xlu0 %v700
        %v702 = vpop.xlane.xlu0 %701
        %v703 = vrcp.pop %v702
        %v704 = vmul.f32 %v699, %v703
        %v705 = vpack.c.bf16 %v704, %v704
        %706 = vrot.lane.b32.xlu0 %v417, 112
        %v707 = vpop.permute.xlu0 %706
        %v709 = vsel %vm418, %v705, 0
        %v712 = vsel %vm480, %v707, 0
        %714 = vmatprep.subr.bf16.mxu0 0
        %715 = vmatpush1.bf16.msra.mxu0 0
        %716 = vmatprep.subr.bf16.mxu0 0
        %717 = vmatpush1.bf16.msra.mxu0 0
        %718 = vmatprep.subr.bf16.mxu0 0
        %719 = vmatpush1.bf16.msra.mxu0 0
        %720 = vmatprep.subr.bf16.mxu0 0
        %721 = vmatpush1.bf16.msra.mxu0 0
        %722 = vmatprep.subr.bf16.mxu0 0
        %723 = vmatpush1.bf16.msra.mxu0 0
        %724 = vmatprep.subr.bf16.mxu0 0
        %725 = vmatpush1.bf16.msra.mxu0 0
        %726 = vmatprep.subr.bf16.mxu0 0
        %727 = vmatpush1.bf16.msra.mxu0 0
        %728 = vmatprep.subr.bf16.mxu0 0
        %729 = vmatpush1.bf16.msra.mxu0 %v712
        %730 = vmatprep.subr.bf16.mxu0 0
        %731 = vmatpush2.bf16.msra.mxu0 0
        %732 = vmatprep.subr.bf16.mxu0 0
        %733 = vmatpush2.bf16.msra.mxu0 0
        %734 = vmatprep.subr.bf16.mxu0 0
        %735 = vmatpush2.bf16.msra.mxu0 0
        %736 = vmatprep.subr.bf16.mxu0 0
        %737 = vmatpush2.bf16.msra.mxu0 0
        %738 = vmatprep.subr.bf16.mxu0 0
        %739 = vmatpush2.bf16.msra.mxu0 0
        %740 = vmatprep.subr.bf16.mxu0 0
        %741 = vmatpush2.bf16.msra.mxu0 0
        %742 = vmatprep.subr.bf16.mxu0 0
        %743 = vmatpush2.bf16.msra.mxu0 0
        %744 = vmatprep.subr.bf16.mxu0 0
        %745 = vmatpush2.bf16.msra.mxu0 0
        %746 = vmatprep.mubr.bf16.mxu0 0
        %747 = vmatmul.mubr.bf16.gmra.mxu0 %v709
        %v748 = vpop.f32.mrf.mxu0
        %v749 = vadd.f32 0.0, %v748
        %v750 = vpop.f32.mrf.mxu0
        %v751 = vpop.f32.mrf.mxu0
        %v752 = vpop.f32.mrf.mxu0
        %753 = vdwg.mxu0
        %755 = vrot.lane.b32.xlu0 %v749, 16
        %v756 = vpop.permute.xlu0 %755
        %vm758 = vcmask 195712
        %759 = vst.msk [vmem:[#allocation2] sm:$0xff] %vm758, %v756
        %760 = vrot.lane.b32.xlu0 %v415, 104
        %v761 = vpop.permute.xlu0 %760
        %762 = vrot.lane.b32.xlu0 %v416, 104
        %v763 = vpop.permute.xlu0 %762
        %v765 = vsel %vm418, %v761, 0
        %v768 = vsel %vm418, %v763, 0
        %770 = vmatprep.subr.bf16.mxu0 0
        %771 = vmatpush1.bf16.xpose.msra.mxu0 0
        %772 = vmatprep.subr.bf16.mxu0 0
        %773 = vmatpush1.bf16.xpose.msra.mxu0 0
        %774 = vmatprep.subr.bf16.mxu0 0
        %775 = vmatpush1.bf16.xpose.msra.mxu0 0
        %776 = vmatprep.subr.bf16.mxu0 0
        %777 = vmatpush1.bf16.xpose.msra.mxu0 0
        %778 = vmatprep.subr.bf16.mxu0 0
        %779 = vmatpush1.bf16.xpose.msra.mxu0 0
        %780 = vmatprep.subr.bf16.mxu0 0
        %781 = vmatpush1.bf16.xpose.msra.mxu0 0
        %782 = vmatprep.subr.bf16.mxu0 0
        %783 = vmatpush1.bf16.xpose.msra.mxu0 0
        %784 = vmatprep.subr.bf16.mxu0 0
        %785 = vmatpush1.bf16.xpose.msra.mxu0 %v768
        %786 = vmatprep.subr.bf16.mxu0 0
        %787 = vmatpush2.bf16.xpose.msra.mxu0 0
        %788 = vmatprep.subr.bf16.mxu0 0
        %789 = vmatpush2.bf16.xpose.msra.mxu0 0
        %790 = vmatprep.subr.bf16.mxu0 0
        %791 = vmatpush2.bf16.xpose.msra.mxu0 0
        %792 = vmatprep.subr.bf16.mxu0 0
        %793 = vmatpush2.bf16.xpose.msra.mxu0 0
        %794 = vmatprep.subr.bf16.mxu0 0
        %795 = vmatpush2.bf16.xpose.msra.mxu0 0
        %796 = vmatprep.subr.bf16.mxu0 0
        %797 = vmatpush2.bf16.xpose.msra.mxu0 0
        %798 = vmatprep.subr.bf16.mxu0 0
        %799 = vmatpush2.bf16.xpose.msra.mxu0 0
        %800 = vmatprep.subr.bf16.mxu0 0
        %801 = vmatpush2.bf16.xpose.msra.mxu0 0
        %802 = vmatprep.mubr.bf16.mxu0 0
        %803 = vmatmul.mubr.bf16.gmra.mxu0 %v765
        %v804 = vpop.f32.mrf.mxu0
        %v805 = vadd.f32 0.0, %v804
        %v806 = vpop.f32.mrf.mxu0
        %v807 = vpop.f32.mrf.mxu0
        %v808 = vpop.f32.mrf.mxu0
        %809 = vdwg.mxu0
        %v810 = vsel %vm418, %v805, -inf
        %811 = vmax.xlane.f32.xlu0 %v810
        %v812 = vpop.xlane.xlu0 %811
        %v813 = vsub.f32 %v805, %v812
        %v814 = vmul.f32 %v813, 1.442695
        %v815 = vpow.pop %v814
        %v816 = vsel %vm418, %v815, 0.0
        %817 = vadd.xlane.f32.xlu0 %v816
        %v818 = vpop.xlane.xlu0 %817
        %v819 = vrcp.pop %v818
        %v820 = vmul.f32 %v815, %v819
        %v821 = vpack.c.bf16 %v820, %v820
        %822 = vrot.lane.b32.xlu0 %v417, 104
        %v823 = vpop.permute.xlu0 %822
        %v825 = vsel %vm418, %v821, 0
        %v828 = vsel %vm480, %v823, 0
        %830 = vmatprep.subr.bf16.mxu0 0
        %831 = vmatpush1.bf16.msra.mxu0 0
        %832 = vmatprep.subr.bf16.mxu0 0
        %833 = vmatpush1.bf16.msra.mxu0 0
        %834 = vmatprep.subr.bf16.mxu0 0
        %835 = vmatpush1.bf16.msra.mxu0 0
        %836 = vmatprep.subr.bf16.mxu0 0
        %837 = vmatpush1.bf16.msra.mxu0 0
        %838 = vmatprep.subr.bf16.mxu0 0
        %839 = vmatpush1.bf16.msra.mxu0 0
        %840 = vmatprep.subr.bf16.mxu0 0
        %841 = vmatpush1.bf16.msra.mxu0 0
        %842 = vmatprep.subr.bf16.mxu0 0
        %843 = vmatpush1.bf16.msra.mxu0 0
        %844 = vmatprep.subr.bf16.mxu0 0
        %845 = vmatpush1.bf16.msra.mxu0 %v828
        %846 = vmatprep.subr.bf16.mxu0 0
        %847 = vmatpush2.bf16.msra.mxu0 0
        %848 = vmatprep.subr.bf16.mxu0 0
        %849 = vmatpush2.bf16.msra.mxu0 0
        %850 = vmatprep.subr.bf16.mxu0 0
        %851 = vmatpush2.bf16.msra.mxu0 0
        %852 = vmatprep.subr.bf16.mxu0 0
        %853 = vmatpush2.bf16.msra.mxu0 0
        %854 = vmatprep.subr.bf16.mxu0 0
        %855 = vmatpush2.bf16.msra.mxu0 0
        %856 = vmatprep.subr.bf16.mxu0 0
        %857 = vmatpush2.bf16.msra.mxu0 0
        %858 = vmatprep.subr.bf16.mxu0 0
        %859 = vmatpush2.bf16.msra.mxu0 0
        %860 = vmatprep.subr.bf16.mxu0 0
        %861 = vmatpush2.bf16.msra.mxu0 0
        %862 = vmatprep.mubr.bf16.mxu0 0
        %863 = vmatmul.mubr.bf16.gmra.mxu0 %v825
        %v864 = vpop.f32.mrf.mxu0
        %v865 = vadd.f32 0.0, %v864
        %v866 = vpop.f32.mrf.mxu0
        %v867 = vpop.f32.mrf.mxu0
        %v868 = vpop.f32.mrf.mxu0
        %869 = vdwg.mxu0
        %871 = vrot.lane.b32.xlu0 %v865, 24
        %v872 = vpop.permute.xlu0 %871
        %vm874 = vcmask 261312
        %875 = vst.msk [vmem:[#allocation2] sm:$0xff] %vm874, %v872
        %v876 = vld [vmem:[#allocation2] sm:$0xff]
        %v877 = vpack.c.bf16 %v876, %v876
        %s878 = scalar_lea.vmem [#allocation6], 48
        %v879 = vld [vmem:[%s878] sm:$0xf]
        %v880 = vld [vmem:[%s878 + $0x4] sm:$0xf]
        %v881 = vld [vmem:[%s878 + $0x8] sm:$0xf]
        %v882 = vld [vmem:[%s878 + $0xc] sm:$0xf]
        %v883 = vlaneseq
        %v884 = vshrl.u32 %v883, 7
        %v885 = vsub.s32 0, %v884
        %v886 = vrot.slane %v221, %v885
        %v891 = vunpack.c.l.b16 %v879
        %v892 = vunpack.c.l.b16 %v880
        %v893 = vunpack.c.l.b16 %v881
        %v894 = vunpack.c.l.b16 %v882
        %v895 = vpack.c.b16 %v892, %v891
        %v896 = vpack.c.b16 %v894, %v893
        %v900 = vsel %vm248, %v877, 0
        %902 = vmatprep.subr.bf16.mxu0 0
        %903 = vmatpush1.bf16.msra.mxu0 0
        %904 = vmatprep.subr.bf16.mxu0 0
        %905 = vmatpush1.bf16.msra.mxu0 0
        %906 = vmatprep.subr.bf16.mxu0 0
        %907 = vmatpush1.bf16.msra.mxu0 0
        %908 = vmatprep.subr.bf16.mxu0 0
        %909 = vmatpush1.bf16.msra.mxu0 0
        %910 = vmatprep.subr.bf16.mxu0 0
        %911 = vmatpush1.bf16.msra.mxu0 0
        %912 = vmatprep.subr.bf16.mxu0 0
        %913 = vmatpush1.bf16.msra.mxu0 0
        %914 = vmatprep.subr.bf16.mxu0 0
        %915 = vmatpush1.bf16.msra.mxu0 %v896
        %916 = vmatprep.subr.bf16.mxu0 0
        %917 = vmatpush1.bf16.msra.mxu0 %v895
        %918 = vmatprep.subr.bf16.mxu0 0
        %919 = vmatpush2.bf16.msra.mxu0 0
        %920 = vmatprep.subr.bf16.mxu0 0
        %921 = vmatpush2.bf16.msra.mxu0 0
        %922 = vmatprep.subr.bf16.mxu0 0
        %923 = vmatpush2.bf16.msra.mxu0 0
        %924 = vmatprep.subr.bf16.mxu0 0
        %925 = vmatpush2.bf16.msra.mxu0 0
        %926 = vmatprep.subr.bf16.mxu0 0
        %927 = vmatpush2.bf16.msra.mxu0 0
        %928 = vmatprep.subr.bf16.mxu0 0
        %929 = vmatpush2.bf16.msra.mxu0 0
        %930 = vmatprep.subr.bf16.mxu0 0
        %931 = vmatpush2.bf16.msra.mxu0 0
        %932 = vmatprep.subr.bf16.mxu0 0
        %933 = vmatpush2.bf16.msra.mxu0 0
        %934 = vmatprep.mubr.bf16.mxu0 0
        %935 = vmatmul.mubr.bf16.gmra.mxu0 %v900
        %v936 = vpop.f32.mrf.mxu0
        %v937 = vadd.f32 %v886, %v936
        %v938 = vpop.f32.mrf.mxu0
        %v939 = vpop.f32.mrf.mxu0
        %v940 = vpop.f32.mrf.mxu0
        %941 = vdwg.mxu0
        %v942 = vadd.f32 %v937, %v216
        %v943 = vsel %vm248, %v942, 0.0
        %944 = vadd.xlane.f32.xlu0 %v943
        %v945 = vpop.xlane.xlu0 %944
        %v946 = vrcp.pop 32.0
        %v947 = vmul.f32 %v945, %v946
        %v948 = vsub.f32 %v942, %v947
        %v949 = vmul.f32 %v948, %v948
        %v950 = vsel %vm248, %v949, 0.0
        %951 = vadd.xlane.f32.xlu0 %v950
        %v952 = vpop.xlane.xlu0 %951
        %v953 = vmul.f32 %v952, %v946
        %v954 = vadd.f32 %v953, 1e-12
        %v955 = vrsqrt.pop %v954
        %v956 = vmul.f32 %v948, %v955
        %v957 = vlaneseq
        %v958 = vshrl.u32 %v957, 7
        %v959 = vsub.s32 0, %v958
        %v960 = vrot.slane %v222, %v959
        %v961 = vmul.f32 %v960, %v956
        %v962 = vlaneseq
        %v963 = vshrl.u32 %v962, 7
        %v964 = vsub.s32 0, %v963
        %v965 = vrot.slane %v223, %v964
        %v966 = vadd.f32 %v961, %v965
        %v967 = vpack.c.bf16 %v966, %v966
        %s968 = scalar_lea.vmem [#allocation6], 64
        %v969 = vld [vmem:[%s968] sm:$0xf]
        %v970 = vld [vmem:[%s968 + $0x4] sm:$0xf]
        %v971 = vld [vmem:[%s968 + $0x8] sm:$0xf]
        %v972 = vld [vmem:[%s968 + $0xc] sm:$0xf]
        %v973 = vlaneseq
        %v974 = vshrl.u32 %v973, 7
        %v975 = vsub.s32 0, %v974
        %v976 = vrot.slane %v224, %v975
        %v981 = vunpack.c.l.b16 %v969
        %v982 = vunpack.c.l.b16 %v970
        %v983 = vunpack.c.l.b16 %v971
        %v984 = vunpack.c.l.b16 %v972
        %v985 = vpack.c.b16 %v982, %v981
        %v986 = vpack.c.b16 %v984, %v983
        %v990 = vsel %vm248, %v967, 0
        %992 = vmatprep.subr.bf16.mxu0 0
        %993 = vmatpush1.bf16.msra.mxu0 0
        %994 = vmatprep.subr.bf16.mxu0 0
        %995 = vmatpush1.bf16.msra.mxu0 0
        %996 = vmatprep.subr.bf16.mxu0 0
        %997 = vmatpush1.bf16.msra.mxu0 0
        %998 = vmatprep.subr.bf16.mxu0 0
        %999 = vmatpush1.bf16.msra.mxu0 0
        %1000 = vmatprep.subr.bf16.mxu0 0
        %1001 = vmatpush1.bf16.msra.mxu0 0
        %1002 = vmatprep.subr.bf16.mxu0 0
        %1003 = vmatpush1.bf16.msra.mxu0 0
        %1004 = vmatprep.subr.bf16.mxu0 0
        %1005 = vmatpush1.bf16.msra.mxu0 %v986
        %1006 = vmatprep.subr.bf16.mxu0 0
        %1007 = vmatpush1.bf16.msra.mxu0 %v985
        %1008 = vmatprep.subr.bf16.mxu0 0
        %1009 = vmatpush2.bf16.msra.mxu0 0
        %1010 = vmatprep.subr.bf16.mxu0 0
        %1011 = vmatpush2.bf16.msra.mxu0 0
        %1012 = vmatprep.subr.bf16.mxu0 0
        %1013 = vmatpush2.bf16.msra.mxu0 0
        %1014 = vmatprep.subr.bf16.mxu0 0
        %1015 = vmatpush2.bf16.msra.mxu0 0
        %1016 = vmatprep.subr.bf16.mxu0 0
        %1017 = vmatpush2.bf16.msra.mxu0 0
        %1018 = vmatprep.subr.bf16.mxu0 0
        %1019 = vmatpush2.bf16.msra.mxu0 0
        %1020 = vmatprep.subr.bf16.mxu0 0
        %1021 = vmatpush2.bf16.msra.mxu0 0
        %1022 = vmatprep.subr.bf16.mxu0 0
        %1023 = vmatpush2.bf16.msra.mxu0 0
        %1024 = vmatprep.mubr.bf16.mxu0 0
        %1025 = vmatmul.mubr.bf16.gmra.mxu0 %v990
        %v1026 = vpop.f32.mrf.mxu0
        %v1027 = vadd.f32 %v976, %v1026
        %v1028 = vpop.f32.mrf.mxu0
        %v1029 = vpop.f32.mrf.mxu0
        %v1030 = vpop.f32.mrf.mxu0
        %1031 = vdwg.mxu0
        %v1032 = vmul.f32 %v1027, 0.5
        %v1033 = vmul.f32 %v1027, 0.70710677
        %v1034 = verf.f32.pop %v1033
        %v1035 = vadd.f32 %v1034, 1.0
        %v1036 = vmul.f32 %v1032, %v1035
        %v1037 = vpack.c.bf16 %v1036, %v1036
        %s1038 = scalar_lea.vmem [#allocation6], 80
        %v1039 = vld [vmem:[%s1038] sm:$0xf]
        %v1040 = vld [vmem:[%s1038 + $0x4] sm:$0xf]
        %v1041 = vld [vmem:[%s1038 + $0x8] sm:$0xf]
        %v1042 = vld [vmem:[%s1038 + $0xc] sm:$0xf]
        %v1043 = vlaneseq
        %v1044 = vshrl.u32 %v1043, 7
        %v1045 = vsub.s32 0, %v1044
        %v1046 = vrot.slane %v225, %v1045
        %v1051 = vunpack.c.l.b16 %v1039
        %v1052 = vunpack.c.l.b16 %v1040
        %v1053 = vunpack.c.l.b16 %v1041
        %v1054 = vunpack.c.l.b16 %v1042
        %v1055 = vpack.c.b16 %v1052, %v1051
        %v1056 = vpack.c.b16 %v1054, %v1053
        %v1060 = vsel %vm248, %v1037, 0
        %1062 = vmatprep.subr.bf16.mxu0 0
        %1063 = vmatpush1.bf16.msra.mxu0 0
        %1064 = vmatprep.subr.bf16.mxu0 0
        %1065 = vmatpush1.bf16.msra.mxu0 0
        %1066 = vmatprep.subr.bf16.mxu0 0
        %1067 = vmatpush1.bf16.msra.mxu0 0
        %1068 = vmatprep.subr.bf16.mxu0 0
        %1069 = vmatpush1.bf16.msra.mxu0 0
        %1070 = vmatprep.subr.bf16.mxu0 0
        %1071 = vmatpush1.bf16.msra.mxu0 0
        %1072 = vmatprep.subr.bf16.mxu0 0
        %1073 = vmatpush1.bf16.msra.mxu0 0
        %1074 = vmatprep.subr.bf16.mxu0 0
        %1075 = vmatpush1.bf16.msra.mxu0 %v1056
        %1076 = vmatprep.subr.bf16.mxu0 0
        %1077 = vmatpush1.bf16.msra.mxu0 %v1055
        %1078 = vmatprep.subr.bf16.mxu0 0
        %1079 = vmatpush2.bf16.msra.mxu0 0
        %1080 = vmatprep.subr.bf16.mxu0 0
        %1081 = vmatpush2.bf16.msra.mxu0 0
        %1082 = vmatprep.subr.bf16.mxu0 0
        %1083 = vmatpush2.bf16.msra.mxu0 0
        %1084 = vmatprep.subr.bf16.mxu0 0
        %1085 = vmatpush2.bf16.msra.mxu0 0
        %1086 = vmatprep.subr.bf16.mxu0 0
        %1087 = vmatpush2.bf16.msra.mxu0 0
        %1088 = vmatprep.subr.bf16.mxu0 0
        %1089 = vmatpush2.bf16.msra.mxu0 0
        %1090 = vmatprep.subr.bf16.mxu0 0
        %1091 = vmatpush2.bf16.msra.mxu0 0
        %1092 = vmatprep.subr.bf16.mxu0 0
        %1093 = vmatpush2.bf16.msra.mxu0 0
        %1094 = vmatprep.mubr.bf16.mxu0 0
        %1095 = vmatmul.mubr.bf16.gmra.mxu0 %v1060
        %v1096 = vpop.f32.mrf.mxu0
        %v1097 = vadd.f32 %v1046, %v1096
        %v1098 = vpop.f32.mrf.mxu0
        %v1099 = vpop.f32.mrf.mxu0
        %v1100 = vpop.f32.mrf.mxu0
        %1101 = vdwg.mxu0
        %v1102 = vadd.f32 %v1097, %v966
        %v1103 = vsel %vm248, %v1102, 0.0
        %1104 = vadd.xlane.f32.xlu0 %v1103
        %v1105 = vpop.xlane.xlu0 %1104
        %v1106 = vmul.f32 %v1105, %v946
        %v1107 = vsub.f32 %v1102, %v1106
        %v1108 = vmul.f32 %v1107, %v1107
        %v1109 = vsel %vm248, %v1108, 0.0
        %1110 = vadd.xlane.f32.xlu0 %v1109
        %v1111 = vpop.xlane.xlu0 %1110
        %v1112 = vmul.f32 %v1111, %v946
        %v1113 = vadd.f32 %v1112, 1e-12
        %v1114 = vrsqrt.pop %v1113
        %v1115 = vmul.f32 %v1107, %v1114
        %v1116 = vlaneseq
        %v1117 = vshrl.u32 %v1116, 7
        %v1118 = vsub.s32 0, %v1117
        %v1119 = vrot.slane %v226, %v1118
        %v1120 = vmul.f32 %v1119, %v1115
        %v1121 = vlaneseq
        %v1122 = vshrl.u32 %v1121, 7
        %v1123 = vsub.s32 0, %v1122
        %v1124 = vrot.slane %v227, %v1123
        %v1125 = vadd.f32 %v1120, %v1124
        %1126 = vst.msk [vmem:[%s214] sm:$0xff] %vm248, %v1125
        %s1127 = sand.u32 %s97, 1
        %s1128 = scalar_lea.sflag [#allocation5], %s1127
        %s1129 = sand.u32 %s97, 1
        %s1130 = smul.addr %s1129, 8
        %s1131 = scalar_lea.vmem [#allocation9], %s1130
        // Predicated region
        $region45: #{tpu_custom_call.1} parent=31 // pred_check
          %p1132 = pneg %p107
        $region46: #{tpu_custom_call.1} parent=31 // pred_check_branch
          %1134 = sbr.rel (%p1132) target = $region48
        $region47: #{tpu_custom_call.1} parent=31 // pred_region
          %s1136 = ssub.s32 128, 128
          %1137 = vsyncadd %s1128, %s1136
          %s1138 = smul.addr %s21, 128
          %s1139 = scalar_lea.hbm %s3, %s1138
          %s1141 = sshll.u32 %s1131, 4
          %s1142 = int_to_ptr.vmem [resolvable:$true] %s1141
          %1144 = dma.vmem_to_hbm [thread:$0]  %s1142, 128, %s1139, %s1128
        $region48: #{tpu_custom_call.1} parent=31 // pred_fallthru
          _
      $region32: #{tpu_custom_call.1} parent=5 // pred_fallthru
        _
      %p1145 = scmp.le.s32.totalorder 2, %s16
      // Predicated region
      $region49: #{tpu_custom_call.1} parent=5 // pred_check
        %p1146 = pneg %p1145
      $region50: #{tpu_custom_call.1} parent=5 // pred_check_branch
        %1148 = sbr.rel (%p1146) target = $region52
      $region51: #{tpu_custom_call.1} parent=5 // pred_region
        %s1149 = ssub.s32 %s16, 2
        // Predicated region
        $region53: #{tpu_custom_call.1} parent=51 // pred_check
          %p1150 = pneg %p113
        $region54: #{tpu_custom_call.1} parent=51 // pred_check_branch
          %1152 = sbr.rel (%p1150) target = $region56
        $region55: #{tpu_custom_call.1} parent=51 // pred_region
          %s1153 = sand.u32 %s98, 1
          %s1154 = scalar_lea.sflag [#allocation5], %s1153
          %s1155 = sand.u32 %s98, 1
          %s1156 = smul.addr %s1155, 8
          %s1157 = scalar_lea.vmem [#allocation9], %s1156
          %1158 = dma.done %s1154, 128
        $region56: #{tpu_custom_call.1} parent=51 // pred_fallthru
          _
      $region52: #{tpu_custom_call.1} parent=5 // pred_fallthru
        _
    $region6: #{tpu_custom_call.1} parent=1 // loop_footer
      %s20 = sadd.s32 1, %s16
    $region7: #{tpu_custom_call.1} parent=1 // loop_footer_branch
      %15 = sbr.rel target = $region3
    $region8: #{tpu_custom_call.1} parent=1 // loop_exit
      _
    %1159 = vsyncpa [#allocation4], 1
    %s1160 = scalar_lea.sflag [#allocation4], 1
    %1161 = vsyncpa %s1160, 1
    %1162 = vsyncpa [#allocation7], 1
    %1163 = vsyncpa [#allocation5], 1
    %s1164 = scalar_lea.sflag [#allocation5], 1
    %1165 = vsyncpa %s1164, 1

// kernel: tpu_custom_call.1
$region0: #{tpu_custom_call.1}
  #allocation0 [shape = 'u32[]', space=smem, size = 0x4, offset = 0x4, fixed_abs, tag = 'smem constant byte address 0x4 - core index']
  #allocation1 [shape = 'u32[144,128]{1,0:T(1,128)}', space=vmem, size = 0x12000, scoped, tag = 'internal scratch']
  #allocation2 [shape = 'f32[1,8,32]{2,1,0:T(8,128)}', space=vmem, size = 0x1000, scoped, tag = 'scratch operand']
  %s0 = inlined_call_operand.hbm [shape: f32[2,8,32], index: 0, kind: input, shape index: {}]
  %s1 = inlined_call_operand.hbm [shape: bf16[6,32,32], index: 1, kind: input, shape index: {}]
  %s2 = inlined_call_operand.hbm [shape: f32[10,32], index: 2, kind: input, shape index: {}]
  %s3 = inlined_call_operand.hbm [shape: f32[2,8,32], index: 3, kind: output, shape index: {}]
  %s4 = sld [smem:[#allocation0]]
  $region57: #{tpu_custom_call.1} parent=0
    _
  %s6 = ssub.s32 1, %s4
  %s7 = scalar_select 0, %s6, %s4
  $region1: #{tpu_custom_call.1} parent=0
    #allocation3 [shape = 'u8[8192]{0}', space=vmem, size = 0x2000, scoped, tag = 'input window, operand 0']
    #allocation4 [shape = 's32[2]{0}', space=sflag, size = 0x8, scoped, tag = 'scoped memory for tpu_custom_call.1']
    #allocation5 [shape = 's32[2]{0}', space=sflag, size = 0x8, scoped, tag = 'scoped memory for tpu_custom_call.1']
    #allocation6 [shape = 'u8[49152]{0}', space=vmem, size = 0xc000, scoped, tag = 'input window, operand 1, single buffered']
    #allocation7 [shape = 's32[1]{0}', space=sflag, size = 0x4, scoped, tag = 'scoped memory for tpu_custom_call.1']
    #allocation8 [shape = 'u8[8192]{0}', space=vmem, size = 0x2000, scoped, tag = 'input window, operand 2, single buffered']
    #allocation9 [shape = 'u8[8192]{0}', space=vmem, size = 0x2000, scoped, tag = 'output window, operand 0']
    %8 = vsyncpa [#allocation4], 0
    %s9 = scalar_lea.sflag [#allocation4], 1
    %10 = vsyncpa %s9, 0
    %11 = vsyncpa [#allocation7], 0
    %12 = vsyncpa [#allocation5], 0
    %s13 = scalar_lea.sflag [#allocation5], 1
    %14 = vsyncpa %s13, 0
    loop: start=0, step=1, limit=4
    $region2: #{tpu_custom_call.1} parent=1 // loop_pre_header
      _
    $region3: #{tpu_custom_call.1} parent=1 // loop_header
      %s16 = sphi 0, %s20
      %p17 = scmp.ge.s32.totalorder %s16, 4
      %s26 = sphi 0, %s28
      %s29 = sphi 0, %s26
      %s30 = sphi 0, %s29
      %s46 = sphi 0, %s30
      %s50 = sphi 0, %s50
      %s52 = sphi 0, %s50
      %s53 = sphi 0, %s52
      %s67 = sphi 0, %s53
      %s71 = sphi 0, %s71
      %s73 = sphi 0, %s71
      %s74 = sphi 0, %s73
      %s88 = sphi 0, %s74
      %s94 = sphi 0, %s96
      %s97 = sphi 0, %s94
      %s98 = sphi 0, %s97
      %s114 = sphi 0, %s98
    $region4: #{tpu_custom_call.1} parent=1 // loop_header_branch
      %19 = sbr.rel (%p17) target = $region8
    $region5: #{tpu_custom_call.1} parent=1 // loop_body
      %s21 = ssub.s32 %s16, 1
      %s22 = ssub.s32 %s16, 2
      %s23 = sadd.s32 %s16, 1
      %s24 = ssub.s32 %s16, %s23
      %p25 = scmp.eq.s32.totalorder %s24, 0
      %s27 = sadd.s32 %s26, 1
      %s28 = scalar_select %p25, %s26, %s27
      %p31 = pneg %p25
      %p32 = scmp.eq.s32.totalorder %s16, 1
      %p33 = por %p31, %p32
      %p34 = scmp.ne.s32.totalorder %s26, %s29
      %p35 = scmp.eq.s32.totalorder %s16, 0
      %p36 = por %p34, %p35
      %p37 = scmp.ne.s32.totalorder %s26, %s29
      %p38 = scmp.eq.s32.totalorder %s21, 1
      %p39 = por %p37, %p38
      %p40 = scmp.ne.s32.totalorder %s29, %s30
      %p41 = scmp.eq.s32.totalorder %s21, 0
      %p42 = por %p40, %p41
      %p43 = scmp.ne.s32.totalorder %s29, %s30
      %p44 = scmp.eq.s32.totalorder %s22, 1
      %p45 = por %p43, %p44
      %p47 = scmp.ne.s32.totalorder %s30, %s46
      %p48 = scmp.eq.s32.totalorder %s22, 0
      %p49 = por %p47, %p48
      %s51 = sadd.s32 %s50, 1
      %p54 = scmp.eq.s32.totalorder %s16, 1
      %p55 = scmp.ne.s32.totalorder %s50, %s52
      %p56 = scmp.eq.s32.totalorder %s16, 0
      %p57 = por %p55, %p56
      %p58 = scmp.ne.s32.totalorder %s50, %s52
      %p59 = scmp.eq.s32.totalorder %s21, 1
      %p60 = por %p58, %p59
      %p61 = scmp.ne.s32.totalorder %s52, %s53
      %p62 = scmp.eq.s32.totalorder %s21, 0
      %p63 = por %p61, %p62
      %p64 = scmp.ne.s32.totalorder %s52, %s53
      %p65 = scmp.eq.s32.totalorder %s22, 1
      %p66 = por %p64, %p65
      %p68 = scmp.ne.s32.totalorder %s53, %s67
      %p69 = scmp.eq.s32.totalorder %s22, 0
      %p70 = por %p68, %p69
      %s72 = sadd.s32 %s71, 1
      %p75 = scmp.eq.s32.totalorder %s16, 1
      %p76 = scmp.ne.s32.totalorder %s71, %s73
      %p77 = scmp.eq.s32.totalorder %s16, 0
      %p78 = por %p76, %p77
      %p79 = scmp.ne.s32.totalorder %s71, %s73
      %p80 = scmp.eq.s32.totalorder %s21, 1
      %p81 = por %p79, %p80
      %p82 = scmp.ne.s32.totalorder %s73, %s74
      %p83 = scmp.eq.s32.totalorder %s21, 0
      %p84 = por %p82, %p83
      %p85 = scmp.ne.s32.totalorder %s73, %s74
      %p86 = scmp.eq.s32.totalorder %s22, 1
      %p87 = por %p85, %p86
      %p89 = scmp.ne.s32.totalorder %s74, %s88
      %p90 = scmp.eq.s32.totalorder %s22, 0
      %p91 = por %p89, %p90
      %s92 = ssub.s32 %s16, %s23
      %p93 = scmp.eq.s32.totalorder %s92, 0
      %s95 = sadd.s32 %s94, 1
      %s96 = scalar_select %p93, %s94, %s95
      %p99 = pneg %p93
      %p100 = scmp.eq.s32.totalorder %s16, 1
      %p101 = por %p99, %p100
      %p102 = scmp.ne.s32.totalorder %s94, %s97
      %p103 = scmp.eq.s32.totalorder %s16, 0
      %p104 = por %p102, %p103
      %p105 = scmp.ne.s32.totalorder %s94, %s97
      %p106 = scmp.eq.s32.totalorder %s21, 1
      %p107 = por %p105, %p106
      %p108 = scmp.ne.s32.totalorder %s97, %s98
      %p109 = scmp.eq.s32.totalorder %s21, 0
      %p110 = por %p108, %p109
      %p111 = scmp.ne.s32.totalorder %s97, %s98
      %p112 = scmp.eq.s32.totalorder %s22, 1
      %p113 = por %p111, %p112
      %p115 = scmp.ne.s32.totalorder %s98, %s114
      %p116 = scmp.eq.s32.totalorder %s22, 0
      %p117 = por %p115, %p116
      %p118 = scmp.le.s32.totalorder 1, %s16
      %p119 = scmp.lt.s32.totalorder %s16, 3
      %p120 = pnand %p118, %p119
      %p121 = pneg %p120
      // Predicated region
      $region9: #{tpu_custom_call.1} parent=5 // pred_check
        _
      $region10: #{tpu_custom_call.1} parent=5 // pred_check_branch
        %123 = sbr.rel (%p120) target = $region12
      $region11: #{tpu_custom_call.1} parent=5 // pred_region
        %s124 = ssub.s32 %s16, 1
        // Predicated region
        $region13: #{tpu_custom_call.1} parent=11 // pred_check
          %p125 = pneg %p63
        $region14: #{tpu_custom_call.1} parent=11 // pred_check_branch
          %127 = sbr.rel (%p125) target = $region16
        $region15: #{tpu_custom_call.1} parent=11 // pred_region
          %s129 = ssub.s32 1536, 1536
          %130 = vsyncadd [#allocation7], %s129
          %s131 = sshll.u32 [#allocation6], 4
          %s132 = int_to_ptr.vmem [resolvable:$true] %s131
          %137 = dma.hbm_to_vmem [thread:$0]  %s1, 1536, %s132, [#allocation7], 64, 64, 4
        $region16: #{tpu_custom_call.1} parent=11 // pred_fallthru
          _
        // Predicated region
        $region17: #{tpu_custom_call.1} parent=11 // pred_check
          %p138 = pneg %p84
        $region18: #{tpu_custom_call.1} parent=11 // pred_check_branch
          %140 = sbr.rel (%p138) target = $region20
        $region19: #{tpu_custom_call.1} parent=11 // pred_region
          %s142 = ssub.s32 256, 256
          %143 = vsyncadd [#allocation7], %s142
          %s144 = sshll.u32 [#allocation8], 4
          %s145 = int_to_ptr.vmem [resolvable:$true] %s144
          %150 = dma.hbm_to_vmem [thread:$0]  %s2, 256, %s145, [#allocation7], 128, 128, 8
        $region20: #{tpu_custom_call.1} parent=11 // pred_fallthru
          _
      $region12: #{tpu_custom_call.1} parent=5 // pred_fallthru
        _
      %p151 = scmp.lt.s32.totalorder %s16, 2
      // Predicated region
      $region21: #{tpu_custom_call.1} parent=5 // pred_check
        %p152 = pneg %p151
      $region22: #{tpu_custom_call.1} parent=5 // pred_check_branch
        %154 = sbr.rel (%p152) target = $region24
      $region23: #{tpu_custom_call.1} parent=5 // pred_region
        // Predicated region
        $region25: #{tpu_custom_call.1} parent=23 // pred_check
          %p155 = pneg %p36
        $region26: #{tpu_custom_call.1} parent=23 // pred_check_branch
          %157 = sbr.rel (%p155) target = $region28
        $region27: #{tpu_custom_call.1} parent=23 // pred_region
          %s158 = sand.u32 %s26, 1
          %s159 = scalar_lea.sflag [#allocation4], %s158
          %s160 = sand.u32 %s26, 1
          %s161 = smul.addr %s160, 8
          %s162 = scalar_lea.vmem [#allocation3], %s161
          %s164 = ssub.s32 128, 128
          %165 = vsyncadd %s159, %s164
          %s166 = smul.addr %s16, 128
          %s167 = scalar_lea.hbm %s0, %s166
          %s169 = sshll.u32 %s162, 4
          %s170 = int_to_ptr.vmem [resolvable:$true] %s169
          %172 = dma.hbm_to_vmem [thread:$0]  %s167, 128, %s170, %s159
        $region28: #{tpu_custom_call.1} parent=23 // pred_fallthru
          _
      $region24: #{tpu_custom_call.1} parent=5 // pred_fallthru
        _
      %p173 = scmp.le.s32.totalorder 1, %s16
      %p174 = scmp.lt.s32.totalorder %s16, 3
      %p175 = pnand %p173, %p174
      %p176 = pneg %p175
      // Predicated region
      $region29: #{tpu_custom_call.1} parent=5 // pred_check
        _
      $region30: #{tpu_custom_call.1} parent=5 // pred_check_branch
        %178 = sbr.rel (%p175) target = $region32
      $region31: #{tpu_custom_call.1} parent=5 // pred_region
        %s179 = ssub.s32 %s16, 1
        %s180 = sand.u32 %s29, 1
        %s181 = scalar_lea.sflag [#allocation4], %s180
        %s182 = sand.u32 %s29, 1
        %s183 = smul.addr %s182, 8
        %s184 = scalar_lea.vmem [#allocation3], %s183
        // Predicated region
        $region33: #{tpu_custom_call.1} parent=31 // pred_check
          %p185 = pneg %p42
        $region34: #{tpu_custom_call.1} parent=31 // pred_check_branch
          %187 = sbr.rel (%p185) target = $region36
        $region35: #{tpu_custom_call.1} parent=31 // pred_region
          %188 = dma.done %s181, 128
        $region36: #{tpu_custom_call.1} parent=31 // pred_fallthru
          _
        // Predicated region
        $region37: #{tpu_custom_call.1} parent=31 // pred_check
          %p189 = pneg %p63
        $region38: #{tpu_custom_call.1} parent=31 // pred_check_branch
          %191 = sbr.rel (%p189) target = $region40
        $region39: #{tpu_custom_call.1} parent=31 // pred_region
          %192 = dma.done [#allocation7], 1536
        $region40: #{tpu_custom_call.1} parent=31 // pred_fallthru
          _
        // Predicated region
        $region41: #{tpu_custom_call.1} parent=31 // pred_check
          %p193 = pneg %p84
        $region42: #{tpu_custom_call.1} parent=31 // pred_check_branch
          %195 = sbr.rel (%p193) target = $region44
        $region43: #{tpu_custom_call.1} parent=31 // pred_region
          %196 = dma.done [#allocation7], 256
        $region44: #{tpu_custom_call.1} parent=31 // pred_fallthru
          _
        %s197 = sand.u32 %s29, 1
        %s198 = scalar_lea.sflag [#allocation4], %s197
        %s199 = sand.u32 %s29, 1
        %s200 = smul.addr %s199, 8
        %s201 = scalar_lea.vmem [#allocation3], %s200
        %p202 = pneg %p42
        %p203 = pneg %p39
        %p204 = pneg %p63
        %p205 = pneg %p60
        %p206 = pneg %p84
        %p207 = pneg %p81
        %p208 = pneg %p110
        %p209 = pneg %p107
        %s210 = sand.u32 %s97, 1
        %s211 = scalar_lea.sflag [#allocation5], %s210
        %s212 = sand.u32 %s97, 1
        %s213 = smul.addr %s212, 8
        %s214 = scalar_lea.vmem [#allocation9], %s213
        %v216 = vld [vmem:[%s184] sm:$0xff]
        %v217 = vpack.c.bf16 %v216, %v216
        %v218 = vld [vmem:[#allocation8] sm:$0x1]
        %v219 = vld [vmem:[#allocation8 + $0x1] sm:$0x1]
        %v220 = vld [vmem:[#allocation8 + $0x2] sm:$0x1]
        %v221 = vld [vmem:[#allocation8 + $0x3] sm:$0x1]
        %v222 = vld [vmem:[#allocation8 + $0x4] sm:$0x1]
        %v223 = vld [vmem:[#allocation8 + $0x5] sm:$0x1]
        %v224 = vld [vmem:[#allocation8 + $0x6] sm:$0x1]
        %v225 = vld [vmem:[#allocation8 + $0x7] sm:$0x1]
        %v226 = vld [vmem:[#allocation8 + $0x8] sm:$0x1]
        %v227 = vld [vmem:[#allocation8 + $0x9] sm:$0x1]
        %v228 = vld [vmem:[#allocation6] sm:$0xf]
        %v229 = vld [vmem:[#allocation6 + $0x4] sm:$0xf]
        %v230 = vld [vmem:[#allocation6 + $0x8] sm:$0xf]
        %v231 = vld [vmem:[#allocation6 + $0xc] sm:$0xf]
        %v232 = vlaneseq
        %v233 = vshrl.u32 %v232, 7
        %v234 = vsub.s32 0, %v233
        %v235 = vrot.slane %v218, %v234
        %v240 = vunpack.c.l.b16 %v228
        %v241 = vunpack.c.l.b16 %v229
        %v242 = vunpack.c.l.b16 %v230
        %v243 = vunpack.c.l.b16 %v231
        %v244 = vpack.c.b16 %v241, %v240
        %v245 = vpack.c.b16 %v243, %v242
        %vm248 = vcmask 261120
        %v250 = vsel %vm248, %v217, 0
        %252 = vmatprep.subr.bf16.mxu0 0
        %253 = vmatpush1.bf16.msra.mxu0 0
        %254 = vmatprep.subr.bf16.mxu0 0
        %255 = vmatpush1.bf16.msra.mxu0 0
        %256 = vmatprep.subr.bf16.mxu0 0
        %257 = vmatpush1.bf16.msra.mxu0 0
        %258 = vmatprep.subr.bf16.mxu0 0
        %259 = vmatpush1.bf16.msra.mxu0 0
        %260 = vmatprep.subr.bf16.mxu0 0
        %261 = vmatpush1.bf16.msra.mxu0 0
        %262 = vmatprep.subr.bf16.mxu0 0
        %263 = vmatpush1.bf16.msra.mxu0 0
        %264 = vmatprep.subr.bf16.mxu0 0
        %265 = vmatpush1.bf16.msra.mxu0 %v245
        %266 = vmatprep.subr.bf16.mxu0 0
        %267 = vmatpush1.bf16.msra.mxu0 %v244
        %268 = vmatprep.subr.bf16.mxu0 0
        %269 = vmatpush2.bf16.msra.mxu0 0
        %270 = vmatprep.subr.bf16.mxu0 0
        %271 = vmatpush2.bf16.msra.mxu0 0
        %272 = vmatprep.subr.bf16.mxu0 0
        %273 = vmatpush2.bf16.msra.mxu0 0
        %274 = vmatprep.subr.bf16.mxu0 0
        %275 = vmatpush2.bf16.msra.mxu0 0
        %276 = vmatprep.subr.bf16.mxu0 0
        %277 = vmatpush2.bf16.msra.mxu0 0
        %278 = vmatprep.subr.bf16.mxu0 0
        %279 = vmatpush2.bf16.msra.mxu0 0
        %280 = vmatprep.subr.bf16.mxu0 0
        %281 = vmatpush2.bf16.msra.mxu0 0
        %282 = vmatprep.subr.bf16.mxu0 0
        %283 = vmatpush2.bf16.msra.mxu0 0
        %284 = vmatprep.mubr.bf16.mxu0 0
        %285 = vmatmul.mubr.bf16.gmra.mxu0 %v250
        %v286 = vpop.f32.mrf.mxu0
        %v287 = vadd.f32 %v235, %v286
        %v288 = vpop.f32.mrf.mxu0
        %v289 = vpop.f32.mrf.mxu0
        %v290 = vpop.f32.mrf.mxu0
        %291 = vdwg.mxu0
        %s292 = scalar_lea.vmem [#allocation6], 16
        %v293 = vld [vmem:[%s292] sm:$0xf]
        %v294 = vld [vmem:[%s292 + $0x4] sm:$0xf]
        %v295 = vld [vmem:[%s292 + $0x8] sm:$0xf]
        %v296 = vld [vmem:[%s292 + $0xc] sm:$0xf]
        %v297 = vlaneseq
        %v298 = vshrl.u32 %v297, 7
        %v299 = vsub.s32 0, %v298
        %v300 = vrot.slane %v219, %v299
        %v305 = vunpack.c.l.b16 %v293
        %v306 = vunpack.c.l.b16 %v294
        %v307 = vunpack.c.l.b16 %v295
        %v308 = vunpack.c.l.b16 %v296
        %v309 = vpack.c.b16 %v306, %v305
        %v310 = vpack.c.b16 %v308, %v307
        %313 = vmatprep.subr.bf16.mxu0 0
        %314 = vmatpush1.bf16.msra.mxu0 0
        %315 = vmatprep.subr.bf16.mxu0 0
        %316 = vmatpush1.bf16.msra.mxu0 0
        %317 = vmatprep.subr.bf16.mxu0 0
        %318 = vmatpush1.bf16.msra.mxu0 0
        %319 = vmatprep.subr.bf16.mxu0 0
        %320 = vmatpush1.bf16.msra.mxu0 0
        %321 = vmatprep.subr.bf16.mxu0 0
        %322 = vmatpush1.bf16.msra.mxu0 0
        %323 = vmatprep.subr.bf16.mxu0 0
        %324 = vmatpush1.bf16.msra.mxu0 0
        %325 = vmatprep.subr.bf16.mxu0 0
        %326 = vmatpush1.bf16.msra.mxu0 %v310
        %327 = vmatprep.subr.bf16.mxu0 0
        %328 = vmatpush1.bf16.msra.mxu0 %v309
        %329 = vmatprep.subr.bf16.mxu0 0
        %330 = vmatpush2.bf16.msra.mxu0 0
        %331 = vmatprep.subr.bf16.mxu0 0
        %332 = vmatpush2.bf16.msra.mxu0 0
        %333 = vmatprep.subr.bf16.mxu0 0
        %334 = vmatpush2.bf16.msra.mxu0 0
        %335 = vmatprep.subr.bf16.mxu0 0
        %336 = vmatpush2.bf16.msra.mxu0 0
        %337 = vmatprep.subr.bf16.mxu0 0
        %338 = vmatpush2.bf16.msra.mxu0 0
        %339 = vmatprep.subr.bf16.mxu0 0
        %340 = vmatpush2.bf16.msra.mxu0 0
        %341 = vmatprep.subr.bf16.mxu0 0
        %342 = vmatpush2.bf16.msra.mxu0 0
        %343 = vmatprep.subr.bf16.mxu0 0
        %344 = vmatpush2.bf16.msra.mxu0 0
        %345 = vmatprep.mubr.bf16.mxu0 0
        %346 = vmatmul.mubr.bf16.gmra.mxu0 %v250
        %v347 = vpop.f32.mrf.mxu0
        %v348 = vadd.f32 %v300, %v347
        %v349 = vpop.f32.mrf.mxu0
        %v350 = vpop.f32.mrf.mxu0
        %v351 = vpop.f32.mrf.mxu0
        %352 = vdwg.mxu0
        %s353 = scalar_lea.vmem [#allocation6], 32
        %v354 = vld [vmem:[%s353] sm:$0xf]
        %v355 = vld [vmem:[%s353 + $0x4] sm:$0xf]
        %v356 = vld [vmem:[%s353 + $0x8] sm:$0xf]
        %v357 = vld [vmem:[%s353 + $0xc] sm:$0xf]
        %v358 = vlaneseq
        %v359 = vshrl.u32 %v358, 7
        %v360 = vsub.s32 0, %v359
        %v361 = vrot.slane %v220, %v360
        %v366 = vunpack.c.l.b16 %v354
        %v367 = vunpack.c.l.b16 %v355
        %v368 = vunpack.c.l.b16 %v356
        %v369 = vunpack.c.l.b16 %v357
        %v370 = vpack.c.b16 %v367, %v366
        %v371 = vpack.c.b16 %v369, %v368
        %374 = vmatprep.subr.bf16.mxu0 0
        %375 = vmatpush1.bf16.msra.mxu0 0
        %376 = vmatprep.subr.bf16.mxu0 0
        %377 = vmatpush1.bf16.msra.mxu0 0
        %378 = vmatprep.subr.bf16.mxu0 0
        %379 = vmatpush1.bf16.msra.mxu0 0
        %380 = vmatprep.subr.bf16.mxu0 0
        %381 = vmatpush1.bf16.msra.mxu0 0
        %382 = vmatprep.subr.bf16.mxu0 0
        %383 = vmatpush1.bf16.msra.mxu0 0
        %384 = vmatprep.subr.bf16.mxu0 0
        %385 = vmatpush1.bf16.msra.mxu0 0
        %386 = vmatprep.subr.bf16.mxu0 0
        %387 = vmatpush1.bf16.msra.mxu0 %v371
        %388 = vmatprep.subr.bf16.mxu0 0
        %389 = vmatpush1.bf16.msra.mxu0 %v370
        %390 = vmatprep.subr.bf16.mxu0 0
        %391 = vmatpush2.bf16.msra.mxu0 0
        %392 = vmatprep.subr.bf16.mxu0 0
        %393 = vmatpush2.bf16.msra.mxu0 0
        %394 = vmatprep.subr.bf16.mxu0 0
        %395 = vmatpush2.bf16.msra.mxu0 0
        %396 = vmatprep.subr.bf16.mxu0 0
        %397 = vmatpush2.bf16.msra.mxu0 0
        %398 = vmatprep.subr.bf16.mxu0 0
        %399 = vmatpush2.bf16.msra.mxu0 0
        %400 = vmatprep.subr.bf16.mxu0 0
        %401 = vmatpush2.bf16.msra.mxu0 0
        %402 = vmatprep.subr.bf16.mxu0 0
        %403 = vmatpush2.bf16.msra.mxu0 0
        %404 = vmatprep.subr.bf16.mxu0 0
        %405 = vmatpush2.bf16.msra.mxu0 0
        %406 = vmatprep.mubr.bf16.mxu0 0
        %407 = vmatmul.mubr.bf16.gmra.mxu0 %v250
        %v408 = vpop.f32.mrf.mxu0
        %v409 = vadd.f32 %v361, %v408
        %v410 = vpop.f32.mrf.mxu0
        %v411 = vpop.f32.mrf.mxu0
        %v412 = vpop.f32.mrf.mxu0
        %413 = vdwg.mxu0
        %v414 = vmul.f32 %v287, 0.35355338
        %v415 = vpack.c.bf16 %v414, %v414
        %v416 = vpack.c.bf16 %v348, %v348
        %v417 = vpack.c.bf16 %v409, %v409
        %vm418 = vcmask 64512
        %v420 = vsel %vm418, %v415, 0
        %v423 = vsel %vm418, %v416, 0
        %425 = vmatprep.subr.bf16.mxu0 0
        %426 = vmatpush1.bf16.xpose.msra.mxu0 0
        %427 = vmatprep.subr.bf16.mxu0 0
        %428 = vmatpush1.bf16.xpose.msra.mxu0 0
        %429 = vmatprep.subr.bf16.mxu0 0
        %430 = vmatpush1.bf16.xpose.msra.mxu0 0
        %431 = vmatprep.subr.bf16.mxu0 0
        %432 = vmatpush1.bf16.xpose.msra.mxu0 0
        %433 = vmatprep.subr.bf16.mxu0 0
        %434 = vmatpush1.bf16.xpose.msra.mxu0 0
        %435 = vmatprep.subr.bf16.mxu0 0
        %436 = vmatpush1.bf16.xpose.msra.mxu0 0
        %437 = vmatprep.subr.bf16.mxu0 0
        %438 = vmatpush1.bf16.xpose.msra.mxu0 0
        %439 = vmatprep.subr.bf16.mxu0 0
        %440 = vmatpush1.bf16.xpose.msra.mxu0 %v423
        %441 = vmatprep.subr.bf16.mxu0 0
        %442 = vmatpush2.bf16.xpose.msra.mxu0 0
        %443 = vmatprep.subr.bf16.mxu0 0
        %444 = vmatpush2.bf16.xpose.msra.mxu0 0
        %445 = vmatprep.subr.bf16.mxu0 0
        %446 = vmatpush2.bf16.xpose.msra.mxu0 0
        %447 = vmatprep.subr.bf16.mxu0 0
        %448 = vmatpush2.bf16.xpose.msra.mxu0 0
        %449 = vmatprep.subr.bf16.mxu0 0
        %450 = vmatpush2.bf16.xpose.msra.mxu0 0
        %451 = vmatprep.subr.bf16.mxu0 0
        %452 = vmatpush2.bf16.xpose.msra.mxu0 0
        %453 = vmatprep.subr.bf16.mxu0 0
        %454 = vmatpush2.bf16.xpose.msra.mxu0 0
        %455 = vmatprep.subr.bf16.mxu0 0
        %456 = vmatpush2.bf16.xpose.msra.mxu0 0
        %457 = vmatprep.mubr.bf16.mxu0 0
        %458 = vmatmul.mubr.bf16.gmra.mxu0 %v420
        %v459 = vpop.f32.mrf.mxu0
        %v460 = vadd.f32 0.0, %v459
        %v461 = vpop.f32.mrf.mxu0
        %v462 = vpop.f32.mrf.mxu0
        %v463 = vpop.f32.mrf.mxu0
        %464 = vdwg.mxu0
        %v465 = vsel %vm418, %v460, -inf
        %466 = vmax.xlane.f32.xlu0 %v465
        %v467 = vpop.xlane.xlu0 %466
        %v468 = vsub.f32 %v460, %v467
        %v469 = vmul.f32 %v468, 1.442695
        %v470 = vpow.pop %v469
        %v471 = vsel %vm418, %v470, 0.0
        %472 = vadd.xlane.f32.xlu0 %v471
        %v473 = vpop.xlane.xlu0 %472
        %v474 = vrcp.pop %v473
        %v475 = vmul.f32 %v470, %v474
        %v476 = vpack.c.bf16 %v475, %v475
        %v478 = vsel %vm418, %v476, 0
        %vm480 = vcmask 1043456
        %v482 = vsel %vm480, %v417, 0
        %484 = vmatprep.subr.bf16.mxu0 0
        %485 = vmatpush1.bf16.msra.mxu0 0
        %486 = vmatprep.subr.bf16.mxu0 0
        %487 = vmatpush1.bf16.msra.mxu0 0
        %488 = vmatprep.subr.bf16.mxu0 0
        %489 = vmatpush1.bf16.msra.mxu0 0
        %490 = vmatprep.subr.bf16.mxu0 0
        %491 = vmatpush1.bf16.msra.mxu0 0
        %492 = vmatprep.subr.bf16.mxu0 0
        %493 = vmatpush1.bf16.msra.mxu0 0
        %494 = vmatprep.subr.bf16.mxu0 0
        %495 = vmatpush1.bf16.msra.mxu0 0
        %496 = vmatprep.subr.bf16.mxu0 0
        %497 = vmatpush1.bf16.msra.mxu0 0
        %498 = vmatprep.subr.bf16.mxu0 0
        %499 = vmatpush1.bf16.msra.mxu0 %v482
        %500 = vmatprep.subr.bf16.mxu0 0
        %501 = vmatpush2.bf16.msra.mxu0 0
        %502 = vmatprep.subr.bf16.mxu0 0
        %503 = vmatpush2.bf16.msra.mxu0 0
        %504 = vmatprep.subr.bf16.mxu0 0
        %505 = vmatpush2.bf16.msra.mxu0 0
        %506 = vmatprep.subr.bf16.mxu0 0
        %507 = vmatpush2.bf16.msra.mxu0 0
        %508 = vmatprep.subr.bf16.mxu0 0
        %509 = vmatpush2.bf16.msra.mxu0 0
        %510 = vmatprep.subr.bf16.mxu0 0
        %511 = vmatpush2.bf16.msra.mxu0 0
        %512 = vmatprep.subr.bf16.mxu0 0
        %513 = vmatpush2.bf16.msra.mxu0 0
        %514 = vmatprep.subr.bf16.mxu0 0
        %515 = vmatpush2.bf16.msra.mxu0 0
        %516 = vmatprep.mubr.bf16.mxu0 0
        %517 = vmatmul.mubr.bf16.gmra.mxu0 %v478
        %v518 = vpop.f32.mrf.mxu0
        %v519 = vadd.f32 0.0, %v518
        %v520 = vpop.f32.mrf.mxu0
        %v521 = vpop.f32.mrf.mxu0
        %v522 = vpop.f32.mrf.mxu0
        %523 = vdwg.mxu0
        %524 = vst.msk [vmem:[#allocation2] sm:$0xff] %vm418, %v519
        %526 = vrot.lane.b32.xlu0 %v415, 120
        %v527 = vpop.permute.xlu0 %526
        %529 = vrot.lane.b32.xlu0 %v416, 120
        %v530 = vpop.permute.xlu0 %529
        %v532 = vsel %vm418, %v527, 0
        %v535 = vsel %vm418, %v530, 0
        %537 = vmatprep.subr.bf16.mxu0 0
        %538 = vmatpush1.bf16.xpose.msra.mxu0 0
        %539 = vmatprep.subr.bf16.mxu0 0
        %540 = vmatpush1.bf16.xpose.msra.mxu0 0
        %541 = vmatprep.subr.bf16.mxu0 0
        %542 = vmatpush1.bf16.xpose.msra.mxu0 0
        %543 = vmatprep.subr.bf16.mxu0 0
        %544 = vmatpush1.bf16.xpose.msra.mxu0 0
        %545 = vmatprep.subr.bf16.mxu0 0
        %546 = vmatpush1.bf16.xpose.msra.mxu0 0
        %547 = vmatprep.subr.bf16.mxu0 0
        %548 = vmatpush1.bf16.xpose.msra.mxu0 0
        %549 = vmatprep.subr.bf16.mxu0 0
        %550 = vmatpush1.bf16.xpose.msra.mxu0 0
        %551 = vmatprep.subr.bf16.mxu0 0
        %552 = vmatpush1.bf16.xpose.msra.mxu0 %v535
        %553 = vmatprep.subr.bf16.mxu0 0
        %554 = vmatpush2.bf16.xpose.msra.mxu0 0
        %555 = vmatprep.subr.bf16.mxu0 0
        %556 = vmatpush2.bf16.xpose.msra.mxu0 0
        %557 = vmatprep.subr.bf16.mxu0 0
        %558 = vmatpush2.bf16.xpose.msra.mxu0 0
        %559 = vmatprep.subr.bf16.mxu0 0
        %560 = vmatpush2.bf16.xpose.msra.mxu0 0
        %561 = vmatprep.subr.bf16.mxu0 0
        %562 = vmatpush2.bf16.xpose.msra.mxu0 0
        %563 = vmatprep.subr.bf16.mxu0 0
        %564 = vmatpush2.bf16.xpose.msra.mxu0 0
        %565 = vmatprep.subr.bf16.mxu0 0
        %566 = vmatpush2.bf16.xpose.msra.mxu0 0
        %567 = vmatprep.subr.bf16.mxu0 0
        %568 = vmatpush2.bf16.xpose.msra.mxu0 0
        %569 = vmatprep.mubr.bf16.mxu0 0
        %570 = vmatmul.mubr.bf16.gmra.mxu0 %v532
        %v571 = vpop.f32.mrf.mxu0
        %v572 = vadd.f32 0.0, %v571
        %v573 = vpop.f32.mrf.mxu0
        %v574 = vpop.f32.mrf.mxu0
        %v575 = vpop.f32.mrf.mxu0
        %576 = vdwg.mxu0
        %v577 = vsel %vm418, %v572, -inf
        %578 = vmax.xlane.f32.xlu0 %v577
        %v579 = vpop.xlane.xlu0 %578
        %v580 = vsub.f32 %v572, %v579
        %v581 = vmul.f32 %v580, 1.442695
        %v582 = vpow.pop %v581
        %v583 = vsel %vm418, %v582, 0.0
        %584 = vadd.xlane.f32.xlu0 %v583
        %v585 = vpop.xlane.xlu0 %584
        %v586 = vrcp.pop %v585
        %v587 = vmul.f32 %v582, %v586
        %v588 = vpack.c.bf16 %v587, %v587
        %590 = vrot.lane.b32.xlu0 %v417, 120
        %v591 = vpop.permute.xlu0 %590
        %v593 = vsel %vm418, %v588, 0
        %v596 = vsel %vm480, %v591, 0
        %598 = vmatprep.subr.bf16.mxu0 0
        %599 = vmatpush1.bf16.msra.mxu0 0
        %600 = vmatprep.subr.bf16.mxu0 0
        %601 = vmatpush1.bf16.msra.mxu0 0
        %602 = vmatprep.subr.bf16.mxu0 0
        %603 = vmatpush1.bf16.msra.mxu0 0
        %604 = vmatprep.subr.bf16.mxu0 0
        %605 = vmatpush1.bf16.msra.mxu0 0
        %606 = vmatprep.subr.bf16.mxu0 0
        %607 = vmatpush1.bf16.msra.mxu0 0
        %608 = vmatprep.subr.bf16.mxu0 0
        %609 = vmatpush1.bf16.msra.mxu0 0
        %610 = vmatprep.subr.bf16.mxu0 0
        %611 = vmatpush1.bf16.msra.mxu0 0
        %612 = vmatprep.subr.bf16.mxu0 0
        %613 = vmatpush1.bf16.msra.mxu0 %v596
        %614 = vmatprep.subr.bf16.mxu0 0
        %615 = vmatpush2.bf16.msra.mxu0 0
        %616 = vmatprep.subr.bf16.mxu0 0
        %617 = vmatpush2.bf16.msra.mxu0 0
        %618 = vmatprep.subr.bf16.mxu0 0
        %619 = vmatpush2.bf16.msra.mxu0 0
        %620 = vmatprep.subr.bf16.mxu0 0
        %621 = vmatpush2.bf16.msra.mxu0 0
        %622 = vmatprep.subr.bf16.mxu0 0
        %623 = vmatpush2.bf16.msra.mxu0 0
        %624 = vmatprep.subr.bf16.mxu0 0
        %625 = vmatpush2.bf16.msra.mxu0 0
        %626 = vmatprep.subr.bf16.mxu0 0
        %627 = vmatpush2.bf16.msra.mxu0 0
        %628 = vmatprep.subr.bf16.mxu0 0
        %629 = vmatpush2.bf16.msra.mxu0 0
        %630 = vmatprep.mubr.bf16.mxu0 0
        %631 = vmatmul.mubr.bf16.gmra.mxu0 %v593
        %v632 = vpop.f32.mrf.mxu0
        %v633 = vadd.f32 0.0, %v632
        %v634 = vpop.f32.mrf.mxu0
        %v635 = vpop.f32.mrf.mxu0
        %v636 = vpop.f32.mrf.mxu0
        %637 = vdwg.mxu0
        %639 = vrot.lane.b32.xlu0 %v633, 8
        %v640 = vpop.permute.xlu0 %639
        %vm642 = vcmask 130112
        %643 = vst.msk [vmem:[#allocation2] sm:$0xff] %vm642, %v640
        %644 = vrot.lane.b32.xlu0 %v415, 112
        %v645 = vpop.permute.xlu0 %644
        %646 = vrot.lane.b32.xlu0 %v416, 112
        %v647 = vpop.permute.xlu0 %646
        %v649 = vsel %vm418, %v645, 0
        %v652 = vsel %vm418, %v647, 0
        %654 = vmatprep.subr.bf16.mxu0 0
        %655 = vmatpush1.bf16.xpose.msra.mxu0 0
        %656 = vmatprep.subr.bf16.mxu0 0
        %657 = vmatpush1.bf16.xpose.msra.mxu0 0
        %658 = vmatprep.subr.bf16.mxu0 0
        %659 = vmatpush1.bf16.xpose.msra.mxu0 0
        %660 = vmatprep.subr.bf16.mxu0 0
        %661 = vmatpush1.bf16.xpose.msra.mxu0 0
        %662 = vmatprep.subr.bf16.mxu0 0
        %663 = vmatpush1.bf16.xpose.msra.mxu0 0
        %664 = vmatprep.subr.bf16.mxu0 0
        %665 = vmatpush1.bf16.xpose.msra.mxu0 0
        %666 = vmatprep.subr.bf16.mxu0 0
        %667 = vmatpush1.bf16.xpose.msra.mxu0 0
        %668 = vmatprep.subr.bf16.mxu0 0
        %669 = vmatpush1.bf16.xpose.msra.mxu0 %v652
        %670 = vmatprep.subr.bf16.mxu0 0
        %671 = vmatpush2.bf16.xpose.msra.mxu0 0
        %672 = vmatprep.subr.bf16.mxu0 0
        %673 = vmatpush2.bf16.xpose.msra.mxu0 0
        %674 = vmatprep.subr.bf16.mxu0 0
        %675 = vmatpush2.bf16.xpose.msra.mxu0 0
        %676 = vmatprep.subr.bf16.mxu0 0
        %677 = vmatpush2.bf16.xpose.msra.mxu0 0
        %678 = vmatprep.subr.bf16.mxu0 0
        %679 = vmatpush2.bf16.xpose.msra.mxu0 0
        %680 = vmatprep.subr.bf16.mxu0 0
        %681 = vmatpush2.bf16.xpose.msra.mxu0 0
        %682 = vmatprep.subr.bf16.mxu0 0
        %683 = vmatpush2.bf16.xpose.msra.mxu0 0
        %684 = vmatprep.subr.bf16.mxu0 0
        %685 = vmatpush2.bf16.xpose.msra.mxu0 0
        %686 = vmatprep.mubr.bf16.mxu0 0
        %687 = vmatmul.mubr.bf16.gmra.mxu0 %v649
        %v688 = vpop.f32.mrf.mxu0
        %v689 = vadd.f32 0.0, %v688
        %v690 = vpop.f32.mrf.mxu0
        %v691 = vpop.f32.mrf.mxu0
        %v692 = vpop.f32.mrf.mxu0
        %693 = vdwg.mxu0
        %v694 = vsel %vm418, %v689, -inf
        %695 = vmax.xlane.f32.xlu0 %v694
        %v696 = vpop.xlane.xlu0 %695
        %v697 = vsub.f32 %v689, %v696
        %v698 = vmul.f32 %v697, 1.442695
        %v699 = vpow.pop %v698
        %v700 = vsel %vm418, %v699, 0.0
        %701 = vadd.xlane.f32.xlu0 %v700
        %v702 = vpop.xlane.xlu0 %701
        %v703 = vrcp.pop %v702
        %v704 = vmul.f32 %v699, %v703
        %v705 = vpack.c.bf16 %v704, %v704
        %706 = vrot.lane.b32.xlu0 %v417, 112
        %v707 = vpop.permute.xlu0 %706
        %v709 = vsel %vm418, %v705, 0
        %v712 = vsel %vm480, %v707, 0
        %714 = vmatprep.subr.bf16.mxu0 0
        %715 = vmatpush1.bf16.msra.mxu0 0
        %716 = vmatprep.subr.bf16.mxu0 0
        %717 = vmatpush1.bf16.msra.mxu0 0
        %718 = vmatprep.subr.bf16.mxu0 0
        %719 = vmatpush1.bf16.msra.mxu0 0
        %720 = vmatprep.subr.bf16.mxu0 0
        %721 = vmatpush1.bf16.msra.mxu0 0
        %722 = vmatprep.subr.bf16.mxu0 0
        %723 = vmatpush1.bf16.msra.mxu0 0
        %724 = vmatprep.subr.bf16.mxu0 0
        %725 = vmatpush1.bf16.msra.mxu0 0
        %726 = vmatprep.subr.bf16.mxu0 0
        %727 = vmatpush1.bf16.msra.mxu0 0
        %728 = vmatprep.subr.bf16.mxu0 0
        %729 = vmatpush1.bf16.msra.mxu0 %v712
        %730 = vmatprep.subr.bf16.mxu0 0
        %731 = vmatpush2.bf16.msra.mxu0 0
        %732 = vmatprep.subr.bf16.mxu0 0
        %733 = vmatpush2.bf16.msra.mxu0 0
        %734 = vmatprep.subr.bf16.mxu0 0
        %735 = vmatpush2.bf16.msra.mxu0 0
        %736 = vmatprep.subr.bf16.mxu0 0
        %737 = vmatpush2.bf16.msra.mxu0 0
        %738 = vmatprep.subr.bf16.mxu0 0
        %739 = vmatpush2.bf16.msra.mxu0 0
        %740 = vmatprep.subr.bf16.mxu0 0
        %741 = vmatpush2.bf16.msra.mxu0 0
        %742 = vmatprep.subr.bf16.mxu0 0
        %743 = vmatpush2.bf16.msra.mxu0 0
        %744 = vmatprep.subr.bf16.mxu0 0
        %745 = vmatpush2.bf16.msra.mxu0 0
        %746 = vmatprep.mubr.bf16.mxu0 0
        %747 = vmatmul.mubr.bf16.gmra.mxu0 %v709
        %v748 = vpop.f32.mrf.mxu0
        %v749 = vadd.f32 0.0, %v748
        %v750 = vpop.f32.mrf.mxu0
        %v751 = vpop.f32.mrf.mxu0
        %v752 = vpop.f32.mrf.mxu0
        %753 = vdwg.mxu0
        %755 = vrot.lane.b32.xlu0 %v749, 16
        %v756 = vpop.permute.xlu0 %755
        %vm758 = vcmask 195712
        %759 = vst.msk [vmem:[#allocation2] sm:$0xff] %vm758, %v756
        %760 = vrot.lane.b32.xlu0 %v415, 104
        %v761 = vpop.permute.xlu0 %760
        %762 = vrot.lane.b32.xlu0 %v416, 104
        %v763 = vpop.permute.xlu0 %762
        %v765 = vsel %vm418, %v761, 0
        %v768 = vsel %vm418, %v763, 0
        %770 = vmatprep.subr.bf16.mxu0 0
        %771 = vmatpush1.bf16.xpose.msra.mxu0 0
        %772 = vmatprep.subr.bf16.mxu0 0
        %773 = vmatpush1.bf16.xpose.msra.mxu0 0
        %774 = vmatprep.subr.bf16.mxu0 0
        %775 = vmatpush1.bf16.xpose.msra.mxu0 0
        %776 = vmatprep.subr.bf16.mxu0 0
        %777 = vmatpush1.bf16.xpose.msra.mxu0 0
        %778 = vmatprep.subr.bf16.mxu0 0
        %779 = vmatpush1.bf16.xpose.msra.mxu0 0
        %780 = vmatprep.subr.bf16.mxu0 0
        %781 = vmatpush1.bf16.xpose.msra.mxu0 0
        %782 = vmatprep.subr.bf16.mxu0 0
        %783 = vmatpush1.bf16.xpose.msra.mxu0 0
        %784 = vmatprep.subr.bf16.mxu0 0
        %785 = vmatpush1.bf16.xpose.msra.mxu0 %v768
        %786 = vmatprep.subr.bf16.mxu0 0
        %787 = vmatpush2.bf16.xpose.msra.mxu0 0
        %788 = vmatprep.subr.bf16.mxu0 0
        %789 = vmatpush2.bf16.xpose.msra.mxu0 0
        %790 = vmatprep.subr.bf16.mxu0 0
        %791 = vmatpush2.bf16.xpose.msra.mxu0 0
        %792 = vmatprep.subr.bf16.mxu0 0
        %793 = vmatpush2.bf16.xpose.msra.mxu0 0
        %794 = vmatprep.subr.bf16.mxu0 0
        %795 = vmatpush2.bf16.xpose.msra.mxu0 0
        %796 = vmatprep.subr.bf16.mxu0 0
        %797 = vmatpush2.bf16.xpose.msra.mxu0 0
        %798 = vmatprep.subr.bf16.mxu0 0
        %799 = vmatpush2.bf16.xpose.msra.mxu0 0
        %800 = vmatprep.subr.bf16.mxu0 0
        %801 = vmatpush2.bf16.xpose.msra.mxu0 0
        %802 = vmatprep.mubr.bf16.mxu0 0
        %803 = vmatmul.mubr.bf16.gmra.mxu0 %v765
        %v804 = vpop.f32.mrf.mxu0
        %v805 = vadd.f32 0.0, %v804
        %v806 = vpop.f32.mrf.mxu0
        %v807 = vpop.f32.mrf.mxu0
        %v808 = vpop.f32.mrf.mxu0
        %809 = vdwg.mxu0
        %v810 = vsel %vm418, %v805, -inf
        %811 = vmax.xlane.f32.xlu0 %v810
        %v812 = vpop.xlane.xlu0 %811
        %v813 = vsub.f32 %v805, %v812
        %v814 = vmul.f32 %v813, 1.442695
        %v815 = vpow.pop %v814
        %v816 = vsel %vm418, %v815, 0.0
        %817 = vadd.xlane.f32.xlu0 %v816
        %v818 = vpop.xlane.xlu0 %817
        %v819 = vrcp.pop %v818
        %v820 = vmul.f32 %v815, %v819
        %v821 = vpack.c.bf16 %v820, %v820
        %822 = vrot.lane.b32.xlu0 %v417, 104
        %v823 = vpop.permute.xlu0 %822
        %v825 = vsel %vm418, %v821, 0
        %v828 = vsel %vm480, %v823, 0
        %830 = vmatprep.subr.bf16.mxu0 0
        %831 = vmatpush1.bf16.msra.mxu0 0
        %832 = vmatprep.subr.bf16.mxu0 0
        %833 = vmatpush1.bf16.msra.mxu0 0
        %834 = vmatprep.subr.bf16.mxu0 0
        %835 = vmatpush1.bf16.msra.mxu0 0
        %836 = vmatprep.subr.bf16.mxu0 0
        %837 = vmatpush1.bf16.msra.mxu0 0
        %838 = vmatprep.subr.bf16.mxu0 0
        %839 = vmatpush1.bf16.msra.mxu0 0
        %840 = vmatprep.subr.bf16.mxu0 0
        %841 = vmatpush1.bf16.msra.mxu0 0
        %842 = vmatprep.subr.bf16.mxu0 0
        %843 = vmatpush1.bf16.msra.mxu0 0
        %844 = vmatprep.subr.bf16.mxu0 0
        %845 = vmatpush1.bf16.msra.mxu0 %v828
        %846 = vmatprep.subr.bf16.mxu0 0
        %847 = vmatpush2.bf16.msra.mxu0 0
        %848 = vmatprep.subr.bf16.mxu0 0
        %849 = vmatpush2.bf16.msra.mxu0 0
        %850 = vmatprep.subr.bf16.mxu0 0
        %851 = vmatpush2.bf16.msra.mxu0 0
        %852 = vmatprep.subr.bf16.mxu0 0
        %853 = vmatpush2.bf16.msra.mxu0 0
        %854 = vmatprep.subr.bf16.mxu0 0
        %855 = vmatpush2.bf16.msra.mxu0 0
        %856 = vmatprep.subr.bf16.mxu0 0
        %857 = vmatpush2.bf16.msra.mxu0 0
        %858 = vmatprep.subr.bf16.mxu0 0
        %859 = vmatpush2.bf16.msra.mxu0 0
        %860 = vmatprep.subr.bf16.mxu0 0
        %861 = vmatpush2.bf16.msra.mxu0 0
        %862 = vmatprep.mubr.bf16.mxu0 0
        %863 = vmatmul.mubr.bf16.gmra.mxu0 %v825
        %v864 = vpop.f32.mrf.mxu0
        %v865 = vadd.f32 0.0, %v864
        %v866 = vpop.f32.mrf.mxu0
        %v867 = vpop.f32.mrf.mxu0
        %v868 = vpop.f32.mrf.mxu0
        %869 = vdwg.mxu0
        %871 = vrot.lane.b32.xlu0 %v865, 24
        %v872 = vpop.permute.xlu0 %871
        %vm874 = vcmask 261312
        %875 = vst.msk [vmem:[#allocation2] sm:$0xff] %vm874, %v872
        %v876 = vld [vmem:[#allocation2] sm:$0xff]
        %v877 = vpack.c.bf16 %v876, %v876
        %s878 = scalar_lea.vmem [#allocation6], 48
        %v879 = vld [vmem:[%s878] sm:$0xf]
        %v880 = vld [vmem:[%s878 + $0x4] sm:$0xf]
        %v881 = vld [vmem:[%s878 + $0x8] sm:$0xf]
        %v882 = vld [vmem:[%s878 + $0xc] sm:$0xf]
        %v883 = vlaneseq
        %v884 = vshrl.u32 %v883, 7
        %v885 = vsub.s32 0, %v884
        %v886 = vrot.slane %v221, %v885
        %v891 = vunpack.c.l.b16 %v879
        %v892 = vunpack.c.l.b16 %v880
        %v893 = vunpack.c.l.b16 %v881
        %v894 = vunpack.c.l.b16 %v882
        %v895 = vpack.c.b16 %v892, %v891
        %v896 = vpack.c.b16 %v894, %v893
        %v900 = vsel %vm248, %v877, 0
        %902 = vmatprep.subr.bf16.mxu0 0
        %903 = vmatpush1.bf16.msra.mxu0 0
        %904 = vmatprep.subr.bf16.mxu0 0
        %905 = vmatpush1.bf16.msra.mxu0 0
        %906 = vmatprep.subr.bf16.mxu0 0
        %907 = vmatpush1.bf16.msra.mxu0 0
        %908 = vmatprep.subr.bf16.mxu0 0
        %909 = vmatpush1.bf16.msra.mxu0 0
        %910 = vmatprep.subr.bf16.mxu0 0
        %911 = vmatpush1.bf16.msra.mxu0 0
        %912 = vmatprep.subr.bf16.mxu0 0
        %913 = vmatpush1.bf16.msra.mxu0 0
        %914 = vmatprep.subr.bf16.mxu0 0
        %915 = vmatpush1.bf16.msra.mxu0 %v896
        %916 = vmatprep.subr.bf16.mxu0 0
        %917 = vmatpush1.bf16.msra.mxu0 %v895
        %918 = vmatprep.subr.bf16.mxu0 0
        %919 = vmatpush2.bf16.msra.mxu0 0
        %920 = vmatprep.subr.bf16.mxu0 0
        %921 = vmatpush2.bf16.msra.mxu0 0
        %922 = vmatprep.subr.bf16.mxu0 0
        %923 = vmatpush2.bf16.msra.mxu0 0
        %924 = vmatprep.subr.bf16.mxu0 0
        %925 = vmatpush2.bf16.msra.mxu0 0
        %926 = vmatprep.subr.bf16.mxu0 0
        %927 = vmatpush2.bf16.msra.mxu0 0
        %928 = vmatprep.subr.bf16.mxu0 0
        %929 = vmatpush2.bf16.msra.mxu0 0
        %930 = vmatprep.subr.bf16.mxu0 0
        %931 = vmatpush2.bf16.msra.mxu0 0
        %932 = vmatprep.subr.bf16.mxu0 0
        %933 = vmatpush2.bf16.msra.mxu0 0
        %934 = vmatprep.mubr.bf16.mxu0 0
        %935 = vmatmul.mubr.bf16.gmra.mxu0 %v900
        %v936 = vpop.f32.mrf.mxu0
        %v937 = vadd.f32 %v886, %v936
        %v938 = vpop.f32.mrf.mxu0
        %v939 = vpop.f32.mrf.mxu0
        %v940 = vpop.f32.mrf.mxu0
        %941 = vdwg.mxu0
        %v942 = vadd.f32 %v937, %v216
        %v943 = vsel %vm248, %v942, 0.0
        %944 = vadd.xlane.f32.xlu0 %v943
        %v945 = vpop.xlane.xlu0 %944
        %v946 = vrcp.pop 32.0
        %v947 = vmul.f32 %v945, %v946
        %v948 = vsub.f32 %v942, %v947
        %v949 = vmul.f32 %v948, %v948
        %v950 = vsel %vm248, %v949, 0.0
        %951 = vadd.xlane.f32.xlu0 %v950
        %v952 = vpop.xlane.xlu0 %951
        %v953 = vmul.f32 %v952, %v946
        %v954 = vadd.f32 %v953, 1e-12
        %v955 = vrsqrt.pop %v954
        %v956 = vmul.f32 %v948, %v955
        %v957 = vlaneseq
        %v958 = vshrl.u32 %v957, 7
        %v959 = vsub.s32 0, %v958
        %v960 = vrot.slane %v222, %v959
        %v961 = vmul.f32 %v960, %v956
        %v962 = vlaneseq
        %v963 = vshrl.u32 %v962, 7
        %v964 = vsub.s32 0, %v963
        %v965 = vrot.slane %v223, %v964
        %v966 = vadd.f32 %v961, %v965
        %v967 = vpack.c.bf16 %v966, %v966
        %s968 = scalar_lea.vmem [#allocation6], 64
        %v969 = vld [vmem:[%s968] sm:$0xf]
        %v970 = vld [vmem:[%s968 + $0x4] sm:$0xf]
        %v971 = vld [vmem:[%s968 + $0x8] sm:$0xf]
        %v972 = vld [vmem:[%s968 + $0xc] sm:$0xf]
        %v973 = vlaneseq
        %v974 = vshrl.u32 %v973, 7
        %v975 = vsub.s32 0, %v974
        %v976 = vrot.slane %v224, %v975
        %v981 = vunpack.c.l.b16 %v969
        %v982 = vunpack.c.l.b16 %v970
        %v983 = vunpack.c.l.b16 %v971
        %v984 = vunpack.c.l.b16 %v972
        %v985 = vpack.c.b16 %v982, %v981
        %v986 = vpack.c.b16 %v984, %v983
        %v990 = vsel %vm248, %v967, 0
        %992 = vmatprep.subr.bf16.mxu0 0
        %993 = vmatpush1.bf16.msra.mxu0 0
        %994 = vmatprep.subr.bf16.mxu0 0
        %995 = vmatpush1.bf16.msra.mxu0 0
        %996 = vmatprep.subr.bf16.mxu0 0
        %997 = vmatpush1.bf16.msra.mxu0 0
        %998 = vmatprep.subr.bf16.mxu0 0
        %999 = vmatpush1.bf16.msra.mxu0 0
        %1000 = vmatprep.subr.bf16.mxu0 0
        %1001 = vmatpush1.bf16.msra.mxu0 0
        %1002 = vmatprep.subr.bf16.mxu0 0
        %1003 = vmatpush1.bf16.msra.mxu0 0
        %1004 = vmatprep.subr.bf16.mxu0 0
        %1005 = vmatpush1.bf16.msra.mxu0 %v986
        %1006 = vmatprep.subr.bf16.mxu0 0
        %1007 = vmatpush1.bf16.msra.mxu0 %v985
        %1008 = vmatprep.subr.bf16.mxu0 0
        %1009 = vmatpush2.bf16.msra.mxu0 0
        %1010 = vmatprep.subr.bf16.mxu0 0
        %1011 = vmatpush2.bf16.msra.mxu0 0
        %1012 = vmatprep.subr.bf16.mxu0 0
        %1013 = vmatpush2.bf16.msra.mxu0 0
        %1014 = vmatprep.subr.bf16.mxu0 0
        %1015 = vmatpush2.bf16.msra.mxu0 0
        %1016 = vmatprep.subr.bf16.mxu0 0
        %1017 = vmatpush2.bf16.msra.mxu0 0
        %1018 = vmatprep.subr.bf16.mxu0 0
        %1019 = vmatpush2.bf16.msra.mxu0 0
        %1020 = vmatprep.subr.bf16.mxu0 0
        %1021 = vmatpush2.bf16.msra.mxu0 0
        %1022 = vmatprep.subr.bf16.mxu0 0
        %1023 = vmatpush2.bf16.msra.mxu0 0
        %1024 = vmatprep.mubr.bf16.mxu0 0
        %1025 = vmatmul.mubr.bf16.gmra.mxu0 %v990
        %v1026 = vpop.f32.mrf.mxu0
        %v1027 = vadd.f32 %v976, %v1026
        %v1028 = vpop.f32.mrf.mxu0
        %v1029 = vpop.f32.mrf.mxu0
        %v1030 = vpop.f32.mrf.mxu0
        %1031 = vdwg.mxu0
        %v1032 = vmul.f32 %v1027, 0.5
        %v1033 = vmul.f32 %v1027, 0.70710677
        %v1034 = verf.f32.pop %v1033
        %v1035 = vadd.f32 %v1034, 1.0
        %v1036 = vmul.f32 %v1032, %v1035
        %v1037 = vpack.c.bf16 %v1036, %v1036
        %s1038 = scalar_lea.vmem [#allocation6], 80
        %v1039 = vld [vmem:[%s1038] sm:$0xf]
        %v1040 = vld [vmem:[%s1038 + $0x4] sm:$0xf]
        %v1041 = vld [vmem:[%s1038 + $0x8] sm:$0xf]
        %v1042 = vld [vmem:[%s1038 + $0xc] sm:$0xf]
        %v1043 = vlaneseq
        %v1044 = vshrl.u32 %v1043, 7
        %v1045 = vsub.s32 0, %v1044
        %v1046 = vrot.slane %v225, %v1045
        %v1051 = vunpack.c.l.b16 %v1039
        %v1052 = vunpack.c.l.b16 %v1040
        %v1053 = vunpack.c.l.b16 %v1041
        %v1054 = vunpack.c.l.b16 %v1042
        %v1055 = vpack.c.b16 %v1052, %v1051
        %v1056 = vpack.c.b16 %v1054, %v1053
        %v1060 = vsel %vm248, %v1037, 0
        %1062 = vmatprep.subr.bf16.mxu0 0
        %1063 = vmatpush1.bf16.msra.mxu0 0
        %1064 = vmatprep.subr.bf16.mxu0 0
        %1065 = vmatpush1.bf16.msra.mxu0 0
        %1066 = vmatprep.subr.bf16.mxu0 0
        %1067 = vmatpush1.bf16.msra.mxu0 0
        %1068 = vmatprep.subr.bf16.mxu0 0
        %1069 = vmatpush1.bf16.msra.mxu0 0
        %1070 = vmatprep.subr.bf16.mxu0 0
        %1071 = vmatpush1.bf16.msra.mxu0 0
        %1072 = vmatprep.subr.bf16.mxu0 0
        %1073 = vmatpush1.bf16.msra.mxu0 0
        %1074 = vmatprep.subr.bf16.mxu0 0
        %1075 = vmatpush1.bf16.msra.mxu0 %v1056
        %1076 = vmatprep.subr.bf16.mxu0 0
        %1077 = vmatpush1.bf16.msra.mxu0 %v1055
        %1078 = vmatprep.subr.bf16.mxu0 0
        %1079 = vmatpush2.bf16.msra.mxu0 0
        %1080 = vmatprep.subr.bf16.mxu0 0
        %1081 = vmatpush2.bf16.msra.mxu0 0
        %1082 = vmatprep.subr.bf16.mxu0 0
        %1083 = vmatpush2.bf16.msra.mxu0 0
        %1084 = vmatprep.subr.bf16.mxu0 0
        %1085 = vmatpush2.bf16.msra.mxu0 0
        %1086 = vmatprep.subr.bf16.mxu0 0
        %1087 = vmatpush2.bf16.msra.mxu0 0
        %1088 = vmatprep.subr.bf16.mxu0 0
        %1089 = vmatpush2.bf16.msra.mxu0 0
        %1090 = vmatprep.subr.bf16.mxu0 0
        %1091 = vmatpush2.bf16.msra.mxu0 0
        %1092 = vmatprep.subr.bf16.mxu0 0
        %1093 = vmatpush2.bf16.msra.mxu0 0
        %1094 = vmatprep.mubr.bf16.mxu0 0
        %1095 = vmatmul.mubr.bf16.gmra.mxu0 %v1060
        %v1096 = vpop.f32.mrf.mxu0
        %v1097 = vadd.f32 %v1046, %v1096
        %v1098 = vpop.f32.mrf.mxu0
        %v1099 = vpop.f32.mrf.mxu0
        %v1100 = vpop.f32.mrf.mxu0
        %1101 = vdwg.mxu0
        %v1102 = vadd.f32 %v1097, %v966
        %v1103 = vsel %vm248, %v1102, 0.0
        %1104 = vadd.xlane.f32.xlu0 %v1103
        %v1105 = vpop.xlane.xlu0 %1104
        %v1106 = vmul.f32 %v1105, %v946
        %v1107 = vsub.f32 %v1102, %v1106
        %v1108 = vmul.f32 %v1107, %v1107
        %v1109 = vsel %vm248, %v1108, 0.0
        %1110 = vadd.xlane.f32.xlu0 %v1109
        %v1111 = vpop.xlane.xlu0 %1110
        %v1112 = vmul.f32 %v1111, %v946
        %v1113 = vadd.f32 %v1112, 1e-12
        %v1114 = vrsqrt.pop %v1113
        %v1115 = vmul.f32 %v1107, %v1114
        %v1116 = vlaneseq
        %v1117 = vshrl.u32 %v1116, 7
        %v1118 = vsub.s32 0, %v1117
        %v1119 = vrot.slane %v226, %v1118
        %v1120 = vmul.f32 %v1119, %v1115
        %v1121 = vlaneseq
        %v1122 = vshrl.u32 %v1121, 7
        %v1123 = vsub.s32 0, %v1122
        %v1124 = vrot.slane %v227, %v1123
        %v1125 = vadd.f32 %v1120, %v1124
        %1126 = vst.msk [vmem:[%s214] sm:$0xff] %vm248, %v1125
        %s1127 = sand.u32 %s97, 1
        %s1128 = scalar_lea.sflag [#allocation5], %s1127
        %s1129 = sand.u32 %s97, 1
        %s1130 = smul.addr %s1129, 8
        %s1131 = scalar_lea.vmem [#allocation9], %s1130
        // Predicated region
        $region45: #{tpu_custom_call.1} parent=31 // pred_check
          %p1132 = pneg %p107
        $region46: #{tpu_custom_call.1} parent=31 // pred_check_branch
          %1134 = sbr.rel (%p1132) target = $region48
        $region47: #{tpu_custom_call.1} parent=31 // pred_region
          %s1136 = ssub.s32 128, 128
          %1137 = vsyncadd %s1128, %s1136
          %s1138 = smul.addr %s21, 128
          %s1139 = scalar_lea.hbm %s3, %s1138
          %s1141 = sshll.u32 %s1131, 4
          %s1142 = int_to_ptr.vmem [resolvable:$true] %s1141
          %1144 = dma.vmem_to_hbm [thread:$0]  %s1142, 128, %s1139, %s1128
        $region48: #{tpu_custom_call.1} parent=31 // pred_fallthru
          _
      $region32: #{tpu_custom_call.1} parent=5 // pred_fallthru
        _
      %p1145 = scmp.le.s32.totalorder 2, %s16
      // Predicated region
      $region49: #{tpu_custom_call.1} parent=5 // pred_check
        %p1146 = pneg %p1145
      $region50: #{tpu_custom_call.1} parent=5 // pred_check_branch
        %1148 = sbr.rel (%p1146) target = $region52
      $region51: #{tpu_custom_call.1} parent=5 // pred_region
        %s1149 = ssub.s32 %s16, 2
        // Predicated region
        $region53: #{tpu_custom_call.1} parent=51 // pred_check
          %p1150 = pneg %p113
        $region54: #{tpu_custom_call.1} parent=51 // pred_check_branch
          %1152 = sbr.rel (%p1150) target = $region56
        $region55: #{tpu_custom_call.1} parent=51 // pred_region
          %s1153 = sand.u32 %s98, 1
          %s1154 = scalar_lea.sflag [#allocation5], %s1153
          %s1155 = sand.u32 %s98, 1
          %s1156 = smul.addr %s1155, 8
          %s1157 = scalar_lea.vmem [#allocation9], %s1156
          %1158 = dma.done %s1154, 128
        $region56: #{tpu_custom_call.1} parent=51 // pred_fallthru
          _
      $region52: #{tpu_custom_call.1} parent=5 // pred_fallthru
        _
    $region6: #{tpu_custom_call.1} parent=1 // loop_footer
      %s20 = sadd.s32 1, %s16
    $region7: #{tpu_custom_call.1} parent=1 // loop_footer_branch
      %15 = sbr.rel target = $region3
    $region8: #{tpu_custom_call.1} parent=1 // loop_exit
      _
    %1159 = vsyncpa [#allocation4], 1
    %s1160 = scalar_lea.sflag [#allocation4], 1
    %1161 = vsyncpa %s1160, 1
    %1162 = vsyncpa [#allocation7], 1
    %1163 = vsyncpa [#allocation5], 1
    %s1164 = scalar_lea.sflag [#allocation5], 1
    %1165 = vsyncpa %s1164, 1

</llo_original>
